<compile_context>
chip_gen: v7x
topology: tpu7x:2x2x1
jax: 0.10.0
libtpu: 0.0.40
codegen_flags: <defaults>
</compile_context>

<pallas_src>
import math
import functools
import jax
import jax.numpy as jnp
from jax import lax
from jax.experimental import pallas as pl
from jax.experimental.pallas import tpu as pltpu

NEG_SLOPE = 0.01     # F.leaky_relu default negative_slope
BN_EPS = 1e-5        # nn.BatchNorm2d default eps
LANE = 128


def _round_up(x, m):
    return (x + m - 1) // m * m


def _leaky(y):
    return jnp.where(y >= 0, y, NEG_SLOPE * y)


# ------------------------------ Pallas kernel --------------------------------

def _make_block_kernel(n_par, Ho, Wo, c_in, planes, n_pad, tap_plan):
    """Fused BasicBlock kernel; processes one batch element per grid step.

    tap_plan: tuple of (plane_idx, h0, w0, conv1_tap_idx_or_None, is_pool_tap)
    describing each unique input window and which accumulators consume it.
    """
    Mb = Ho * Wo

    def kernel(*refs):
        par = refs[:n_par]                                 # parity planes of padded x
        w1_ref, b1_ref, w2_ref, b2_ref, e_ref, o_ref, pad_ref = refs[n_par:]

        # Accumulators start from the folded BN biases (broadcast hoisted out
        # of the tap loops; conv2 bias also covers the shortcut-add path).
        acc1 = jnp.broadcast_to(b1_ref[...], (Mb, planes)).astype(jnp.float32)
        acc2 = jnp.broadcast_to(b2_ref[...], (Mb, n_pad)).astype(jnp.float32)

        # ---- conv1 (3x3, stride) + bn1 (folded) fused with the avg-pool
        #      shortcut: each unique input window is loaded once and fed to a
        #      small bf16 MXU dot per consumer. ------------------------------
        for (p, h0, w0, t1, is_pool) in tap_plan:
            tap = par[p][:, h0:h0 + Ho, w0:w0 + Wo, :].reshape(Mb, c_in)
            if t1 is not None:
                acc1 = acc1 + jnp.dot(tap, w1_ref[t1],
                                      preferred_element_type=jnp.float32)
            if is_pool:
                # (c_in, n_pad) embedding carries the 1/k^2 averaging factor
                # and the zero channel padding of AvgPoolShortCut.
                acc2 = acc2 + jnp.dot(tap, e_ref[...],
                                      preferred_element_type=jnp.float32)

        out1 = _leaky(acc1)                                # (Mb, planes) f32

        # ---- zero-pad out1 (pad=1) into a VMEM scratch for conv2 -----------
        pad_ref[...] = jnp.zeros_like(pad_ref)
        pad_ref[:, 1:1 + Ho, 1:1 + Wo, :] = out1.reshape(1, Ho, Wo, planes)

        # ---- conv2 (3x3, stride 1) + bn2 (folded), f32 (all VMEM-resident) --
        for t in range(9):
            dh, dw = t // 3, t % 3
            tap = pad_ref[:, dh:dh + Ho, dw:dw + Wo, :].reshape(Mb, planes)
            acc2 = acc2 + jnp.dot(tap, w2_ref[t],
                                  preferred_element_type=jnp.float32)

        # ---- leaky_relu, single lane-dense (128-wide) store -----------------
        o_ref[...] = _leaky(acc2).reshape(1, Ho, Wo, n_pad)

    return kernel


# --------------------------------- wrapper ------------------------------------

@functools.partial(jax.jit, static_argnums=2)
def basic_block_forward(x_nchw, params, stride):
    """Pallas implementation of BasicBlock.forward (mod=True, inference BN)."""
    B, c_in, H, W = x_nchw.shape
    planes = params["w1"].shape[0]
    n_pad = _round_up(planes, LANE)            # lane-dense output channel dim
    Ho = (H - 1) // stride + 1                 # conv 3x3, pad 1
    Wo = (W - 1) // stride + 1

    # ---- one-time prep: fold BN scale into conv weights, flatten taps -------
    s1 = params["gamma1"] / jnp.sqrt(params["var1"] + BN_EPS)
    s2 = params["gamma2"] / jnp.sqrt(params["var2"] + BN_EPS)
    b1 = params["beta1"] - params["mean1"] * s1
    b2 = params["beta2"] - params["mean2"] * s2

    def fold(w_oihw, scale):                   # OIHW -> (kh*kw, cin, cout) * scale
        cout, cin, kh, kw = w_oihw.shape
        w = jnp.transpose(w_oihw, (2, 3, 1, 0)).reshape(kh * kw, cin, cout)
        return w * scale[None, None, :]

    w1f = fold(params["w1"], s1).astype(jnp.bfloat16)           # (9, c_in, planes)
    w2f = jnp.pad(fold(params["w2"], s2),
                  ((0, 0), (0, 0), (0, n_pad - planes)))        # (9, planes, n_pad) f32
    b1f = b1.reshape(1, planes).astype(jnp.float32)
    b2f = jnp.pad(b2, (0, n_pad - planes)).reshape(1, n_pad).astype(jnp.float32)

    # ---- parity decomposition of the zero-padded input (no 9x im2col) -------
    x = jnp.transpose(x_nchw, (0, 2, 3, 1)).astype(jnp.float32)     # NHWC
    xpad = jnp.pad(x, ((0, 0), (1, 1), (1, 1), (0, 0)))
    par_arrays, par_idx = [], {}
    for rh in range(stride):
        for rw in range(stride):
            par_idx[(rh, rw)] = len(par_arrays)
            par_arrays.append(
                xpad[:, rh::stride, rw::stride, :].astype(jnp.bfloat16))

    # conv1 taps: padded row = stride*ho + dh -> plane (dh%s, dw%s), offset dh//s.
    conv1_map = {}                                   # (plane, h0, w0) -> tap index
    for t, (dh, dw) in enumerate((dh, dw) for dh in range(3) for dw in range(3)):
        key = (par_idx[(dh % stride, dw % stride)], dh // stride, dw // stride)
        conv1_map[key] = t

    # AvgPoolShortCut taps (the identity shortcut is just the k=1 case):
    # unpadded row stride*ho + ph  ==  padded row stride*ho + (ph + 1).
    k = 1 if (H % 2 != 0) else stride
    pool_keys = set()
    for ph in range(k):
        for pw in range(k):
            pool_keys.add((par_idx[((ph + 1) % stride, (pw + 1) % stride)],
                           (ph + 1) // stride, (pw + 1) // stride))

    # Unified tap plan: every unique window is loaded once inside the kernel.
    all_keys = list(conv1_map.keys())
    all_keys += [key for key in pool_keys if key not in conv1_map]
    tap_plan = tuple((p, h0, w0, conv1_map.get((p, h0, w0)), (p, h0, w0) in pool_keys)
                     for (p, h0, w0) in all_keys)

    # shortcut embedding: averages the pool taps and zero-pads the channels.
    e = (jnp.eye(c_in, n_pad, dtype=jnp.float32) / len(pool_keys)).astype(jnp.bfloat16)

    kernel = _make_block_kernel(len(par_arrays), Ho, Wo, c_in, planes, n_pad,
                                tap_plan)

    in_specs = [pl.BlockSpec((1,) + p.shape[1:], lambda b: (b, 0, 0, 0))
                for p in par_arrays]
    in_specs += [
        pl.BlockSpec(w1f.shape, lambda b: (0, 0, 0)),
        pl.BlockSpec(b1f.shape, lambda b: (0, 0)),
        pl.BlockSpec(w2f.shape, lambda b: (0, 0, 0)),
        pl.BlockSpec(b2f.shape, lambda b: (0, 0)),
        pl.BlockSpec(e.shape, lambda b: (0, 0)),
    ]

    out4d = pl.pallas_call(
        kernel,
        grid=(B,),                                   # >= 2 independent steps (v7x)
        in_specs=in_specs,
        out_specs=pl.BlockSpec((1, Ho, Wo, n_pad), lambda b: (b, 0, 0, 0)),
        out_shape=jax.ShapeDtypeStruct((B, Ho, Wo, n_pad), jnp.float32),
        scratch_shapes=[pltpu.VMEM((1, Ho + 2, Wo + 2, planes), jnp.float32)],
        compiler_params=pltpu.CompilerParams(
            dimension_semantics=("parallel",)),
    )(*par_arrays, w1f, b1f, w2f, b2f, e)

    out = out4d[..., :planes]                    # strip lane padding
    return jnp.transpose(out, (0, 3, 1, 2))      # NHWC -> NCHW


# ----------------------------- pure-JAX reference -----------------------------

def _ref_conv(x_nhwc, w_oihw, stride):
    w = jnp.transpose(w_oihw, (2, 3, 1, 0))
    return lax.conv_general_dilated(
        x_nhwc, w, (stride, stride), ((1, 1), (1, 1)),
        dimension_numbers=("NHWC", "HWIO", "NHWC"))


def _ref_bn(y, g, b, m, v):
    return (y - m) / jnp.sqrt(v + BN_EPS) * g + b


def reference_forward(x_nchw, p, stride):
    x = jnp.transpose(x_nchw, (0, 2, 3, 1)).astype(jnp.float32)
    out = _leaky(_ref_bn(_ref_conv(x, p["w1"], stride),
                         p["gamma1"], p["beta1"], p["mean1"], p["var1"]))
    out = _ref_bn(_ref_conv(out, p["w2"], 1),
                  p["gamma2"], p["beta2"], p["mean2"], p["var2"])
    B, H, W, C = x.shape
    planes = p["w1"].shape[0]
    if stride != 1 or C != planes:
        if H % 2 != 0:
            pooled = x[:, ::stride, ::stride, :]
        else:
            pooled = x.reshape(B, H // stride, stride,
                               W // stride, stride, C).mean(axis=(2, 4))
        sc = jnp.pad(pooled, ((0, 0), (0, 0), (0, 0), (0, planes - C)))
    else:
        sc = x
    out = _leaky(out + sc)
    return jnp.transpose(out, (0, 3, 1, 2))


# ------------------------------------ main ------------------------------------

if __name__ == "__main__":
    # BasicBlock(input_size=16, in_planes=4, planes=8, stride=2, mod=True)
    B, in_planes, planes, H, stride = 2, 4, 8, 16, 2

    key = jax.random.PRNGKey(0)
    keys = jax.random.split(key, 11)
    x = jax.random.normal(keys[0], (B, in_planes, H, H), jnp.float32)

    params = dict(
        w1=jax.random.normal(keys[1], (planes, in_planes, 3, 3), jnp.float32)
           * (1.0 / math.sqrt(in_planes * 9)),
        w2=jax.random.normal(keys[2], (planes, planes, 3, 3), jnp.float32)
           * (1.0 / math.sqrt(planes * 9)),
        gamma1=jax.random.uniform(keys[3], (planes,), jnp.float32, 0.5, 1.5),
        beta1=0.1 * jax.random.normal(keys[4], (planes,), jnp.float32),
        mean1=0.1 * jax.random.normal(keys[5], (planes,), jnp.float32),
        var1=jax.random.uniform(keys[6], (planes,), jnp.float32, 0.5, 1.5),
        gamma2=jax.random.uniform(keys[7], (planes,), jnp.float32, 0.5, 1.5),
        beta2=0.1 * jax.random.normal(keys[8], (planes,), jnp.float32),
        mean2=0.1 * jax.random.normal(keys[9], (planes,), jnp.float32),
        var2=jax.random.uniform(keys[10], (planes,), jnp.float32, 0.5, 1.5),
    )

    out = jax.block_until_ready(basic_block_forward(x, params, stride))
    ref = jax.block_until_ready(reference_forward(x, params, stride))

    assert out.shape == (B, planes, H // stride, H // stride), out.shape
    # bf16 is used for the conv1 / shortcut MXU operands -> slightly relaxed tol.
    assert jnp.allclose(out, ref, rtol=2e-2, atol=2e-2), \
        float(jnp.max(jnp.abs(out - ref)))

    print("KERNEL_OK")
</pallas_src>

<mosaic_0001>
module attributes {stable_mosaic.version = 11 : i64} {
  func.func @kernel(%arg0: i32, %arg1: memref<1x9x9x4xbf16, #tpu.memory_space<vmem>>, %arg2: memref<1x9x9x4xbf16, #tpu.memory_space<vmem>>, %arg3: memref<1x9x9x4xbf16, #tpu.memory_space<vmem>>, %arg4: memref<1x9x9x4xbf16, #tpu.memory_space<vmem>>, %arg5: memref<9x4x8xbf16, #tpu.memory_space<vmem>>, %arg6: memref<1x8xf32, #tpu.memory_space<vmem>>, %arg7: memref<9x8x128xf32, #tpu.memory_space<vmem>>, %arg8: memref<1x128xf32, #tpu.memory_space<vmem>>, %arg9: memref<4x128xbf16, #tpu.memory_space<vmem>>, %arg10: memref<1x8x8x128xf32, #tpu.memory_space<vmem>>, %arg11: memref<1x10x10x8xf32, #tpu.memory_space<vmem>>) attributes {dimension_semantics = [#tpu.dimension_semantics<parallel>], iteration_bounds = array<i64: 2>, scalar_prefetch = 0 : i64, scratch_operands = 1 : i64, tpu.core_type = #tpu.core_type<tc>, window_params = [{transform_indices = @transform_0, window_bounds = array<i64: 1, 9, 9, 4>}, {transform_indices = @transform_1, window_bounds = array<i64: 1, 9, 9, 4>}, {transform_indices = @transform_2, window_bounds = array<i64: 1, 9, 9, 4>}, {transform_indices = @transform_3, window_bounds = array<i64: 1, 9, 9, 4>}, {pipeline_mode = #tpu.pipeline_mode<synchronous>, transform_indices = @transform_4, window_bounds = array<i64: 9, 4, 8>}, {pipeline_mode = #tpu.pipeline_mode<synchronous>, transform_indices = @transform_5, window_bounds = array<i64: 1, 8>}, {pipeline_mode = #tpu.pipeline_mode<synchronous>, transform_indices = @transform_6, window_bounds = array<i64: 9, 8, 128>}, {pipeline_mode = #tpu.pipeline_mode<synchronous>, transform_indices = @transform_7, window_bounds = array<i64: 1, 128>}, {pipeline_mode = #tpu.pipeline_mode<synchronous>, transform_indices = @transform_8, window_bounds = array<i64: 4, 128>}, {transform_indices = @transform_9, window_bounds = array<i64: 1, 8, 8, 128>}]} {
    %c0 = arith.constant 0 : index
    %c0_0 = arith.constant 0 : index
    %0 = vector.load %arg6[%c0, %c0_0] : memref<1x8xf32, #tpu.memory_space<vmem>>, vector<1x8xf32>
    %1 = vector.shape_cast %0 : vector<1x8xf32> to vector<1x8xf32>
    %2 = vector.broadcast %1 : vector<1x8xf32> to vector<64x8xf32>
    %c0_1 = arith.constant 0 : index
    %c0_2 = arith.constant 0 : index
    %3 = vector.load %arg8[%c0_1, %c0_2] : memref<1x128xf32, #tpu.memory_space<vmem>>, vector<1x128xf32>
    %4 = vector.shape_cast %3 : vector<1x128xf32> to vector<1x128xf32>
    %5 = vector.broadcast %4 : vector<1x128xf32> to vector<64x128xf32>
    %c0_3 = arith.constant 0 : index
    %c0_4 = arith.constant 0 : index
    %c0_5 = arith.constant 0 : index
    %c0_6 = arith.constant 0 : index
    %6 = vector.load %arg1[%c0_3, %c0_4, %c0_5, %c0_6] : memref<1x9x9x4xbf16, #tpu.memory_space<vmem>>, vector<1x8x8x4xbf16>
    %7 = vector.shape_cast %6 : vector<1x8x8x4xbf16> to vector<64x4xbf16>
    %c0_7 = arith.constant 0 : index
    %c0_8 = arith.constant 0 : index
    %c0_9 = arith.constant 0 : index
    %8 = vector.load %arg5[%c0_7, %c0_8, %c0_9] : memref<9x4x8xbf16, #tpu.memory_space<vmem>>, vector<1x4x8xbf16>
    %9 = vector.shape_cast %8 : vector<1x4x8xbf16> to vector<4x8xbf16>
    %cst = arith.constant dense<0.000000e+00> : vector<64x8xf32>
    %10 = tpu.matmul %7, %9, %cst {dimension_numbers = #tpu.dot_dimension_numbers<[1], [0], [0], [1], [0, 0, 1, 1], [], []>} : vector<64x4xbf16>, vector<4x8xbf16>, vector<64x8xf32> -> vector<64x8xf32>
    %11 = arith.addf %2, %10 : vector<64x8xf32>
    %c0_10 = arith.constant 0 : index
    %c0_11 = arith.constant 0 : index
    %c0_12 = arith.constant 0 : index
    %c0_13 = arith.constant 0 : index
    %12 = vector.load %arg2[%c0_10, %c0_11, %c0_12, %c0_13] : memref<1x9x9x4xbf16, #tpu.memory_space<vmem>>, vector<1x8x8x4xbf16>
    %13 = vector.shape_cast %12 : vector<1x8x8x4xbf16> to vector<64x4xbf16>
    %c1 = arith.constant 1 : index
    %c0_14 = arith.constant 0 : index
    %c0_15 = arith.constant 0 : index
    %14 = vector.load %arg5[%c1, %c0_14, %c0_15] : memref<9x4x8xbf16, #tpu.memory_space<vmem>>, vector<1x4x8xbf16>
    %15 = vector.shape_cast %14 : vector<1x4x8xbf16> to vector<4x8xbf16>
    %cst_16 = arith.constant dense<0.000000e+00> : vector<64x8xf32>
    %16 = tpu.matmul %13, %15, %cst_16 {dimension_numbers = #tpu.dot_dimension_numbers<[1], [0], [0], [1], [0, 0, 1, 1], [], []>} : vector<64x4xbf16>, vector<4x8xbf16>, vector<64x8xf32> -> vector<64x8xf32>
    %17 = arith.addf %11, %16 : vector<64x8xf32>
    %c0_17 = arith.constant 0 : index
    %c0_18 = arith.constant 0 : index
    %c1_19 = arith.constant 1 : index
    %c0_20 = arith.constant 0 : index
    %18 = vector.load %arg1[%c0_17, %c0_18, %c1_19, %c0_20] : memref<1x9x9x4xbf16, #tpu.memory_space<vmem>>, vector<1x8x8x4xbf16>
    %19 = vector.shape_cast %18 : vector<1x8x8x4xbf16> to vector<64x4xbf16>
    %c2 = arith.constant 2 : index
    %c0_21 = arith.constant 0 : index
    %c0_22 = arith.constant 0 : index
    %20 = vector.load %arg5[%c2, %c0_21, %c0_22] : memref<9x4x8xbf16, #tpu.memory_space<vmem>>, vector<1x4x8xbf16>
    %21 = vector.shape_cast %20 : vector<1x4x8xbf16> to vector<4x8xbf16>
    %cst_23 = arith.constant dense<0.000000e+00> : vector<64x8xf32>
    %22 = tpu.matmul %19, %21, %cst_23 {dimension_numbers = #tpu.dot_dimension_numbers<[1], [0], [0], [1], [0, 0, 1, 1], [], []>} : vector<64x4xbf16>, vector<4x8xbf16>, vector<64x8xf32> -> vector<64x8xf32>
    %23 = arith.addf %17, %22 : vector<64x8xf32>
    %c0_24 = arith.constant 0 : index
    %c0_25 = arith.constant 0 : index
    %c0_26 = arith.constant 0 : index
    %c0_27 = arith.constant 0 : index
    %24 = vector.load %arg3[%c0_24, %c0_25, %c0_26, %c0_27] : memref<1x9x9x4xbf16, #tpu.memory_space<vmem>>, vector<1x8x8x4xbf16>
    %25 = vector.shape_cast %24 : vector<1x8x8x4xbf16> to vector<64x4xbf16>
    %c3 = arith.constant 3 : index
    %c0_28 = arith.constant 0 : index
    %c0_29 = arith.constant 0 : index
    %26 = vector.load %arg5[%c3, %c0_28, %c0_29] : memref<9x4x8xbf16, #tpu.memory_space<vmem>>, vector<1x4x8xbf16>
    %27 = vector.shape_cast %26 : vector<1x4x8xbf16> to vector<4x8xbf16>
    %cst_30 = arith.constant dense<0.000000e+00> : vector<64x8xf32>
    %28 = tpu.matmul %25, %27, %cst_30 {dimension_numbers = #tpu.dot_dimension_numbers<[1], [0], [0], [1], [0, 0, 1, 1], [], []>} : vector<64x4xbf16>, vector<4x8xbf16>, vector<64x8xf32> -> vector<64x8xf32>
    %29 = arith.addf %23, %28 : vector<64x8xf32>
    %c0_31 = arith.constant 0 : index
    %c0_32 = arith.constant 0 : index
    %c0_33 = arith.constant 0 : index
    %c0_34 = arith.constant 0 : index
    %30 = vector.load %arg4[%c0_31, %c0_32, %c0_33, %c0_34] : memref<1x9x9x4xbf16, #tpu.memory_space<vmem>>, vector<1x8x8x4xbf16>
    %31 = vector.shape_cast %30 : vector<1x8x8x4xbf16> to vector<64x4xbf16>
    %c4 = arith.constant 4 : index
    %c0_35 = arith.constant 0 : index
    %c0_36 = arith.constant 0 : index
    %32 = vector.load %arg5[%c4, %c0_35, %c0_36] : memref<9x4x8xbf16, #tpu.memory_space<vmem>>, vector<1x4x8xbf16>
    %33 = vector.shape_cast %32 : vector<1x4x8xbf16> to vector<4x8xbf16>
    %cst_37 = arith.constant dense<0.000000e+00> : vector<64x8xf32>
    %34 = tpu.matmul %31, %33, %cst_37 {dimension_numbers = #tpu.dot_dimension_numbers<[1], [0], [0], [1], [0, 0, 1, 1], [], []>} : vector<64x4xbf16>, vector<4x8xbf16>, vector<64x8xf32> -> vector<64x8xf32>
    %35 = arith.addf %29, %34 : vector<64x8xf32>
    %c0_38 = arith.constant 0 : index
    %c0_39 = arith.constant 0 : index
    %36 = vector.load %arg9[%c0_38, %c0_39] : memref<4x128xbf16, #tpu.memory_space<vmem>>, vector<4x128xbf16>
    %cst_40 = arith.constant dense<0.000000e+00> : vector<64x128xf32>
    %37 = tpu.matmul %31, %36, %cst_40 {dimension_numbers = #tpu.dot_dimension_numbers<[1], [0], [0], [1], [0, 0, 1, 1], [], []>} : vector<64x4xbf16>, vector<4x128xbf16>, vector<64x128xf32> -> vector<64x128xf32>
    %38 = arith.addf %5, %37 : vector<64x128xf32>
    %c0_41 = arith.constant 0 : index
    %c0_42 = arith.constant 0 : index
    %c1_43 = arith.constant 1 : index
    %c0_44 = arith.constant 0 : index
    %39 = vector.load %arg3[%c0_41, %c0_42, %c1_43, %c0_44] : memref<1x9x9x4xbf16, #tpu.memory_space<vmem>>, vector<1x8x8x4xbf16>
    %40 = vector.shape_cast %39 : vector<1x8x8x4xbf16> to vector<64x4xbf16>
    %c5 = arith.constant 5 : index
    %c0_45 = arith.constant 0 : index
    %c0_46 = arith.constant 0 : index
    %41 = vector.load %arg5[%c5, %c0_45, %c0_46] : memref<9x4x8xbf16, #tpu.memory_space<vmem>>, vector<1x4x8xbf16>
    %42 = vector.shape_cast %41 : vector<1x4x8xbf16> to vector<4x8xbf16>
    %cst_47 = arith.constant dense<0.000000e+00> : vector<64x8xf32>
    %43 = tpu.matmul %40, %42, %cst_47 {dimension_numbers = #tpu.dot_dimension_numbers<[1], [0], [0], [1], [0, 0, 1, 1], [], []>} : vector<64x4xbf16>, vector<4x8xbf16>, vector<64x8xf32> -> vector<64x8xf32>
    %44 = arith.addf %35, %43 : vector<64x8xf32>
    %c0_48 = arith.constant 0 : index
    %c0_49 = arith.constant 0 : index
    %45 = vector.load %arg9[%c0_48, %c0_49] : memref<4x128xbf16, #tpu.memory_space<vmem>>, vector<4x128xbf16>
    %cst_50 = arith.constant dense<0.000000e+00> : vector<64x128xf32>
    %46 = tpu.matmul %40, %45, %cst_50 {dimension_numbers = #tpu.dot_dimension_numbers<[1], [0], [0], [1], [0, 0, 1, 1], [], []>} : vector<64x4xbf16>, vector<4x128xbf16>, vector<64x128xf32> -> vector<64x128xf32>
    %47 = arith.addf %38, %46 : vector<64x128xf32>
    %c0_51 = arith.constant 0 : index
    %c1_52 = arith.constant 1 : index
    %c0_53 = arith.constant 0 : index
    %c0_54 = arith.constant 0 : index
    %48 = vector.load %arg1[%c0_51, %c1_52, %c0_53, %c0_54] : memref<1x9x9x4xbf16, #tpu.memory_space<vmem>>, vector<1x8x8x4xbf16>
    %49 = vector.shape_cast %48 : vector<1x8x8x4xbf16> to vector<64x4xbf16>
    %c6 = arith.constant 6 : index
    %c0_55 = arith.constant 0 : index
    %c0_56 = arith.constant 0 : index
    %50 = vector.load %arg5[%c6, %c0_55, %c0_56] : memref<9x4x8xbf16, #tpu.memory_space<vmem>>, vector<1x4x8xbf16>
    %51 = vector.shape_cast %50 : vector<1x4x8xbf16> to vector<4x8xbf16>
    %cst_57 = arith.constant dense<0.000000e+00> : vector<64x8xf32>
    %52 = tpu.matmul %49, %51, %cst_57 {dimension_numbers = #tpu.dot_dimension_numbers<[1], [0], [0], [1], [0, 0, 1, 1], [], []>} : vector<64x4xbf16>, vector<4x8xbf16>, vector<64x8xf32> -> vector<64x8xf32>
    %53 = arith.addf %44, %52 : vector<64x8xf32>
    %c0_58 = arith.constant 0 : index
    %c1_59 = arith.constant 1 : index
    %c0_60 = arith.constant 0 : index
    %c0_61 = arith.constant 0 : index
    %54 = vector.load %arg2[%c0_58, %c1_59, %c0_60, %c0_61] : memref<1x9x9x4xbf16, #tpu.memory_space<vmem>>, vector<1x8x8x4xbf16>
    %55 = vector.shape_cast %54 : vector<1x8x8x4xbf16> to vector<64x4xbf16>
    %c7 = arith.constant 7 : index
    %c0_62 = arith.constant 0 : index
    %c0_63 = arith.constant 0 : index
    %56 = vector.load %arg5[%c7, %c0_62, %c0_63] : memref<9x4x8xbf16, #tpu.memory_space<vmem>>, vector<1x4x8xbf16>
    %57 = vector.shape_cast %56 : vector<1x4x8xbf16> to vector<4x8xbf16>
    %cst_64 = arith.constant dense<0.000000e+00> : vector<64x8xf32>
    %58 = tpu.matmul %55, %57, %cst_64 {dimension_numbers = #tpu.dot_dimension_numbers<[1], [0], [0], [1], [0, 0, 1, 1], [], []>} : vector<64x4xbf16>, vector<4x8xbf16>, vector<64x8xf32> -> vector<64x8xf32>
    %59 = arith.addf %53, %58 : vector<64x8xf32>
    %c0_65 = arith.constant 0 : index
    %c0_66 = arith.constant 0 : index
    %60 = vector.load %arg9[%c0_65, %c0_66] : memref<4x128xbf16, #tpu.memory_space<vmem>>, vector<4x128xbf16>
    %cst_67 = arith.constant dense<0.000000e+00> : vector<64x128xf32>
    %61 = tpu.matmul %55, %60, %cst_67 {dimension_numbers = #tpu.dot_dimension_numbers<[1], [0], [0], [1], [0, 0, 1, 1], [], []>} : vector<64x4xbf16>, vector<4x128xbf16>, vector<64x128xf32> -> vector<64x128xf32>
    %62 = arith.addf %47, %61 : vector<64x128xf32>
    %c0_68 = arith.constant 0 : index
    %c1_69 = arith.constant 1 : index
    %c1_70 = arith.constant 1 : index
    %c0_71 = arith.constant 0 : index
    %63 = vector.load %arg1[%c0_68, %c1_69, %c1_70, %c0_71] : memref<1x9x9x4xbf16, #tpu.memory_space<vmem>>, vector<1x8x8x4xbf16>
    %64 = vector.shape_cast %63 : vector<1x8x8x4xbf16> to vector<64x4xbf16>
    %c8 = arith.constant 8 : index
    %c0_72 = arith.constant 0 : index
    %c0_73 = arith.constant 0 : index
    %65 = vector.load %arg5[%c8, %c0_72, %c0_73] : memref<9x4x8xbf16, #tpu.memory_space<vmem>>, vector<1x4x8xbf16>
    %66 = vector.shape_cast %65 : vector<1x4x8xbf16> to vector<4x8xbf16>
    %cst_74 = arith.constant dense<0.000000e+00> : vector<64x8xf32>
    %67 = tpu.matmul %64, %66, %cst_74 {dimension_numbers = #tpu.dot_dimension_numbers<[1], [0], [0], [1], [0, 0, 1, 1], [], []>} : vector<64x4xbf16>, vector<4x8xbf16>, vector<64x8xf32> -> vector<64x8xf32>
    %68 = arith.addf %59, %67 : vector<64x8xf32>
    %c0_75 = arith.constant 0 : index
    %c0_76 = arith.constant 0 : index
    %69 = vector.load %arg9[%c0_75, %c0_76] : memref<4x128xbf16, #tpu.memory_space<vmem>>, vector<4x128xbf16>
    %cst_77 = arith.constant dense<0.000000e+00> : vector<64x128xf32>
    %70 = tpu.matmul %64, %69, %cst_77 {dimension_numbers = #tpu.dot_dimension_numbers<[1], [0], [0], [1], [0, 0, 1, 1], [], []>} : vector<64x4xbf16>, vector<4x128xbf16>, vector<64x128xf32> -> vector<64x128xf32>
    %71 = arith.addf %62, %70 : vector<64x128xf32>
    %cst_78 = arith.constant 0.000000e+00 : f32
    %72 = vector.broadcast %cst_78 : f32 to vector<64x8xf32>
    %73 = arith.cmpf oge, %68, %72 : vector<64x8xf32>
    %cst_79 = arith.constant 0.00999999977 : f32
    %74 = vector.broadcast %cst_79 : f32 to vector<64x8xf32>
    %75 = arith.mulf %74, %68 : vector<64x8xf32>
    %76 = arith.select %73, %68, %75 : vector<64x8xi1>, vector<64x8xf32>
    %cst_80 = arith.constant 0.000000e+00 : f32
    %77 = vector.broadcast %cst_80 : f32 to vector<1x10x10x8xf32>
    %c0_81 = arith.constant 0 : index
    %c0_82 = arith.constant 0 : index
    %c0_83 = arith.constant 0 : index
    %c0_84 = arith.constant 0 : index
    %78 = vector.load %arg11[%c0_81, %c0_82, %c0_83, %c0_84] : memref<1x10x10x8xf32, #tpu.memory_space<vmem>>, vector<1x10x10x8xf32>
    tpu.vector_store %arg11[%c0_81, %c0_82, %c0_83, %c0_84], %77 {strides = array<i32>} : memref<1x10x10x8xf32, #tpu.memory_space<vmem>>, vector<1x10x10x8xf32>,
    %79 = vector.shape_cast %76 : vector<64x8xf32> to vector<1x8x8x8xf32>
    %c0_85 = arith.constant 0 : index
    %c1_86 = arith.constant 1 : index
    %c1_87 = arith.constant 1 : index
    %c0_88 = arith.constant 0 : index
    %80 = vector.load %arg11[%c0_85, %c1_86, %c1_87, %c0_88] : memref<1x10x10x8xf32, #tpu.memory_space<vmem>>, vector<1x8x8x8xf32>
    tpu.vector_store %arg11[%c0_85, %c1_86, %c1_87, %c0_88], %79 {strides = array<i32>} : memref<1x10x10x8xf32, #tpu.memory_space<vmem>>, vector<1x8x8x8xf32>,
    %c0_89 = arith.constant 0 : index
    %c0_90 = arith.constant 0 : index
    %c0_91 = arith.constant 0 : index
    %c0_92 = arith.constant 0 : index
    %81 = vector.load %arg11[%c0_89, %c0_90, %c0_91, %c0_92] : memref<1x10x10x8xf32, #tpu.memory_space<vmem>>, vector<1x8x8x8xf32>
    %82 = vector.shape_cast %81 : vector<1x8x8x8xf32> to vector<64x8xf32>
    %c0_93 = arith.constant 0 : index
    %c0_94 = arith.constant 0 : index
    %c0_95 = arith.constant 0 : index
    %83 = vector.load %arg7[%c0_93, %c0_94, %c0_95] : memref<9x8x128xf32, #tpu.memory_space<vmem>>, vector<1x8x128xf32>
    %84 = vector.shape_cast %83 : vector<1x8x128xf32> to vector<8x128xf32>
    %cst_96 = arith.constant dense<0.000000e+00> : vector<64x128xf32>
    %85 = tpu.matmul %82, %84, %cst_96 {dimension_numbers = #tpu.dot_dimension_numbers<[1], [0], [0], [1], [0, 0, 1, 1], [], []>} : vector<64x8xf32>, vector<8x128xf32>, vector<64x128xf32> -> vector<64x128xf32>
    %86 = arith.addf %71, %85 : vector<64x128xf32>
    %c0_97 = arith.constant 0 : index
    %c0_98 = arith.constant 0 : index
    %c1_99 = arith.constant 1 : index
    %c0_100 = arith.constant 0 : index
    %87 = vector.load %arg11[%c0_97, %c0_98, %c1_99, %c0_100] : memref<1x10x10x8xf32, #tpu.memory_space<vmem>>, vector<1x8x8x8xf32>
    %88 = vector.shape_cast %87 : vector<1x8x8x8xf32> to vector<64x8xf32>
    %c1_101 = arith.constant 1 : index
    %c0_102 = arith.constant 0 : index
    %c0_103 = arith.constant 0 : index
    %89 = vector.load %arg7[%c1_101, %c0_102, %c0_103] : memref<9x8x128xf32, #tpu.memory_space<vmem>>, vector<1x8x128xf32>
    %90 = vector.shape_cast %89 : vector<1x8x128xf32> to vector<8x128xf32>
    %cst_104 = arith.constant dense<0.000000e+00> : vector<64x128xf32>
    %91 = tpu.matmul %88, %90, %cst_104 {dimension_numbers = #tpu.dot_dimension_numbers<[1], [0], [0], [1], [0, 0, 1, 1], [], []>} : vector<64x8xf32>, vector<8x128xf32>, vector<64x128xf32> -> vector<64x128xf32>
    %92 = arith.addf %86, %91 : vector<64x128xf32>
    %c0_105 = arith.constant 0 : index
    %c0_106 = arith.constant 0 : index
    %c2_107 = arith.constant 2 : index
    %c0_108 = arith.constant 0 : index
    %93 = vector.load %arg11[%c0_105, %c0_106, %c2_107, %c0_108] : memref<1x10x10x8xf32, #tpu.memory_space<vmem>>, vector<1x8x8x8xf32>
    %94 = vector.shape_cast %93 : vector<1x8x8x8xf32> to vector<64x8xf32>
    %c2_109 = arith.constant 2 : index
    %c0_110 = arith.constant 0 : index
    %c0_111 = arith.constant 0 : index
    %95 = vector.load %arg7[%c2_109, %c0_110, %c0_111] : memref<9x8x128xf32, #tpu.memory_space<vmem>>, vector<1x8x128xf32>
    %96 = vector.shape_cast %95 : vector<1x8x128xf32> to vector<8x128xf32>
    %cst_112 = arith.constant dense<0.000000e+00> : vector<64x128xf32>
    %97 = tpu.matmul %94, %96, %cst_112 {dimension_numbers = #tpu.dot_dimension_numbers<[1], [0], [0], [1], [0, 0, 1, 1], [], []>} : vector<64x8xf32>, vector<8x128xf32>, vector<64x128xf32> -> vector<64x128xf32>
    %98 = arith.addf %92, %97 : vector<64x128xf32>
    %c0_113 = arith.constant 0 : index
    %c1_114 = arith.constant 1 : index
    %c0_115 = arith.constant 0 : index
    %c0_116 = arith.constant 0 : index
    %99 = vector.load %arg11[%c0_113, %c1_114, %c0_115, %c0_116] : memref<1x10x10x8xf32, #tpu.memory_space<vmem>>, vector<1x8x8x8xf32>
    %100 = vector.shape_cast %99 : vector<1x8x8x8xf32> to vector<64x8xf32>
    %c3_117 = arith.constant 3 : index
    %c0_118 = arith.constant 0 : index
    %c0_119 = arith.constant 0 : index
    %101 = vector.load %arg7[%c3_117, %c0_118, %c0_119] : memref<9x8x128xf32, #tpu.memory_space<vmem>>, vector<1x8x128xf32>
    %102 = vector.shape_cast %101 : vector<1x8x128xf32> to vector<8x128xf32>
    %cst_120 = arith.constant dense<0.000000e+00> : vector<64x128xf32>
    %103 = tpu.matmul %100, %102, %cst_120 {dimension_numbers = #tpu.dot_dimension_numbers<[1], [0], [0], [1], [0, 0, 1, 1], [], []>} : vector<64x8xf32>, vector<8x128xf32>, vector<64x128xf32> -> vector<64x128xf32>
    %104 = arith.addf %98, %103 : vector<64x128xf32>
    %c0_121 = arith.constant 0 : index
    %c1_122 = arith.constant 1 : index
    %c1_123 = arith.constant 1 : index
    %c0_124 = arith.constant 0 : index
    %105 = vector.load %arg11[%c0_121, %c1_122, %c1_123, %c0_124] : memref<1x10x10x8xf32, #tpu.memory_space<vmem>>, vector<1x8x8x8xf32>
    %106 = vector.shape_cast %105 : vector<1x8x8x8xf32> to vector<64x8xf32>
    %c4_125 = arith.constant 4 : index
    %c0_126 = arith.constant 0 : index
    %c0_127 = arith.constant 0 : index
    %107 = vector.load %arg7[%c4_125, %c0_126, %c0_127] : memref<9x8x128xf32, #tpu.memory_space<vmem>>, vector<1x8x128xf32>
    %108 = vector.shape_cast %107 : vector<1x8x128xf32> to vector<8x128xf32>
    %cst_128 = arith.constant dense<0.000000e+00> : vector<64x128xf32>
    %109 = tpu.matmul %106, %108, %cst_128 {dimension_numbers = #tpu.dot_dimension_numbers<[1], [0], [0], [1], [0, 0, 1, 1], [], []>} : vector<64x8xf32>, vector<8x128xf32>, vector<64x128xf32> -> vector<64x128xf32>
    %110 = arith.addf %104, %109 : vector<64x128xf32>
    %c0_129 = arith.constant 0 : index
    %c1_130 = arith.constant 1 : index
    %c2_131 = arith.constant 2 : index
    %c0_132 = arith.constant 0 : index
    %111 = vector.load %arg11[%c0_129, %c1_130, %c2_131, %c0_132] : memref<1x10x10x8xf32, #tpu.memory_space<vmem>>, vector<1x8x8x8xf32>
    %112 = vector.shape_cast %111 : vector<1x8x8x8xf32> to vector<64x8xf32>
    %c5_133 = arith.constant 5 : index
    %c0_134 = arith.constant 0 : index
    %c0_135 = arith.constant 0 : index
    %113 = vector.load %arg7[%c5_133, %c0_134, %c0_135] : memref<9x8x128xf32, #tpu.memory_space<vmem>>, vector<1x8x128xf32>
    %114 = vector.shape_cast %113 : vector<1x8x128xf32> to vector<8x128xf32>
    %cst_136 = arith.constant dense<0.000000e+00> : vector<64x128xf32>
    %115 = tpu.matmul %112, %114, %cst_136 {dimension_numbers = #tpu.dot_dimension_numbers<[1], [0], [0], [1], [0, 0, 1, 1], [], []>} : vector<64x8xf32>, vector<8x128xf32>, vector<64x128xf32> -> vector<64x128xf32>
    %116 = arith.addf %110, %115 : vector<64x128xf32>
    %c0_137 = arith.constant 0 : index
    %c2_138 = arith.constant 2 : index
    %c0_139 = arith.constant 0 : index
    %c0_140 = arith.constant 0 : index
    %117 = vector.load %arg11[%c0_137, %c2_138, %c0_139, %c0_140] : memref<1x10x10x8xf32, #tpu.memory_space<vmem>>, vector<1x8x8x8xf32>
    %118 = vector.shape_cast %117 : vector<1x8x8x8xf32> to vector<64x8xf32>
    %c6_141 = arith.constant 6 : index
    %c0_142 = arith.constant 0 : index
    %c0_143 = arith.constant 0 : index
    %119 = vector.load %arg7[%c6_141, %c0_142, %c0_143] : memref<9x8x128xf32, #tpu.memory_space<vmem>>, vector<1x8x128xf32>
    %120 = vector.shape_cast %119 : vector<1x8x128xf32> to vector<8x128xf32>
    %cst_144 = arith.constant dense<0.000000e+00> : vector<64x128xf32>
    %121 = tpu.matmul %118, %120, %cst_144 {dimension_numbers = #tpu.dot_dimension_numbers<[1], [0], [0], [1], [0, 0, 1, 1], [], []>} : vector<64x8xf32>, vector<8x128xf32>, vector<64x128xf32> -> vector<64x128xf32>
    %122 = arith.addf %116, %121 : vector<64x128xf32>
    %c0_145 = arith.constant 0 : index
    %c2_146 = arith.constant 2 : index
    %c1_147 = arith.constant 1 : index
    %c0_148 = arith.constant 0 : index
    %123 = vector.load %arg11[%c0_145, %c2_146, %c1_147, %c0_148] : memref<1x10x10x8xf32, #tpu.memory_space<vmem>>, vector<1x8x8x8xf32>
    %124 = vector.shape_cast %123 : vector<1x8x8x8xf32> to vector<64x8xf32>
    %c7_149 = arith.constant 7 : index
    %c0_150 = arith.constant 0 : index
    %c0_151 = arith.constant 0 : index
    %125 = vector.load %arg7[%c7_149, %c0_150, %c0_151] : memref<9x8x128xf32, #tpu.memory_space<vmem>>, vector<1x8x128xf32>
    %126 = vector.shape_cast %125 : vector<1x8x128xf32> to vector<8x128xf32>
    %cst_152 = arith.constant dense<0.000000e+00> : vector<64x128xf32>
    %127 = tpu.matmul %124, %126, %cst_152 {dimension_numbers = #tpu.dot_dimension_numbers<[1], [0], [0], [1], [0, 0, 1, 1], [], []>} : vector<64x8xf32>, vector<8x128xf32>, vector<64x128xf32> -> vector<64x128xf32>
    %128 = arith.addf %122, %127 : vector<64x128xf32>
    %c0_153 = arith.constant 0 : index
    %c2_154 = arith.constant 2 : index
    %c2_155 = arith.constant 2 : index
    %c0_156 = arith.constant 0 : index
    %129 = vector.load %arg11[%c0_153, %c2_154, %c2_155, %c0_156] : memref<1x10x10x8xf32, #tpu.memory_space<vmem>>, vector<1x8x8x8xf32>
    %130 = vector.shape_cast %129 : vector<1x8x8x8xf32> to vector<64x8xf32>
    %c8_157 = arith.constant 8 : index
    %c0_158 = arith.constant 0 : index
    %c0_159 = arith.constant 0 : index
    %131 = vector.load %arg7[%c8_157, %c0_158, %c0_159] : memref<9x8x128xf32, #tpu.memory_space<vmem>>, vector<1x8x128xf32>
    %132 = vector.shape_cast %131 : vector<1x8x128xf32> to vector<8x128xf32>
    %cst_160 = arith.constant dense<0.000000e+00> : vector<64x128xf32>
    %133 = tpu.matmul %130, %132, %cst_160 {dimension_numbers = #tpu.dot_dimension_numbers<[1], [0], [0], [1], [0, 0, 1, 1], [], []>} : vector<64x8xf32>, vector<8x128xf32>, vector<64x128xf32> -> vector<64x128xf32>
    %134 = arith.addf %128, %133 : vector<64x128xf32>
    %cst_161 = arith.constant 0.000000e+00 : f32
    %135 = vector.broadcast %cst_161 : f32 to vector<64x128xf32>
    %136 = arith.cmpf oge, %134, %135 : vector<64x128xf32>
    %cst_162 = arith.constant 0.00999999977 : f32
    %137 = vector.broadcast %cst_162 : f32 to vector<64x128xf32>
    %138 = arith.mulf %137, %134 : vector<64x128xf32>
    %139 = arith.select %136, %134, %138 : vector<64x128xi1>, vector<64x128xf32>
    %140 = vector.shape_cast %139 : vector<64x128xf32> to vector<1x8x8x128xf32>
    %c0_163 = arith.constant 0 : index
    %c0_164 = arith.constant 0 : index
    %c0_165 = arith.constant 0 : index
    %c0_166 = arith.constant 0 : index
    %141 = vector.load %arg10[%c0_163, %c0_164, %c0_165, %c0_166] : memref<1x8x8x128xf32, #tpu.memory_space<vmem>>, vector<1x8x8x128xf32>
    tpu.vector_store %arg10[%c0_163, %c0_164, %c0_165, %c0_166], %140 {strides = array<i32>} : memref<1x8x8x128xf32, #tpu.memory_space<vmem>>, vector<1x8x8x128xf32>,
    return
  }
  func.func @transform_0(%arg0: i32) -> (i32, i32, i32, i32) {
    %c0_i32 = arith.constant 0 : i32
    %c0_i32_0 = arith.constant 0 : i32
    %c0_i32_1 = arith.constant 0 : i32
    %c0_i32_2 = arith.constant 0 : i32
    return %arg0, %c0_i32, %c0_i32_0, %c0_i32_1 : i32, i32, i32, i32
  }
  func.func @transform_1(%arg0: i32) -> (i32, i32, i32, i32) {
    %c0_i32 = arith.constant 0 : i32
    %c0_i32_0 = arith.constant 0 : i32
    %c0_i32_1 = arith.constant 0 : i32
    %c0_i32_2 = arith.constant 0 : i32
    return %arg0, %c0_i32, %c0_i32_0, %c0_i32_1 : i32, i32, i32, i32
  }
  func.func @transform_2(%arg0: i32) -> (i32, i32, i32, i32) {
    %c0_i32 = arith.constant 0 : i32
    %c0_i32_0 = arith.constant 0 : i32
    %c0_i32_1 = arith.constant 0 : i32
    %c0_i32_2 = arith.constant 0 : i32
    return %arg0, %c0_i32, %c0_i32_0, %c0_i32_1 : i32, i32, i32, i32
  }
  func.func @transform_3(%arg0: i32) -> (i32, i32, i32, i32) {
    %c0_i32 = arith.constant 0 : i32
    %c0_i32_0 = arith.constant 0 : i32
    %c0_i32_1 = arith.constant 0 : i32
    %c0_i32_2 = arith.constant 0 : i32
    return %arg0, %c0_i32, %c0_i32_0, %c0_i32_1 : i32, i32, i32, i32
  }
  func.func @transform_4(%arg0: i32) -> (i32, i32, i32) {
    %c0_i32 = arith.constant 0 : i32
    %c0_i32_0 = arith.constant 0 : i32
    %c0_i32_1 = arith.constant 0 : i32
    %c0_i32_2 = arith.constant 0 : i32
    return %c0_i32, %c0_i32_0, %c0_i32_1 : i32, i32, i32
  }
  func.func @transform_5(%arg0: i32) -> (i32, i32) {
    %c0_i32 = arith.constant 0 : i32
    %c0_i32_0 = arith.constant 0 : i32
    %c0_i32_1 = arith.constant 0 : i32
    return %c0_i32, %c0_i32_0 : i32, i32
  }
  func.func @transform_6(%arg0: i32) -> (i32, i32, i32) {
    %c0_i32 = arith.constant 0 : i32
    %c0_i32_0 = arith.constant 0 : i32
    %c0_i32_1 = arith.constant 0 : i32
    %c0_i32_2 = arith.constant 0 : i32
    return %c0_i32, %c0_i32_0, %c0_i32_1 : i32, i32, i32
  }
  func.func @transform_7(%arg0: i32) -> (i32, i32) {
    %c0_i32 = arith.constant 0 : i32
    %c0_i32_0 = arith.constant 0 : i32
    %c0_i32_1 = arith.constant 0 : i32
    return %c0_i32, %c0_i32_0 : i32, i32
  }
  func.func @transform_8(%arg0: i32) -> (i32, i32) {
    %c0_i32 = arith.constant 0 : i32
    %c0_i32_0 = arith.constant 0 : i32
    %c0_i32_1 = arith.constant 0 : i32
    return %c0_i32, %c0_i32_0 : i32, i32
  }
  func.func @transform_9(%arg0: i32) -> (i32, i32, i32, i32) {
    %c0_i32 = arith.constant 0 : i32
    %c0_i32_0 = arith.constant 0 : i32
    %c0_i32_1 = arith.constant 0 : i32
    %c0_i32_2 = arith.constant 0 : i32
    return %arg0, %c0_i32, %c0_i32_0, %c0_i32_1 : i32, i32, i32, i32
  }
}

</mosaic_0001>

<llo_original>
// kernel: basic_block_forward.1
$region0: #{basic_block_forward.1}
  #allocation0 [shape = 'u32[]', space=smem, size = 0x4, offset = 0x4, fixed_abs, tag = 'smem constant byte address 0x4 - core index']
  #allocation1 [shape = 'u32[144,128]{1,0:T(1,128)}', space=vmem, size = 0x12000, scoped, tag = 'internal scratch']
  #allocation2 [shape = 'f32[1,10,10,8]{3,2,1,0:T(8,128)}', space=vmem, size = 0x14000, scoped, tag = 'scratch operand']
  %s0 = inlined_call_operand.vmem [shape: bf16[2,9,9,4], index: 0, kind: input, shape index: {}]
  %s1 = inlined_call_operand.vmem [shape: bf16[2,9,9,4], index: 1, kind: input, shape index: {}]
  %s2 = inlined_call_operand.vmem [shape: bf16[2,9,9,4], index: 2, kind: input, shape index: {}]
  %s3 = inlined_call_operand.vmem [shape: bf16[2,9,9,4], index: 3, kind: input, shape index: {}]
  %s4 = inlined_call_operand.vmem [shape: bf16[9,4,8], index: 4, kind: input, shape index: {}]
  %s5 = inlined_call_operand.vmem [shape: f32[1,8], index: 5, kind: input, shape index: {}]
  %s6 = inlined_call_operand.vmem [shape: f32[9,8,128], index: 6, kind: input, shape index: {}]
  %s7 = inlined_call_operand.vmem [shape: f32[1,128], index: 7, kind: input, shape index: {}]
  %s8 = inlined_call_operand.vmem [shape: bf16[4,128], index: 8, kind: input, shape index: {}]
  %s9 = inlined_call_operand.vmem [shape: f32[2,8,8,128], index: 9, kind: output, shape index: {}]
  %s10 = sld [smem:[#allocation0]]
  $region69: #{basic_block_forward.1} parent=0
    _
  %s12 = ssub.s32 1, %s10
  %s13 = scalar_select 0, %s12, %s10
  loop: start=0, step=1, limit=4
  $region2: #{basic_block_forward.1} parent=0 // loop_pre_header
    _
  $region3: #{basic_block_forward.1} parent=0 // loop_header
    %s15 = sphi 0, %s19
    %p16 = scmp.ge.s32.totalorder %s15, 4
    %s25 = sphi 0, %s27
    %s28 = sphi 0, %s25
    %s29 = sphi 0, %s28
    %s45 = sphi 0, %s29
    %s51 = sphi 0, %s53
    %s54 = sphi 0, %s51
    %s55 = sphi 0, %s54
    %s71 = sphi 0, %s55
    %s77 = sphi 0, %s79
    %s80 = sphi 0, %s77
    %s81 = sphi 0, %s80
    %s97 = sphi 0, %s81
    %s103 = sphi 0, %s105
    %s106 = sphi 0, %s103
    %s107 = sphi 0, %s106
    %s123 = sphi 0, %s107
    %s127 = sphi 0, %s127
    %s129 = sphi 0, %s127
    %s130 = sphi 0, %s129
    %s144 = sphi 0, %s130
    %s148 = sphi 0, %s148
    %s150 = sphi 0, %s148
    %s151 = sphi 0, %s150
    %s165 = sphi 0, %s151
    %s169 = sphi 0, %s169
    %s171 = sphi 0, %s169
    %s172 = sphi 0, %s171
    %s186 = sphi 0, %s172
    %s190 = sphi 0, %s190
    %s192 = sphi 0, %s190
    %s193 = sphi 0, %s192
    %s207 = sphi 0, %s193
    %s211 = sphi 0, %s211
    %s213 = sphi 0, %s211
    %s214 = sphi 0, %s213
    %s228 = sphi 0, %s214
    %s234 = sphi 0, %s236
    %s237 = sphi 0, %s234
    %s238 = sphi 0, %s237
    %s254 = sphi 0, %s238
  $region4: #{basic_block_forward.1} parent=0 // loop_header_branch
    %18 = sbr.rel (%p16) target = $region8
  $region5: #{basic_block_forward.1} parent=0 // loop_body
    %s20 = ssub.s32 %s15, 1
    %s21 = ssub.s32 %s15, 2
    %s22 = sadd.s32 %s15, 1
    %s23 = ssub.s32 %s15, %s22
    %p24 = scmp.eq.s32.totalorder %s23, 0
    %s26 = sadd.s32 %s25, 1
    %s27 = scalar_select %p24, %s25, %s26
    %p30 = pneg %p24
    %p31 = scmp.eq.s32.totalorder %s15, 1
    %p32 = por %p30, %p31
    %p33 = scmp.ne.s32.totalorder %s25, %s28
    %p34 = scmp.eq.s32.totalorder %s15, 0
    %p35 = por %p33, %p34
    %p36 = scmp.ne.s32.totalorder %s25, %s28
    %p37 = scmp.eq.s32.totalorder %s20, 1
    %p38 = por %p36, %p37
    %p39 = scmp.ne.s32.totalorder %s28, %s29
    %p40 = scmp.eq.s32.totalorder %s20, 0
    %p41 = por %p39, %p40
    %p42 = scmp.ne.s32.totalorder %s28, %s29
    %p43 = scmp.eq.s32.totalorder %s21, 1
    %p44 = por %p42, %p43
    %p46 = scmp.ne.s32.totalorder %s29, %s45
    %p47 = scmp.eq.s32.totalorder %s21, 0
    %p48 = por %p46, %p47
    %s49 = ssub.s32 %s15, %s22
    %p50 = scmp.eq.s32.totalorder %s49, 0
    %s52 = sadd.s32 %s51, 1
    %s53 = scalar_select %p50, %s51, %s52
    %p56 = pneg %p50
    %p57 = scmp.eq.s32.totalorder %s15, 1
    %p58 = por %p56, %p57
    %p59 = scmp.ne.s32.totalorder %s51, %s54
    %p60 = scmp.eq.s32.totalorder %s15, 0
    %p61 = por %p59, %p60
    %p62 = scmp.ne.s32.totalorder %s51, %s54
    %p63 = scmp.eq.s32.totalorder %s20, 1
    %p64 = por %p62, %p63
    %p65 = scmp.ne.s32.totalorder %s54, %s55
    %p66 = scmp.eq.s32.totalorder %s20, 0
    %p67 = por %p65, %p66
    %p68 = scmp.ne.s32.totalorder %s54, %s55
    %p69 = scmp.eq.s32.totalorder %s21, 1
    %p70 = por %p68, %p69
    %p72 = scmp.ne.s32.totalorder %s55, %s71
    %p73 = scmp.eq.s32.totalorder %s21, 0
    %p74 = por %p72, %p73
    %s75 = ssub.s32 %s15, %s22
    %p76 = scmp.eq.s32.totalorder %s75, 0
    %s78 = sadd.s32 %s77, 1
    %s79 = scalar_select %p76, %s77, %s78
    %p82 = pneg %p76
    %p83 = scmp.eq.s32.totalorder %s15, 1
    %p84 = por %p82, %p83
    %p85 = scmp.ne.s32.totalorder %s77, %s80
    %p86 = scmp.eq.s32.totalorder %s15, 0
    %p87 = por %p85, %p86
    %p88 = scmp.ne.s32.totalorder %s77, %s80
    %p89 = scmp.eq.s32.totalorder %s20, 1
    %p90 = por %p88, %p89
    %p91 = scmp.ne.s32.totalorder %s80, %s81
    %p92 = scmp.eq.s32.totalorder %s20, 0
    %p93 = por %p91, %p92
    %p94 = scmp.ne.s32.totalorder %s80, %s81
    %p95 = scmp.eq.s32.totalorder %s21, 1
    %p96 = por %p94, %p95
    %p98 = scmp.ne.s32.totalorder %s81, %s97
    %p99 = scmp.eq.s32.totalorder %s21, 0
    %p100 = por %p98, %p99
    %s101 = ssub.s32 %s15, %s22
    %p102 = scmp.eq.s32.totalorder %s101, 0
    %s104 = sadd.s32 %s103, 1
    %s105 = scalar_select %p102, %s103, %s104
    %p108 = pneg %p102
    %p109 = scmp.eq.s32.totalorder %s15, 1
    %p110 = por %p108, %p109
    %p111 = scmp.ne.s32.totalorder %s103, %s106
    %p112 = scmp.eq.s32.totalorder %s15, 0
    %p113 = por %p111, %p112
    %p114 = scmp.ne.s32.totalorder %s103, %s106
    %p115 = scmp.eq.s32.totalorder %s20, 1
    %p116 = por %p114, %p115
    %p117 = scmp.ne.s32.totalorder %s106, %s107
    %p118 = scmp.eq.s32.totalorder %s20, 0
    %p119 = por %p117, %p118
    %p120 = scmp.ne.s32.totalorder %s106, %s107
    %p121 = scmp.eq.s32.totalorder %s21, 1
    %p122 = por %p120, %p121
    %p124 = scmp.ne.s32.totalorder %s107, %s123
    %p125 = scmp.eq.s32.totalorder %s21, 0
    %p126 = por %p124, %p125
    %s128 = sadd.s32 %s127, 1
    %p131 = scmp.eq.s32.totalorder %s15, 1
    %p132 = scmp.ne.s32.totalorder %s127, %s129
    %p133 = scmp.eq.s32.totalorder %s15, 0
    %p134 = por %p132, %p133
    %p135 = scmp.ne.s32.totalorder %s127, %s129
    %p136 = scmp.eq.s32.totalorder %s20, 1
    %p137 = por %p135, %p136
    %p138 = scmp.ne.s32.totalorder %s129, %s130
    %p139 = scmp.eq.s32.totalorder %s20, 0
    %p140 = por %p138, %p139
    %p141 = scmp.ne.s32.totalorder %s129, %s130
    %p142 = scmp.eq.s32.totalorder %s21, 1
    %p143 = por %p141, %p142
    %p145 = scmp.ne.s32.totalorder %s130, %s144
    %p146 = scmp.eq.s32.totalorder %s21, 0
    %p147 = por %p145, %p146
    %s149 = sadd.s32 %s148, 1
    %p152 = scmp.eq.s32.totalorder %s15, 1
    %p153 = scmp.ne.s32.totalorder %s148, %s150
    %p154 = scmp.eq.s32.totalorder %s15, 0
    %p155 = por %p153, %p154
    %p156 = scmp.ne.s32.totalorder %s148, %s150
    %p157 = scmp.eq.s32.totalorder %s20, 1
    %p158 = por %p156, %p157
    %p159 = scmp.ne.s32.totalorder %s150, %s151
    %p160 = scmp.eq.s32.totalorder %s20, 0
    %p161 = por %p159, %p160
    %p162 = scmp.ne.s32.totalorder %s150, %s151
    %p163 = scmp.eq.s32.totalorder %s21, 1
    %p164 = por %p162, %p163
    %p166 = scmp.ne.s32.totalorder %s151, %s165
    %p167 = scmp.eq.s32.totalorder %s21, 0
    %p168 = por %p166, %p167
    %s170 = sadd.s32 %s169, 1
    %p173 = scmp.eq.s32.totalorder %s15, 1
    %p174 = scmp.ne.s32.totalorder %s169, %s171
    %p175 = scmp.eq.s32.totalorder %s15, 0
    %p176 = por %p174, %p175
    %p177 = scmp.ne.s32.totalorder %s169, %s171
    %p178 = scmp.eq.s32.totalorder %s20, 1
    %p179 = por %p177, %p178
    %p180 = scmp.ne.s32.totalorder %s171, %s172
    %p181 = scmp.eq.s32.totalorder %s20, 0
    %p182 = por %p180, %p181
    %p183 = scmp.ne.s32.totalorder %s171, %s172
    %p184 = scmp.eq.s32.totalorder %s21, 1
    %p185 = por %p183, %p184
    %p187 = scmp.ne.s32.totalorder %s172, %s186
    %p188 = scmp.eq.s32.totalorder %s21, 0
    %p189 = por %p187, %p188
    %s191 = sadd.s32 %s190, 1
    %p194 = scmp.eq.s32.totalorder %s15, 1
    %p195 = scmp.ne.s32.totalorder %s190, %s192
    %p196 = scmp.eq.s32.totalorder %s15, 0
    %p197 = por %p195, %p196
    %p198 = scmp.ne.s32.totalorder %s190, %s192
    %p199 = scmp.eq.s32.totalorder %s20, 1
    %p200 = por %p198, %p199
    %p201 = scmp.ne.s32.totalorder %s192, %s193
    %p202 = scmp.eq.s32.totalorder %s20, 0
    %p203 = por %p201, %p202
    %p204 = scmp.ne.s32.totalorder %s192, %s193
    %p205 = scmp.eq.s32.totalorder %s21, 1
    %p206 = por %p204, %p205
    %p208 = scmp.ne.s32.totalorder %s193, %s207
    %p209 = scmp.eq.s32.totalorder %s21, 0
    %p210 = por %p208, %p209
    %s212 = sadd.s32 %s211, 1
    %p215 = scmp.eq.s32.totalorder %s15, 1
    %p216 = scmp.ne.s32.totalorder %s211, %s213
    %p217 = scmp.eq.s32.totalorder %s15, 0
    %p218 = por %p216, %p217
    %p219 = scmp.ne.s32.totalorder %s211, %s213
    %p220 = scmp.eq.s32.totalorder %s20, 1
    %p221 = por %p219, %p220
    %p222 = scmp.ne.s32.totalorder %s213, %s214
    %p223 = scmp.eq.s32.totalorder %s20, 0
    %p224 = por %p222, %p223
    %p225 = scmp.ne.s32.totalorder %s213, %s214
    %p226 = scmp.eq.s32.totalorder %s21, 1
    %p227 = por %p225, %p226
    %p229 = scmp.ne.s32.totalorder %s214, %s228
    %p230 = scmp.eq.s32.totalorder %s21, 0
    %p231 = por %p229, %p230
    %s232 = ssub.s32 %s15, %s22
    %p233 = scmp.eq.s32.totalorder %s232, 0
    %s235 = sadd.s32 %s234, 1
    %s236 = scalar_select %p233, %s234, %s235
    %p239 = pneg %p233
    %p240 = scmp.eq.s32.totalorder %s15, 1
    %p241 = por %p239, %p240
    %p242 = scmp.ne.s32.totalorder %s234, %s237
    %p243 = scmp.eq.s32.totalorder %s15, 0
    %p244 = por %p242, %p243
    %p245 = scmp.ne.s32.totalorder %s234, %s237
    %p246 = scmp.eq.s32.totalorder %s20, 1
    %p247 = por %p245, %p246
    %p248 = scmp.ne.s32.totalorder %s237, %s238
    %p249 = scmp.eq.s32.totalorder %s20, 0
    %p250 = por %p248, %p249
    %p251 = scmp.ne.s32.totalorder %s237, %s238
    %p252 = scmp.eq.s32.totalorder %s21, 1
    %p253 = por %p251, %p252
    %p255 = scmp.ne.s32.totalorder %s238, %s254
    %p256 = scmp.eq.s32.totalorder %s21, 0
    %p257 = por %p255, %p256
    %p258 = scmp.le.s32.totalorder 1, %s15
    %p259 = scmp.lt.s32.totalorder %s15, 3
    %p260 = pnand %p258, %p259
    %p261 = pneg %p260
    // Predicated region
    $region9: #{basic_block_forward.1} parent=5 // pred_check
      _
    $region10: #{basic_block_forward.1} parent=5 // pred_check_branch
      %263 = sbr.rel (%p260) target = $region12
    $region11: #{basic_block_forward.1} parent=5 // pred_region
      %s264 = ssub.s32 %s15, 1
      // Predicated region
      $region13: #{basic_block_forward.1} parent=11 // pred_check
        %p265 = pneg %p140
      $region14: #{basic_block_forward.1} parent=11 // pred_check_branch
        %267 = sbr.rel (%p265) target = $region16
      $region15: #{basic_block_forward.1} parent=11 // pred_region
        _
      $region16: #{basic_block_forward.1} parent=11 // pred_fallthru
        _
      // Predicated region
      $region17: #{basic_block_forward.1} parent=11 // pred_check
        %p268 = pneg %p161
      $region18: #{basic_block_forward.1} parent=11 // pred_check_branch
        %270 = sbr.rel (%p268) target = $region20
      $region19: #{basic_block_forward.1} parent=11 // pred_region
        _
      $region20: #{basic_block_forward.1} parent=11 // pred_fallthru
        _
      // Predicated region
      $region21: #{basic_block_forward.1} parent=11 // pred_check
        %p271 = pneg %p182
      $region22: #{basic_block_forward.1} parent=11 // pred_check_branch
        %273 = sbr.rel (%p271) target = $region24
      $region23: #{basic_block_forward.1} parent=11 // pred_region
        _
      $region24: #{basic_block_forward.1} parent=11 // pred_fallthru
        _
      // Predicated region
      $region25: #{basic_block_forward.1} parent=11 // pred_check
        %p274 = pneg %p203
      $region26: #{basic_block_forward.1} parent=11 // pred_check_branch
        %276 = sbr.rel (%p274) target = $region28
      $region27: #{basic_block_forward.1} parent=11 // pred_region
        _
      $region28: #{basic_block_forward.1} parent=11 // pred_fallthru
        _
      // Predicated region
      $region29: #{basic_block_forward.1} parent=11 // pred_check
        %p277 = pneg %p224
      $region30: #{basic_block_forward.1} parent=11 // pred_check_branch
        %279 = sbr.rel (%p277) target = $region32
      $region31: #{basic_block_forward.1} parent=11 // pred_region
        _
      $region32: #{basic_block_forward.1} parent=11 // pred_fallthru
        _
    $region12: #{basic_block_forward.1} parent=5 // pred_fallthru
      _
    %p280 = scmp.lt.s32.totalorder %s15, 2
    // Predicated region
    $region33: #{basic_block_forward.1} parent=5 // pred_check
      %p281 = pneg %p280
    $region34: #{basic_block_forward.1} parent=5 // pred_check_branch
      %283 = sbr.rel (%p281) target = $region36
    $region35: #{basic_block_forward.1} parent=5 // pred_region
      // Predicated region
      $region37: #{basic_block_forward.1} parent=35 // pred_check
        %p284 = pneg %p35
      $region38: #{basic_block_forward.1} parent=35 // pred_check_branch
        %286 = sbr.rel (%p284) target = $region40
      $region39: #{basic_block_forward.1} parent=35 // pred_region
        %p287 = scmp.lt.s32.totalorder %s15, 1
        %s288 = scalar_select %p287, %s15, 1
        %s289 = smul.addr %s288, 18
        %s290 = smul.addr %s289, 4
        %s291 = scalar_lea.vmem %s0, %s290
      $region40: #{basic_block_forward.1} parent=35 // pred_fallthru
        _
      // Predicated region
      $region41: #{basic_block_forward.1} parent=35 // pred_check
        %p292 = pneg %p61
      $region42: #{basic_block_forward.1} parent=35 // pred_check_branch
        %294 = sbr.rel (%p292) target = $region44
      $region43: #{basic_block_forward.1} parent=35 // pred_region
        %p295 = scmp.lt.s32.totalorder %s15, 1
        %s296 = scalar_select %p295, %s15, 1
        %s297 = smul.addr %s296, 18
        %s298 = smul.addr %s297, 4
        %s299 = scalar_lea.vmem %s1, %s298
      $region44: #{basic_block_forward.1} parent=35 // pred_fallthru
        _
      // Predicated region
      $region45: #{basic_block_forward.1} parent=35 // pred_check
        %p300 = pneg %p87
      $region46: #{basic_block_forward.1} parent=35 // pred_check_branch
        %302 = sbr.rel (%p300) target = $region48
      $region47: #{basic_block_forward.1} parent=35 // pred_region
        %p303 = scmp.lt.s32.totalorder %s15, 1
        %s304 = scalar_select %p303, %s15, 1
        %s305 = smul.addr %s304, 18
        %s306 = smul.addr %s305, 4
        %s307 = scalar_lea.vmem %s2, %s306
      $region48: #{basic_block_forward.1} parent=35 // pred_fallthru
        _
      // Predicated region
      $region49: #{basic_block_forward.1} parent=35 // pred_check
        %p308 = pneg %p113
      $region50: #{basic_block_forward.1} parent=35 // pred_check_branch
        %310 = sbr.rel (%p308) target = $region52
      $region51: #{basic_block_forward.1} parent=35 // pred_region
        %p311 = scmp.lt.s32.totalorder %s15, 1
        %s312 = scalar_select %p311, %s15, 1
        %s313 = smul.addr %s312, 18
        %s314 = smul.addr %s313, 4
        %s315 = scalar_lea.vmem %s3, %s314
      $region52: #{basic_block_forward.1} parent=35 // pred_fallthru
        _
    $region36: #{basic_block_forward.1} parent=5 // pred_fallthru
      _
    %p316 = scmp.le.s32.totalorder 1, %s15
    %p317 = scmp.lt.s32.totalorder %s15, 3
    %p318 = pnand %p316, %p317
    %p319 = pneg %p318
    // Predicated region
    $region53: #{basic_block_forward.1} parent=5 // pred_check
      _
    $region54: #{basic_block_forward.1} parent=5 // pred_check_branch
      %321 = sbr.rel (%p318) target = $region56
    $region55: #{basic_block_forward.1} parent=5 // pred_region
      %s322 = ssub.s32 %s15, 1
      %p323 = scmp.lt.s32.totalorder %s20, 1
      %s324 = scalar_select %p323, %s20, 1
      %s325 = smul.addr %s324, 18
      %s326 = smul.addr %s325, 4
      %s327 = scalar_lea.vmem %s0, %s326
      %p328 = pneg %p41
      %p329 = pneg %p38
      %p330 = scmp.lt.s32.totalorder %s20, 1
      %s331 = scalar_select %p330, %s20, 1
      %s332 = smul.addr %s331, 18
      %s333 = smul.addr %s332, 4
      %s334 = scalar_lea.vmem %s1, %s333
      %p335 = pneg %p67
      %p336 = pneg %p64
      %p337 = scmp.lt.s32.totalorder %s20, 1
      %s338 = scalar_select %p337, %s20, 1
      %s339 = smul.addr %s338, 18
      %s340 = smul.addr %s339, 4
      %s341 = scalar_lea.vmem %s2, %s340
      %p342 = pneg %p93
      %p343 = pneg %p90
      %p344 = scmp.lt.s32.totalorder %s20, 1
      %s345 = scalar_select %p344, %s20, 1
      %s346 = smul.addr %s345, 18
      %s347 = smul.addr %s346, 4
      %s348 = scalar_lea.vmem %s3, %s347
      %p349 = pneg %p119
      %p350 = pneg %p116
      %p351 = pneg %p140
      %p352 = pneg %p137
      %p353 = pneg %p161
      %p354 = pneg %p158
      %p355 = pneg %p182
      %p356 = pneg %p179
      %p357 = pneg %p203
      %p358 = pneg %p200
      %p359 = pneg %p224
      %p360 = pneg %p221
      %p361 = pneg %p250
      %p362 = pneg %p247
      %p363 = scmp.lt.s32.totalorder %s20, 1
      %s364 = scalar_select %p363, %s20, 1
      %s365 = smul.addr %s364, 8
      %s366 = smul.addr %s365, 8
      %s367 = scalar_lea.vmem %s9, %s366
      %p368 = scmp.lt.s32.totalorder %s20, 1
      %s369 = scalar_select %p368, %s20, 1
      %s370 = smul.addr %s369, 18
      %s371 = smul.addr %s370, 4
      %s372 = scalar_lea.vmem %s0, %s371
      %p373 = scmp.lt.s32.totalorder %s20, 1
      %s374 = scalar_select %p373, %s20, 1
      %s375 = smul.addr %s374, 18
      %s376 = smul.addr %s375, 4
      %s377 = scalar_lea.vmem %s1, %s376
      %p378 = scmp.lt.s32.totalorder %s20, 1
      %s379 = scalar_select %p378, %s20, 1
      %s380 = smul.addr %s379, 18
      %s381 = smul.addr %s380, 4
      %s382 = scalar_lea.vmem %s2, %s381
      %p383 = scmp.lt.s32.totalorder %s20, 1
      %s384 = scalar_select %p383, %s20, 1
      %s385 = smul.addr %s384, 18
      %s386 = smul.addr %s385, 4
      %s387 = scalar_lea.vmem %s3, %s386
      %p388 = scmp.lt.s32.totalorder %s20, 1
      %s389 = scalar_select %p388, %s20, 1
      %s390 = smul.addr %s389, 8
      %s391 = smul.addr %s390, 8
      %s392 = scalar_lea.vmem %s9, %s391
      %v394 = vld [vmem:[%s5] sm:$0x1]
      %v396 = vlaneseq
      %v397 = vshrl.u32 %v396, 7
      %v398 = vsub.s32 0, %v397
      %v399 = vrot.slane %v394, %v398
      %v401 = vld [vmem:[%s7] sm:$0x1]
      %v403 = vlaneseq
      %v404 = vshrl.u32 %v403, 7
      %v405 = vsub.s32 0, %v404
      %v406 = vrot.slane %v401, %v405
      %v408 = vld [vmem:[%s372] sm:$0xf]
      %v409 = vld [vmem:[%s372 + $0x8] sm:$0xf]
      %v410 = vld [vmem:[%s372 + $0x10] sm:$0xf]
      %v411 = vld [vmem:[%s372 + $0x18] sm:$0xf]
      %v412 = vld [vmem:[%s372 + $0x20] sm:$0xf]
      %v413 = vld [vmem:[%s372 + $0x28] sm:$0xf]
      %v414 = vld [vmem:[%s372 + $0x30] sm:$0xf]
      %v415 = vld [vmem:[%s372 + $0x38] sm:$0xf]
      %v416 = vld [vmem:[%s4] sm:$0x3]
      %v425 = vunpack.c.l.b16 %v408
      %v426 = vunpack.c.l.b16 %v409
      %v427 = vunpack.c.l.b16 %v410
      %v428 = vunpack.c.l.b16 %v411
      %v429 = vunpack.c.l.b16 %v412
      %v430 = vunpack.c.l.b16 %v413
      %v431 = vunpack.c.l.b16 %v414
      %v432 = vunpack.c.l.b16 %v415
      %v433 = vpack.c.b16 %v426, %v425
      %v434 = vpack.c.b16 %v428, %v427
      %v435 = vpack.c.b16 %v430, %v429
      %v436 = vpack.c.b16 %v432, %v431
      %vm437 = vcmask 31744
      %v439 = vsel %vm437, %v433, 0
      %v442 = vsel %vm437, %v434, 0
      %v445 = vsel %vm437, %v435, 0
      %v448 = vsel %vm437, %v436, 0
      %vm450 = vcmask 1041408
      %v452 = vsel %vm450, %v416, 0
      %454 = vmatprep.subr.bf16.mxu0 0
      %455 = vmatpush1.bf16.msra.mxu0 %v452
      %456 = vmatprep.subr.bf16.mxu0 0
      %457 = vmatpush1.bf16.msra.mxu0 0
      %458 = vmatprep.subr.bf16.mxu0 0
      %459 = vmatpush1.bf16.msra.mxu0 0
      %460 = vmatprep.subr.bf16.mxu0 0
      %461 = vmatpush1.bf16.msra.mxu0 0
      %462 = vmatprep.subr.bf16.mxu0 0
      %463 = vmatpush1.bf16.msra.mxu0 0
      %464 = vmatprep.subr.bf16.mxu0 0
      %465 = vmatpush1.bf16.msra.mxu0 0
      %466 = vmatprep.subr.bf16.mxu0 0
      %467 = vmatpush1.bf16.msra.mxu0 0
      %468 = vmatprep.subr.bf16.mxu0 0
      %469 = vmatpush1.bf16.msra.mxu0 0
      %470 = vmatprep.subr.bf16.mxu0 0
      %471 = vmatpush1.bf16.msra.mxu0 0
      %472 = vmatprep.subr.bf16.mxu0 0
      %473 = vmatpush1.bf16.msra.mxu0 0
      %474 = vmatprep.subr.bf16.mxu0 0
      %475 = vmatpush1.bf16.msra.mxu0 0
      %476 = vmatprep.subr.bf16.mxu0 0
      %477 = vmatpush1.bf16.msra.mxu0 0
      %478 = vmatprep.subr.bf16.mxu0 0
      %479 = vmatpush1.bf16.msra.mxu0 0
      %480 = vmatprep.subr.bf16.mxu0 0
      %481 = vmatpush1.bf16.msra.mxu0 0
      %482 = vmatprep.subr.bf16.mxu0 0
      %483 = vmatpush1.bf16.msra.mxu0 0
      %484 = vmatprep.subr.bf16.mxu0 0
      %485 = vmatpush1.bf16.msra.mxu0 0
      %486 = vmatprep.mubr.bf16.mxu0 0
      %487 = vmatmul.mubr.bf16.gmra.mrb[0].mxu0 %v439
      %v488 = vpop.f32.mrb[0].mxu0
      %v489 = vadd.f32 0.0, %v488
      %v490 = vpop.f32.mrb[0].mxu0
      %v491 = vpop.f32.mrb[0].mxu0
      %v492 = vadd.f32 0.0, %v491
      %v493 = vpop.f32.mrb[0].mxu0
      %494 = vmatprep.mubr.bf16.mxu0 0
      %495 = vmatmul.mubr.bf16.gmra.mrb[0].mxu0 %v442
      %v496 = vpop.f32.mrb[0].mxu0
      %v497 = vadd.f32 0.0, %v496
      %v498 = vpop.f32.mrb[0].mxu0
      %v499 = vpop.f32.mrb[0].mxu0
      %v500 = vadd.f32 0.0, %v499
      %v501 = vpop.f32.mrb[0].mxu0
      %502 = vmatprep.mubr.bf16.mxu0 0
      %503 = vmatmul.mubr.bf16.gmra.mrb[0].mxu0 %v445
      %v504 = vpop.f32.mrb[0].mxu0
      %v505 = vadd.f32 0.0, %v504
      %v506 = vpop.f32.mrb[0].mxu0
      %v507 = vpop.f32.mrb[0].mxu0
      %v508 = vadd.f32 0.0, %v507
      %v509 = vpop.f32.mrb[0].mxu0
      %510 = vmatprep.mubr.bf16.mxu0 0
      %511 = vmatmul.mubr.bf16.gmra.mrb[0].mxu0 %v448
      %v512 = vpop.f32.mrb[0].mxu0
      %v513 = vadd.f32 0.0, %v512
      %v514 = vpop.f32.mrb[0].mxu0
      %v515 = vpop.f32.mrb[0].mxu0
      %v516 = vadd.f32 0.0, %v515
      %v517 = vpop.f32.mrb[0].mxu0
      %518 = vdwg.mxu0
      %v519 = vadd.f32 %v399, %v489
      %v520 = vadd.f32 %v399, %v492
      %v521 = vadd.f32 %v399, %v497
      %v522 = vadd.f32 %v399, %v500
      %v523 = vadd.f32 %v399, %v505
      %v524 = vadd.f32 %v399, %v508
      %v525 = vadd.f32 %v399, %v513
      %v526 = vadd.f32 %v399, %v516
      %v527 = vld [vmem:[%s377] sm:$0xf]
      %v528 = vld [vmem:[%s377 + $0x8] sm:$0xf]
      %v529 = vld [vmem:[%s377 + $0x10] sm:$0xf]
      %v530 = vld [vmem:[%s377 + $0x18] sm:$0xf]
      %v531 = vld [vmem:[%s377 + $0x20] sm:$0xf]
      %v532 = vld [vmem:[%s377 + $0x28] sm:$0xf]
      %v533 = vld [vmem:[%s377 + $0x30] sm:$0xf]
      %v534 = vld [vmem:[%s377 + $0x38] sm:$0xf]
      %s535 = scalar_lea.vmem %s4, 2
      %v536 = vld [vmem:[%s535] sm:$0x3]
      %v545 = vunpack.c.l.b16 %v527
      %v546 = vunpack.c.l.b16 %v528
      %v547 = vunpack.c.l.b16 %v529
      %v548 = vunpack.c.l.b16 %v530
      %v549 = vunpack.c.l.b16 %v531
      %v550 = vunpack.c.l.b16 %v532
      %v551 = vunpack.c.l.b16 %v533
      %v552 = vunpack.c.l.b16 %v534
      %v553 = vpack.c.b16 %v546, %v545
      %v554 = vpack.c.b16 %v548, %v547
      %v555 = vpack.c.b16 %v550, %v549
      %v556 = vpack.c.b16 %v552, %v551
      %v558 = vsel %vm437, %v553, 0
      %v561 = vsel %vm437, %v554, 0
      %v564 = vsel %vm437, %v555, 0
      %v567 = vsel %vm437, %v556, 0
      %v570 = vsel %vm450, %v536, 0
      %572 = vmatprep.subr.bf16.mxu0 0
      %573 = vmatpush1.bf16.msra.mxu0 %v570
      %574 = vmatprep.subr.bf16.mxu0 0
      %575 = vmatpush1.bf16.msra.mxu0 0
      %576 = vmatprep.subr.bf16.mxu0 0
      %577 = vmatpush1.bf16.msra.mxu0 0
      %578 = vmatprep.subr.bf16.mxu0 0
      %579 = vmatpush1.bf16.msra.mxu0 0
      %580 = vmatprep.subr.bf16.mxu0 0
      %581 = vmatpush1.bf16.msra.mxu0 0
      %582 = vmatprep.subr.bf16.mxu0 0
      %583 = vmatpush1.bf16.msra.mxu0 0
      %584 = vmatprep.subr.bf16.mxu0 0
      %585 = vmatpush1.bf16.msra.mxu0 0
      %586 = vmatprep.subr.bf16.mxu0 0
      %587 = vmatpush1.bf16.msra.mxu0 0
      %588 = vmatprep.subr.bf16.mxu0 0
      %589 = vmatpush1.bf16.msra.mxu0 0
      %590 = vmatprep.subr.bf16.mxu0 0
      %591 = vmatpush1.bf16.msra.mxu0 0
      %592 = vmatprep.subr.bf16.mxu0 0
      %593 = vmatpush1.bf16.msra.mxu0 0
      %594 = vmatprep.subr.bf16.mxu0 0
      %595 = vmatpush1.bf16.msra.mxu0 0
      %596 = vmatprep.subr.bf16.mxu0 0
      %597 = vmatpush1.bf16.msra.mxu0 0
      %598 = vmatprep.subr.bf16.mxu0 0
      %599 = vmatpush1.bf16.msra.mxu0 0
      %600 = vmatprep.subr.bf16.mxu0 0
      %601 = vmatpush1.bf16.msra.mxu0 0
      %602 = vmatprep.subr.bf16.mxu0 0
      %603 = vmatpush1.bf16.msra.mxu0 0
      %604 = vmatprep.mubr.bf16.mxu0 0
      %605 = vmatmul.mubr.bf16.gmra.mrb[0].mxu0 %v558
      %v606 = vpop.f32.mrb[0].mxu0
      %v607 = vadd.f32 0.0, %v606
      %v608 = vpop.f32.mrb[0].mxu0
      %v609 = vpop.f32.mrb[0].mxu0
      %v610 = vadd.f32 0.0, %v609
      %v611 = vpop.f32.mrb[0].mxu0
      %612 = vmatprep.mubr.bf16.mxu0 0
      %613 = vmatmul.mubr.bf16.gmra.mrb[0].mxu0 %v561
      %v614 = vpop.f32.mrb[0].mxu0
      %v615 = vadd.f32 0.0, %v614
      %v616 = vpop.f32.mrb[0].mxu0
      %v617 = vpop.f32.mrb[0].mxu0
      %v618 = vadd.f32 0.0, %v617
      %v619 = vpop.f32.mrb[0].mxu0
      %620 = vmatprep.mubr.bf16.mxu0 0
      %621 = vmatmul.mubr.bf16.gmra.mrb[0].mxu0 %v564
      %v622 = vpop.f32.mrb[0].mxu0
      %v623 = vadd.f32 0.0, %v622
      %v624 = vpop.f32.mrb[0].mxu0
      %v625 = vpop.f32.mrb[0].mxu0
      %v626 = vadd.f32 0.0, %v625
      %v627 = vpop.f32.mrb[0].mxu0
      %628 = vmatprep.mubr.bf16.mxu0 0
      %629 = vmatmul.mubr.bf16.gmra.mrb[0].mxu0 %v567
      %v630 = vpop.f32.mrb[0].mxu0
      %v631 = vadd.f32 0.0, %v630
      %v632 = vpop.f32.mrb[0].mxu0
      %v633 = vpop.f32.mrb[0].mxu0
      %v634 = vadd.f32 0.0, %v633
      %v635 = vpop.f32.mrb[0].mxu0
      %636 = vdwg.mxu0
      %v637 = vadd.f32 %v519, %v607
      %v638 = vadd.f32 %v520, %v610
      %v639 = vadd.f32 %v521, %v615
      %v640 = vadd.f32 %v522, %v618
      %v641 = vadd.f32 %v523, %v623
      %v642 = vadd.f32 %v524, %v626
      %v643 = vadd.f32 %v525, %v631
      %v644 = vadd.f32 %v526, %v634
      %v645 = vld [vmem:[%s372] sm:$0xf]
      %v646 = vld [vmem:[%s372 + $0x4] sm:$0x1]
      %v647 = vld [vmem:[%s372 + $0x8] sm:$0xf]
      %v648 = vld [vmem:[%s372 + $0xc] sm:$0x1]
      %v649 = vld [vmem:[%s372 + $0x10] sm:$0xf]
      %v650 = vld [vmem:[%s372 + $0x14] sm:$0x1]
      %v651 = vld [vmem:[%s372 + $0x18] sm:$0xf]
      %v652 = vld [vmem:[%s372 + $0x1c] sm:$0x1]
      %v653 = vld [vmem:[%s372 + $0x20] sm:$0xf]
      %v654 = vld [vmem:[%s372 + $0x24] sm:$0x1]
      %v655 = vld [vmem:[%s372 + $0x28] sm:$0xf]
      %v656 = vld [vmem:[%s372 + $0x2c] sm:$0x1]
      %v657 = vld [vmem:[%s372 + $0x30] sm:$0xf]
      %v658 = vld [vmem:[%s372 + $0x34] sm:$0x1]
      %v659 = vld [vmem:[%s372 + $0x38] sm:$0xf]
      %v660 = vld [vmem:[%s372 + $0x3c] sm:$0x1]
      %vm661 = vsmask.f32 3328
      %vm662 = vsmask.f32 7440
      %vm663 = vmor %vm661, %vm662
      %v665 = vshrl.u32 %v645, 16
      %v667 = vrot.slane %v665, 4
      %v668 = vshll.u32 %v645, 16
      %v670 = vrot.slane %v668, 5
      %v671 = vor.u32 %v667, %v670
      %v672 = vrot.slane %v671, 4
      %v674 = vshll.u32 %v646, 16
      %v676 = vrot.slane %v674, 5
      %v677 = vsel %vm663, %v672, %v676
      %v679 = vshrl.u32 %v647, 16
      %v681 = vrot.slane %v679, 4
      %v682 = vshll.u32 %v647, 16
      %v684 = vrot.slane %v682, 5
      %v685 = vor.u32 %v681, %v684
      %v686 = vrot.slane %v685, 4
      %v688 = vshll.u32 %v648, 16
      %v690 = vrot.slane %v688, 5
      %v691 = vsel %vm663, %v686, %v690
      %v693 = vshrl.u32 %v649, 16
      %v695 = vrot.slane %v693, 4
      %v696 = vshll.u32 %v649, 16
      %v698 = vrot.slane %v696, 5
      %v699 = vor.u32 %v695, %v698
      %v700 = vrot.slane %v699, 4
      %v702 = vshll.u32 %v650, 16
      %v704 = vrot.slane %v702, 5
      %v705 = vsel %vm663, %v700, %v704
      %v707 = vshrl.u32 %v651, 16
      %v709 = vrot.slane %v707, 4
      %v710 = vshll.u32 %v651, 16
      %v712 = vrot.slane %v710, 5
      %v713 = vor.u32 %v709, %v712
      %v714 = vrot.slane %v713, 4
      %v716 = vshll.u32 %v652, 16
      %v718 = vrot.slane %v716, 5
      %v719 = vsel %vm663, %v714, %v718
      %v721 = vshrl.u32 %v653, 16
      %v723 = vrot.slane %v721, 4
      %v724 = vshll.u32 %v653, 16
      %v726 = vrot.slane %v724, 5
      %v727 = vor.u32 %v723, %v726
      %v728 = vrot.slane %v727, 4
      %v730 = vshll.u32 %v654, 16
      %v732 = vrot.slane %v730, 5
      %v733 = vsel %vm663, %v728, %v732
      %v735 = vshrl.u32 %v655, 16
      %v737 = vrot.slane %v735, 4
      %v738 = vshll.u32 %v655, 16
      %v740 = vrot.slane %v738, 5
      %v741 = vor.u32 %v737, %v740
      %v742 = vrot.slane %v741, 4
      %v744 = vshll.u32 %v656, 16
      %v746 = vrot.slane %v744, 5
      %v747 = vsel %vm663, %v742, %v746
      %v749 = vshrl.u32 %v657, 16
      %v751 = vrot.slane %v749, 4
      %v752 = vshll.u32 %v657, 16
      %v754 = vrot.slane %v752, 5
      %v755 = vor.u32 %v751, %v754
      %v756 = vrot.slane %v755, 4
      %v758 = vshll.u32 %v658, 16
      %v760 = vrot.slane %v758, 5
      %v761 = vsel %vm663, %v756, %v760
      %v763 = vshrl.u32 %v659, 16
      %v765 = vrot.slane %v763, 4
      %v766 = vshll.u32 %v659, 16
      %v768 = vrot.slane %v766, 5
      %v769 = vor.u32 %v765, %v768
      %v770 = vrot.slane %v769, 4
      %v772 = vshll.u32 %v660, 16
      %v774 = vrot.slane %v772, 5
      %v775 = vsel %vm663, %v770, %v774
      %s776 = scalar_lea.vmem %s4, 4
      %v777 = vld [vmem:[%s776] sm:$0x3]
      %v778 = vunpack.c.l.b16 %v677
      %v779 = vunpack.c.l.b16 %v691
      %v780 = vunpack.c.l.b16 %v705
      %v781 = vunpack.c.l.b16 %v719
      %v782 = vunpack.c.l.b16 %v733
      %v783 = vunpack.c.l.b16 %v747
      %v784 = vunpack.c.l.b16 %v761
      %v785 = vunpack.c.l.b16 %v775
      %v786 = vpack.c.b16 %v779, %v778
      %v787 = vpack.c.b16 %v781, %v780
      %v788 = vpack.c.b16 %v783, %v782
      %v789 = vpack.c.b16 %v785, %v784
      %v791 = vsel %vm437, %v786, 0
      %v794 = vsel %vm437, %v787, 0
      %v797 = vsel %vm437, %v788, 0
      %v800 = vsel %vm437, %v789, 0
      %v803 = vsel %vm450, %v777, 0
      %805 = vmatprep.subr.bf16.mxu0 0
      %806 = vmatpush1.bf16.msra.mxu0 %v803
      %807 = vmatprep.subr.bf16.mxu0 0
      %808 = vmatpush1.bf16.msra.mxu0 0
      %809 = vmatprep.subr.bf16.mxu0 0
      %810 = vmatpush1.bf16.msra.mxu0 0
      %811 = vmatprep.subr.bf16.mxu0 0
      %812 = vmatpush1.bf16.msra.mxu0 0
      %813 = vmatprep.subr.bf16.mxu0 0
      %814 = vmatpush1.bf16.msra.mxu0 0
      %815 = vmatprep.subr.bf16.mxu0 0
      %816 = vmatpush1.bf16.msra.mxu0 0
      %817 = vmatprep.subr.bf16.mxu0 0
      %818 = vmatpush1.bf16.msra.mxu0 0
      %819 = vmatprep.subr.bf16.mxu0 0
      %820 = vmatpush1.bf16.msra.mxu0 0
      %821 = vmatprep.subr.bf16.mxu0 0
      %822 = vmatpush1.bf16.msra.mxu0 0
      %823 = vmatprep.subr.bf16.mxu0 0
      %824 = vmatpush1.bf16.msra.mxu0 0
      %825 = vmatprep.subr.bf16.mxu0 0
      %826 = vmatpush1.bf16.msra.mxu0 0
      %827 = vmatprep.subr.bf16.mxu0 0
      %828 = vmatpush1.bf16.msra.mxu0 0
      %829 = vmatprep.subr.bf16.mxu0 0
      %830 = vmatpush1.bf16.msra.mxu0 0
      %831 = vmatprep.subr.bf16.mxu0 0
      %832 = vmatpush1.bf16.msra.mxu0 0
      %833 = vmatprep.subr.bf16.mxu0 0
      %834 = vmatpush1.bf16.msra.mxu0 0
      %835 = vmatprep.subr.bf16.mxu0 0
      %836 = vmatpush1.bf16.msra.mxu0 0
      %837 = vmatprep.mubr.bf16.mxu0 0
      %838 = vmatmul.mubr.bf16.gmra.mrb[0].mxu0 %v791
      %v839 = vpop.f32.mrb[0].mxu0
      %v840 = vadd.f32 0.0, %v839
      %v841 = vpop.f32.mrb[0].mxu0
      %v842 = vpop.f32.mrb[0].mxu0
      %v843 = vadd.f32 0.0, %v842
      %v844 = vpop.f32.mrb[0].mxu0
      %845 = vmatprep.mubr.bf16.mxu0 0
      %846 = vmatmul.mubr.bf16.gmra.mrb[0].mxu0 %v794
      %v847 = vpop.f32.mrb[0].mxu0
      %v848 = vadd.f32 0.0, %v847
      %v849 = vpop.f32.mrb[0].mxu0
      %v850 = vpop.f32.mrb[0].mxu0
      %v851 = vadd.f32 0.0, %v850
      %v852 = vpop.f32.mrb[0].mxu0
      %853 = vmatprep.mubr.bf16.mxu0 0
      %854 = vmatmul.mubr.bf16.gmra.mrb[0].mxu0 %v797
      %v855 = vpop.f32.mrb[0].mxu0
      %v856 = vadd.f32 0.0, %v855
      %v857 = vpop.f32.mrb[0].mxu0
      %v858 = vpop.f32.mrb[0].mxu0
      %v859 = vadd.f32 0.0, %v858
      %v860 = vpop.f32.mrb[0].mxu0
      %861 = vmatprep.mubr.bf16.mxu0 0
      %862 = vmatmul.mubr.bf16.gmra.mrb[0].mxu0 %v800
      %v863 = vpop.f32.mrb[0].mxu0
      %v864 = vadd.f32 0.0, %v863
      %v865 = vpop.f32.mrb[0].mxu0
      %v866 = vpop.f32.mrb[0].mxu0
      %v867 = vadd.f32 0.0, %v866
      %v868 = vpop.f32.mrb[0].mxu0
      %869 = vdwg.mxu0
      %v870 = vadd.f32 %v637, %v840
      %v871 = vadd.f32 %v638, %v843
      %v872 = vadd.f32 %v639, %v848
      %v873 = vadd.f32 %v640, %v851
      %v874 = vadd.f32 %v641, %v856
      %v875 = vadd.f32 %v642, %v859
      %v876 = vadd.f32 %v643, %v864
      %v877 = vadd.f32 %v644, %v867
      %v878 = vld [vmem:[%s382] sm:$0xf]
      %v879 = vld [vmem:[%s382 + $0x8] sm:$0xf]
      %v880 = vld [vmem:[%s382 + $0x10] sm:$0xf]
      %v881 = vld [vmem:[%s382 + $0x18] sm:$0xf]
      %v882 = vld [vmem:[%s382 + $0x20] sm:$0xf]
      %v883 = vld [vmem:[%s382 + $0x28] sm:$0xf]
      %v884 = vld [vmem:[%s382 + $0x30] sm:$0xf]
      %v885 = vld [vmem:[%s382 + $0x38] sm:$0xf]
      %s886 = scalar_lea.vmem %s4, 6
      %v887 = vld [vmem:[%s886] sm:$0x3]
      %v896 = vunpack.c.l.b16 %v878
      %v897 = vunpack.c.l.b16 %v879
      %v898 = vunpack.c.l.b16 %v880
      %v899 = vunpack.c.l.b16 %v881
      %v900 = vunpack.c.l.b16 %v882
      %v901 = vunpack.c.l.b16 %v883
      %v902 = vunpack.c.l.b16 %v884
      %v903 = vunpack.c.l.b16 %v885
      %v904 = vpack.c.b16 %v897, %v896
      %v905 = vpack.c.b16 %v899, %v898
      %v906 = vpack.c.b16 %v901, %v900
      %v907 = vpack.c.b16 %v903, %v902
      %v909 = vsel %vm437, %v904, 0
      %v912 = vsel %vm437, %v905, 0
      %v915 = vsel %vm437, %v906, 0
      %v918 = vsel %vm437, %v907, 0
      %v921 = vsel %vm450, %v887, 0
      %923 = vmatprep.subr.bf16.mxu0 0
      %924 = vmatpush1.bf16.msra.mxu0 %v921
      %925 = vmatprep.subr.bf16.mxu0 0
      %926 = vmatpush1.bf16.msra.mxu0 0
      %927 = vmatprep.subr.bf16.mxu0 0
      %928 = vmatpush1.bf16.msra.mxu0 0
      %929 = vmatprep.subr.bf16.mxu0 0
      %930 = vmatpush1.bf16.msra.mxu0 0
      %931 = vmatprep.subr.bf16.mxu0 0
      %932 = vmatpush1.bf16.msra.mxu0 0
      %933 = vmatprep.subr.bf16.mxu0 0
      %934 = vmatpush1.bf16.msra.mxu0 0
      %935 = vmatprep.subr.bf16.mxu0 0
      %936 = vmatpush1.bf16.msra.mxu0 0
      %937 = vmatprep.subr.bf16.mxu0 0
      %938 = vmatpush1.bf16.msra.mxu0 0
      %939 = vmatprep.subr.bf16.mxu0 0
      %940 = vmatpush1.bf16.msra.mxu0 0
      %941 = vmatprep.subr.bf16.mxu0 0
      %942 = vmatpush1.bf16.msra.mxu0 0
      %943 = vmatprep.subr.bf16.mxu0 0
      %944 = vmatpush1.bf16.msra.mxu0 0
      %945 = vmatprep.subr.bf16.mxu0 0
      %946 = vmatpush1.bf16.msra.mxu0 0
      %947 = vmatprep.subr.bf16.mxu0 0
      %948 = vmatpush1.bf16.msra.mxu0 0
      %949 = vmatprep.subr.bf16.mxu0 0
      %950 = vmatpush1.bf16.msra.mxu0 0
      %951 = vmatprep.subr.bf16.mxu0 0
      %952 = vmatpush1.bf16.msra.mxu0 0
      %953 = vmatprep.subr.bf16.mxu0 0
      %954 = vmatpush1.bf16.msra.mxu0 0
      %955 = vmatprep.mubr.bf16.mxu0 0
      %956 = vmatmul.mubr.bf16.gmra.mrb[0].mxu0 %v909
      %v957 = vpop.f32.mrb[0].mxu0
      %v958 = vadd.f32 0.0, %v957
      %v959 = vpop.f32.mrb[0].mxu0
      %v960 = vpop.f32.mrb[0].mxu0
      %v961 = vadd.f32 0.0, %v960
      %v962 = vpop.f32.mrb[0].mxu0
      %963 = vmatprep.mubr.bf16.mxu0 0
      %964 = vmatmul.mubr.bf16.gmra.mrb[0].mxu0 %v912
      %v965 = vpop.f32.mrb[0].mxu0
      %v966 = vadd.f32 0.0, %v965
      %v967 = vpop.f32.mrb[0].mxu0
      %v968 = vpop.f32.mrb[0].mxu0
      %v969 = vadd.f32 0.0, %v968
      %v970 = vpop.f32.mrb[0].mxu0
      %971 = vmatprep.mubr.bf16.mxu0 0
      %972 = vmatmul.mubr.bf16.gmra.mrb[0].mxu0 %v915
      %v973 = vpop.f32.mrb[0].mxu0
      %v974 = vadd.f32 0.0, %v973
      %v975 = vpop.f32.mrb[0].mxu0
      %v976 = vpop.f32.mrb[0].mxu0
      %v977 = vadd.f32 0.0, %v976
      %v978 = vpop.f32.mrb[0].mxu0
      %979 = vmatprep.mubr.bf16.mxu0 0
      %980 = vmatmul.mubr.bf16.gmra.mrb[0].mxu0 %v918
      %v981 = vpop.f32.mrb[0].mxu0
      %v982 = vadd.f32 0.0, %v981
      %v983 = vpop.f32.mrb[0].mxu0
      %v984 = vpop.f32.mrb[0].mxu0
      %v985 = vadd.f32 0.0, %v984
      %v986 = vpop.f32.mrb[0].mxu0
      %987 = vdwg.mxu0
      %v988 = vadd.f32 %v870, %v958
      %v989 = vadd.f32 %v871, %v961
      %v990 = vadd.f32 %v872, %v966
      %v991 = vadd.f32 %v873, %v969
      %v992 = vadd.f32 %v874, %v974
      %v993 = vadd.f32 %v875, %v977
      %v994 = vadd.f32 %v876, %v982
      %v995 = vadd.f32 %v877, %v985
      %v996 = vld [vmem:[%s387] sm:$0xf]
      %v997 = vld [vmem:[%s387 + $0x8] sm:$0xf]
      %v998 = vld [vmem:[%s387 + $0x10] sm:$0xf]
      %v999 = vld [vmem:[%s387 + $0x18] sm:$0xf]
      %v1000 = vld [vmem:[%s387 + $0x20] sm:$0xf]
      %v1001 = vld [vmem:[%s387 + $0x28] sm:$0xf]
      %v1002 = vld [vmem:[%s387 + $0x30] sm:$0xf]
      %v1003 = vld [vmem:[%s387 + $0x38] sm:$0xf]
      %s1004 = scalar_lea.vmem %s4, 8
      %v1005 = vld [vmem:[%s1004] sm:$0x3]
      %v1014 = vunpack.c.l.b16 %v996
      %v1015 = vunpack.c.l.b16 %v997
      %v1016 = vunpack.c.l.b16 %v998
      %v1017 = vunpack.c.l.b16 %v999
      %v1018 = vunpack.c.l.b16 %v1000
      %v1019 = vunpack.c.l.b16 %v1001
      %v1020 = vunpack.c.l.b16 %v1002
      %v1021 = vunpack.c.l.b16 %v1003
      %v1022 = vpack.c.b16 %v1015, %v1014
      %v1023 = vpack.c.b16 %v1017, %v1016
      %v1024 = vpack.c.b16 %v1019, %v1018
      %v1025 = vpack.c.b16 %v1021, %v1020
      %v1027 = vsel %vm437, %v1022, 0
      %v1030 = vsel %vm437, %v1023, 0
      %v1033 = vsel %vm437, %v1024, 0
      %v1036 = vsel %vm437, %v1025, 0
      %v1039 = vsel %vm450, %v1005, 0
      %1041 = vmatprep.subr.bf16.mxu0 0
      %1042 = vmatpush1.bf16.msra.mxu0 %v1039
      %1043 = vmatprep.subr.bf16.mxu0 0
      %1044 = vmatpush1.bf16.msra.mxu0 0
      %1045 = vmatprep.subr.bf16.mxu0 0
      %1046 = vmatpush1.bf16.msra.mxu0 0
      %1047 = vmatprep.subr.bf16.mxu0 0
      %1048 = vmatpush1.bf16.msra.mxu0 0
      %1049 = vmatprep.subr.bf16.mxu0 0
      %1050 = vmatpush1.bf16.msra.mxu0 0
      %1051 = vmatprep.subr.bf16.mxu0 0
      %1052 = vmatpush1.bf16.msra.mxu0 0
      %1053 = vmatprep.subr.bf16.mxu0 0
      %1054 = vmatpush1.bf16.msra.mxu0 0
      %1055 = vmatprep.subr.bf16.mxu0 0
      %1056 = vmatpush1.bf16.msra.mxu0 0
      %1057 = vmatprep.subr.bf16.mxu0 0
      %1058 = vmatpush1.bf16.msra.mxu0 0
      %1059 = vmatprep.subr.bf16.mxu0 0
      %1060 = vmatpush1.bf16.msra.mxu0 0
      %1061 = vmatprep.subr.bf16.mxu0 0
      %1062 = vmatpush1.bf16.msra.mxu0 0
      %1063 = vmatprep.subr.bf16.mxu0 0
      %1064 = vmatpush1.bf16.msra.mxu0 0
      %1065 = vmatprep.subr.bf16.mxu0 0
      %1066 = vmatpush1.bf16.msra.mxu0 0
      %1067 = vmatprep.subr.bf16.mxu0 0
      %1068 = vmatpush1.bf16.msra.mxu0 0
      %1069 = vmatprep.subr.bf16.mxu0 0
      %1070 = vmatpush1.bf16.msra.mxu0 0
      %1071 = vmatprep.subr.bf16.mxu0 0
      %1072 = vmatpush1.bf16.msra.mxu0 0
      %1073 = vmatprep.mubr.bf16.mxu0 0
      %1074 = vmatmul.mubr.bf16.gmra.mrb[0].mxu0 %v1027
      %v1075 = vpop.f32.mrb[0].mxu0
      %v1076 = vadd.f32 0.0, %v1075
      %v1077 = vpop.f32.mrb[0].mxu0
      %v1078 = vpop.f32.mrb[0].mxu0
      %v1079 = vadd.f32 0.0, %v1078
      %v1080 = vpop.f32.mrb[0].mxu0
      %1081 = vmatprep.mubr.bf16.mxu0 0
      %1082 = vmatmul.mubr.bf16.gmra.mrb[0].mxu0 %v1030
      %v1083 = vpop.f32.mrb[0].mxu0
      %v1084 = vadd.f32 0.0, %v1083
      %v1085 = vpop.f32.mrb[0].mxu0
      %v1086 = vpop.f32.mrb[0].mxu0
      %v1087 = vadd.f32 0.0, %v1086
      %v1088 = vpop.f32.mrb[0].mxu0
      %1089 = vmatprep.mubr.bf16.mxu0 0
      %1090 = vmatmul.mubr.bf16.gmra.mrb[0].mxu0 %v1033
      %v1091 = vpop.f32.mrb[0].mxu0
      %v1092 = vadd.f32 0.0, %v1091
      %v1093 = vpop.f32.mrb[0].mxu0
      %v1094 = vpop.f32.mrb[0].mxu0
      %v1095 = vadd.f32 0.0, %v1094
      %v1096 = vpop.f32.mrb[0].mxu0
      %1097 = vmatprep.mubr.bf16.mxu0 0
      %1098 = vmatmul.mubr.bf16.gmra.mrb[0].mxu0 %v1036
      %v1099 = vpop.f32.mrb[0].mxu0
      %v1100 = vadd.f32 0.0, %v1099
      %v1101 = vpop.f32.mrb[0].mxu0
      %v1102 = vpop.f32.mrb[0].mxu0
      %v1103 = vadd.f32 0.0, %v1102
      %v1104 = vpop.f32.mrb[0].mxu0
      %1105 = vdwg.mxu0
      %v1106 = vadd.f32 %v988, %v1076
      %v1107 = vadd.f32 %v989, %v1079
      %v1108 = vadd.f32 %v990, %v1084
      %v1109 = vadd.f32 %v991, %v1087
      %v1110 = vadd.f32 %v992, %v1092
      %v1111 = vadd.f32 %v993, %v1095
      %v1112 = vadd.f32 %v994, %v1100
      %v1113 = vadd.f32 %v995, %v1103
      %v1114 = vld [vmem:[%s8] sm:$0x3]
      %v1116 = vsel %vm450, %v1114, 0
      %1118 = vmatprep.subr.bf16.mxu0 0
      %1119 = vmatpush1.bf16.msra.mxu0 %v1116
      %1120 = vmatprep.subr.bf16.mxu0 0
      %1121 = vmatpush1.bf16.msra.mxu0 0
      %1122 = vmatprep.subr.bf16.mxu0 0
      %1123 = vmatpush1.bf16.msra.mxu0 0
      %1124 = vmatprep.subr.bf16.mxu0 0
      %1125 = vmatpush1.bf16.msra.mxu0 0
      %1126 = vmatprep.subr.bf16.mxu0 0
      %1127 = vmatpush1.bf16.msra.mxu0 0
      %1128 = vmatprep.subr.bf16.mxu0 0
      %1129 = vmatpush1.bf16.msra.mxu0 0
      %1130 = vmatprep.subr.bf16.mxu0 0
      %1131 = vmatpush1.bf16.msra.mxu0 0
      %1132 = vmatprep.subr.bf16.mxu0 0
      %1133 = vmatpush1.bf16.msra.mxu0 0
      %1134 = vmatprep.subr.bf16.mxu0 0
      %1135 = vmatpush1.bf16.msra.mxu0 0
      %1136 = vmatprep.subr.bf16.mxu0 0
      %1137 = vmatpush1.bf16.msra.mxu0 0
      %1138 = vmatprep.subr.bf16.mxu0 0
      %1139 = vmatpush1.bf16.msra.mxu0 0
      %1140 = vmatprep.subr.bf16.mxu0 0
      %1141 = vmatpush1.bf16.msra.mxu0 0
      %1142 = vmatprep.subr.bf16.mxu0 0
      %1143 = vmatpush1.bf16.msra.mxu0 0
      %1144 = vmatprep.subr.bf16.mxu0 0
      %1145 = vmatpush1.bf16.msra.mxu0 0
      %1146 = vmatprep.subr.bf16.mxu0 0
      %1147 = vmatpush1.bf16.msra.mxu0 0
      %1148 = vmatprep.subr.bf16.mxu0 0
      %1149 = vmatpush1.bf16.msra.mxu0 0
      %1150 = vmatprep.mubr.bf16.mxu0 0
      %1151 = vmatmul.mubr.bf16.gmra.mrb[0].mxu0 %v1027
      %v1152 = vpop.f32.mrb[0].mxu0
      %v1153 = vadd.f32 0.0, %v1152
      %v1154 = vpop.f32.mrb[0].mxu0
      %v1155 = vpop.f32.mrb[0].mxu0
      %v1156 = vadd.f32 0.0, %v1155
      %v1157 = vpop.f32.mrb[0].mxu0
      %1158 = vmatprep.mubr.bf16.mxu0 0
      %1159 = vmatmul.mubr.bf16.gmra.mrb[0].mxu0 %v1030
      %v1160 = vpop.f32.mrb[0].mxu0
      %v1161 = vadd.f32 0.0, %v1160
      %v1162 = vpop.f32.mrb[0].mxu0
      %v1163 = vpop.f32.mrb[0].mxu0
      %v1164 = vadd.f32 0.0, %v1163
      %v1165 = vpop.f32.mrb[0].mxu0
      %1166 = vmatprep.mubr.bf16.mxu0 0
      %1167 = vmatmul.mubr.bf16.gmra.mrb[0].mxu0 %v1033
      %v1168 = vpop.f32.mrb[0].mxu0
      %v1169 = vadd.f32 0.0, %v1168
      %v1170 = vpop.f32.mrb[0].mxu0
      %v1171 = vpop.f32.mrb[0].mxu0
      %v1172 = vadd.f32 0.0, %v1171
      %v1173 = vpop.f32.mrb[0].mxu0
      %1174 = vmatprep.mubr.bf16.mxu0 0
      %1175 = vmatmul.mubr.bf16.gmra.mrb[0].mxu0 %v1036
      %v1176 = vpop.f32.mrb[0].mxu0
      %v1177 = vadd.f32 0.0, %v1176
      %v1178 = vpop.f32.mrb[0].mxu0
      %v1179 = vpop.f32.mrb[0].mxu0
      %v1180 = vadd.f32 0.0, %v1179
      %v1181 = vpop.f32.mrb[0].mxu0
      %1182 = vdwg.mxu0
      %v1183 = vadd.f32 %v406, %v1153
      %v1184 = vadd.f32 %v406, %v1156
      %v1185 = vadd.f32 %v406, %v1161
      %v1186 = vadd.f32 %v406, %v1164
      %v1187 = vadd.f32 %v406, %v1169
      %v1188 = vadd.f32 %v406, %v1172
      %v1189 = vadd.f32 %v406, %v1177
      %v1190 = vadd.f32 %v406, %v1180
      %v1191 = vld [vmem:[%s382] sm:$0xf]
      %v1192 = vld [vmem:[%s382 + $0x4] sm:$0x1]
      %v1193 = vld [vmem:[%s382 + $0x8] sm:$0xf]
      %v1194 = vld [vmem:[%s382 + $0xc] sm:$0x1]
      %v1195 = vld [vmem:[%s382 + $0x10] sm:$0xf]
      %v1196 = vld [vmem:[%s382 + $0x14] sm:$0x1]
      %v1197 = vld [vmem:[%s382 + $0x18] sm:$0xf]
      %v1198 = vld [vmem:[%s382 + $0x1c] sm:$0x1]
      %v1199 = vld [vmem:[%s382 + $0x20] sm:$0xf]
      %v1200 = vld [vmem:[%s382 + $0x24] sm:$0x1]
      %v1201 = vld [vmem:[%s382 + $0x28] sm:$0xf]
      %v1202 = vld [vmem:[%s382 + $0x2c] sm:$0x1]
      %v1203 = vld [vmem:[%s382 + $0x30] sm:$0xf]
      %v1204 = vld [vmem:[%s382 + $0x34] sm:$0x1]
      %v1205 = vld [vmem:[%s382 + $0x38] sm:$0xf]
      %v1206 = vld [vmem:[%s382 + $0x3c] sm:$0x1]
      %v1208 = vshrl.u32 %v1191, 16
      %v1210 = vrot.slane %v1208, 4
      %v1211 = vshll.u32 %v1191, 16
      %v1213 = vrot.slane %v1211, 5
      %v1214 = vor.u32 %v1210, %v1213
      %v1215 = vrot.slane %v1214, 4
      %v1217 = vshll.u32 %v1192, 16
      %v1219 = vrot.slane %v1217, 5
      %v1220 = vsel %vm663, %v1215, %v1219
      %v1222 = vshrl.u32 %v1193, 16
      %v1224 = vrot.slane %v1222, 4
      %v1225 = vshll.u32 %v1193, 16
      %v1227 = vrot.slane %v1225, 5
      %v1228 = vor.u32 %v1224, %v1227
      %v1229 = vrot.slane %v1228, 4
      %v1231 = vshll.u32 %v1194, 16
      %v1233 = vrot.slane %v1231, 5
      %v1234 = vsel %vm663, %v1229, %v1233
      %v1236 = vshrl.u32 %v1195, 16
      %v1238 = vrot.slane %v1236, 4
      %v1239 = vshll.u32 %v1195, 16
      %v1241 = vrot.slane %v1239, 5
      %v1242 = vor.u32 %v1238, %v1241
      %v1243 = vrot.slane %v1242, 4
      %v1245 = vshll.u32 %v1196, 16
      %v1247 = vrot.slane %v1245, 5
      %v1248 = vsel %vm663, %v1243, %v1247
      %v1250 = vshrl.u32 %v1197, 16
      %v1252 = vrot.slane %v1250, 4
      %v1253 = vshll.u32 %v1197, 16
      %v1255 = vrot.slane %v1253, 5
      %v1256 = vor.u32 %v1252, %v1255
      %v1257 = vrot.slane %v1256, 4
      %v1259 = vshll.u32 %v1198, 16
      %v1261 = vrot.slane %v1259, 5
      %v1262 = vsel %vm663, %v1257, %v1261
      %v1264 = vshrl.u32 %v1199, 16
      %v1266 = vrot.slane %v1264, 4
      %v1267 = vshll.u32 %v1199, 16
      %v1269 = vrot.slane %v1267, 5
      %v1270 = vor.u32 %v1266, %v1269
      %v1271 = vrot.slane %v1270, 4
      %v1273 = vshll.u32 %v1200, 16
      %v1275 = vrot.slane %v1273, 5
      %v1276 = vsel %vm663, %v1271, %v1275
      %v1278 = vshrl.u32 %v1201, 16
      %v1280 = vrot.slane %v1278, 4
      %v1281 = vshll.u32 %v1201, 16
      %v1283 = vrot.slane %v1281, 5
      %v1284 = vor.u32 %v1280, %v1283
      %v1285 = vrot.slane %v1284, 4
      %v1287 = vshll.u32 %v1202, 16
      %v1289 = vrot.slane %v1287, 5
      %v1290 = vsel %vm663, %v1285, %v1289
      %v1292 = vshrl.u32 %v1203, 16
      %v1294 = vrot.slane %v1292, 4
      %v1295 = vshll.u32 %v1203, 16
      %v1297 = vrot.slane %v1295, 5
      %v1298 = vor.u32 %v1294, %v1297
      %v1299 = vrot.slane %v1298, 4
      %v1301 = vshll.u32 %v1204, 16
      %v1303 = vrot.slane %v1301, 5
      %v1304 = vsel %vm663, %v1299, %v1303
      %v1306 = vshrl.u32 %v1205, 16
      %v1308 = vrot.slane %v1306, 4
      %v1309 = vshll.u32 %v1205, 16
      %v1311 = vrot.slane %v1309, 5
      %v1312 = vor.u32 %v1308, %v1311
      %v1313 = vrot.slane %v1312, 4
      %v1315 = vshll.u32 %v1206, 16
      %v1317 = vrot.slane %v1315, 5
      %v1318 = vsel %vm663, %v1313, %v1317
      %s1319 = scalar_lea.vmem %s4, 10
      %v1320 = vld [vmem:[%s1319] sm:$0x3]
      %v1321 = vunpack.c.l.b16 %v1220
      %v1322 = vunpack.c.l.b16 %v1234
      %v1323 = vunpack.c.l.b16 %v1248
      %v1324 = vunpack.c.l.b16 %v1262
      %v1325 = vunpack.c.l.b16 %v1276
      %v1326 = vunpack.c.l.b16 %v1290
      %v1327 = vunpack.c.l.b16 %v1304
      %v1328 = vunpack.c.l.b16 %v1318
      %v1329 = vpack.c.b16 %v1322, %v1321
      %v1330 = vpack.c.b16 %v1324, %v1323
      %v1331 = vpack.c.b16 %v1326, %v1325
      %v1332 = vpack.c.b16 %v1328, %v1327
      %v1334 = vsel %vm437, %v1329, 0
      %v1337 = vsel %vm437, %v1330, 0
      %v1340 = vsel %vm437, %v1331, 0
      %v1343 = vsel %vm437, %v1332, 0
      %v1346 = vsel %vm450, %v1320, 0
      %1348 = vmatprep.subr.bf16.mxu0 0
      %1349 = vmatpush1.bf16.msra.mxu0 %v1346
      %1350 = vmatprep.subr.bf16.mxu0 0
      %1351 = vmatpush1.bf16.msra.mxu0 0
      %1352 = vmatprep.subr.bf16.mxu0 0
      %1353 = vmatpush1.bf16.msra.mxu0 0
      %1354 = vmatprep.subr.bf16.mxu0 0
      %1355 = vmatpush1.bf16.msra.mxu0 0
      %1356 = vmatprep.subr.bf16.mxu0 0
      %1357 = vmatpush1.bf16.msra.mxu0 0
      %1358 = vmatprep.subr.bf16.mxu0 0
      %1359 = vmatpush1.bf16.msra.mxu0 0
      %1360 = vmatprep.subr.bf16.mxu0 0
      %1361 = vmatpush1.bf16.msra.mxu0 0
      %1362 = vmatprep.subr.bf16.mxu0 0
      %1363 = vmatpush1.bf16.msra.mxu0 0
      %1364 = vmatprep.subr.bf16.mxu0 0
      %1365 = vmatpush1.bf16.msra.mxu0 0
      %1366 = vmatprep.subr.bf16.mxu0 0
      %1367 = vmatpush1.bf16.msra.mxu0 0
      %1368 = vmatprep.subr.bf16.mxu0 0
      %1369 = vmatpush1.bf16.msra.mxu0 0
      %1370 = vmatprep.subr.bf16.mxu0 0
      %1371 = vmatpush1.bf16.msra.mxu0 0
      %1372 = vmatprep.subr.bf16.mxu0 0
      %1373 = vmatpush1.bf16.msra.mxu0 0
      %1374 = vmatprep.subr.bf16.mxu0 0
      %1375 = vmatpush1.bf16.msra.mxu0 0
      %1376 = vmatprep.subr.bf16.mxu0 0
      %1377 = vmatpush1.bf16.msra.mxu0 0
      %1378 = vmatprep.subr.bf16.mxu0 0
      %1379 = vmatpush1.bf16.msra.mxu0 0
      %1380 = vmatprep.mubr.bf16.mxu0 0
      %1381 = vmatmul.mubr.bf16.gmra.mrb[0].mxu0 %v1334
      %v1382 = vpop.f32.mrb[0].mxu0
      %v1383 = vadd.f32 0.0, %v1382
      %v1384 = vpop.f32.mrb[0].mxu0
      %v1385 = vpop.f32.mrb[0].mxu0
      %v1386 = vadd.f32 0.0, %v1385
      %v1387 = vpop.f32.mrb[0].mxu0
      %1388 = vmatprep.mubr.bf16.mxu0 0
      %1389 = vmatmul.mubr.bf16.gmra.mrb[0].mxu0 %v1337
      %v1390 = vpop.f32.mrb[0].mxu0
      %v1391 = vadd.f32 0.0, %v1390
      %v1392 = vpop.f32.mrb[0].mxu0
      %v1393 = vpop.f32.mrb[0].mxu0
      %v1394 = vadd.f32 0.0, %v1393
      %v1395 = vpop.f32.mrb[0].mxu0
      %1396 = vmatprep.mubr.bf16.mxu0 0
      %1397 = vmatmul.mubr.bf16.gmra.mrb[0].mxu0 %v1340
      %v1398 = vpop.f32.mrb[0].mxu0
      %v1399 = vadd.f32 0.0, %v1398
      %v1400 = vpop.f32.mrb[0].mxu0
      %v1401 = vpop.f32.mrb[0].mxu0
      %v1402 = vadd.f32 0.0, %v1401
      %v1403 = vpop.f32.mrb[0].mxu0
      %1404 = vmatprep.mubr.bf16.mxu0 0
      %1405 = vmatmul.mubr.bf16.gmra.mrb[0].mxu0 %v1343
      %v1406 = vpop.f32.mrb[0].mxu0
      %v1407 = vadd.f32 0.0, %v1406
      %v1408 = vpop.f32.mrb[0].mxu0
      %v1409 = vpop.f32.mrb[0].mxu0
      %v1410 = vadd.f32 0.0, %v1409
      %v1411 = vpop.f32.mrb[0].mxu0
      %1412 = vdwg.mxu0
      %v1413 = vadd.f32 %v1106, %v1383
      %v1414 = vadd.f32 %v1107, %v1386
      %v1415 = vadd.f32 %v1108, %v1391
      %v1416 = vadd.f32 %v1109, %v1394
      %v1417 = vadd.f32 %v1110, %v1399
      %v1418 = vadd.f32 %v1111, %v1402
      %v1419 = vadd.f32 %v1112, %v1407
      %v1420 = vadd.f32 %v1113, %v1410
      %1421 = vmatprep.subr.bf16.mxu0 0
      %1422 = vmatpush1.bf16.msra.mxu0 %v1116
      %1423 = vmatprep.subr.bf16.mxu0 0
      %1424 = vmatpush1.bf16.msra.mxu0 0
      %1425 = vmatprep.subr.bf16.mxu0 0
      %1426 = vmatpush1.bf16.msra.mxu0 0
      %1427 = vmatprep.subr.bf16.mxu0 0
      %1428 = vmatpush1.bf16.msra.mxu0 0
      %1429 = vmatprep.subr.bf16.mxu0 0
      %1430 = vmatpush1.bf16.msra.mxu0 0
      %1431 = vmatprep.subr.bf16.mxu0 0
      %1432 = vmatpush1.bf16.msra.mxu0 0
      %1433 = vmatprep.subr.bf16.mxu0 0
      %1434 = vmatpush1.bf16.msra.mxu0 0
      %1435 = vmatprep.subr.bf16.mxu0 0
      %1436 = vmatpush1.bf16.msra.mxu0 0
      %1437 = vmatprep.subr.bf16.mxu0 0
      %1438 = vmatpush1.bf16.msra.mxu0 0
      %1439 = vmatprep.subr.bf16.mxu0 0
      %1440 = vmatpush1.bf16.msra.mxu0 0
      %1441 = vmatprep.subr.bf16.mxu0 0
      %1442 = vmatpush1.bf16.msra.mxu0 0
      %1443 = vmatprep.subr.bf16.mxu0 0
      %1444 = vmatpush1.bf16.msra.mxu0 0
      %1445 = vmatprep.subr.bf16.mxu0 0
      %1446 = vmatpush1.bf16.msra.mxu0 0
      %1447 = vmatprep.subr.bf16.mxu0 0
      %1448 = vmatpush1.bf16.msra.mxu0 0
      %1449 = vmatprep.subr.bf16.mxu0 0
      %1450 = vmatpush1.bf16.msra.mxu0 0
      %1451 = vmatprep.subr.bf16.mxu0 0
      %1452 = vmatpush1.bf16.msra.mxu0 0
      %1453 = vmatprep.mubr.bf16.mxu0 0
      %1454 = vmatmul.mubr.bf16.gmra.mrb[0].mxu0 %v1334
      %v1455 = vpop.f32.mrb[0].mxu0
      %v1456 = vadd.f32 0.0, %v1455
      %v1457 = vpop.f32.mrb[0].mxu0
      %v1458 = vpop.f32.mrb[0].mxu0
      %v1459 = vadd.f32 0.0, %v1458
      %v1460 = vpop.f32.mrb[0].mxu0
      %1461 = vmatprep.mubr.bf16.mxu0 0
      %1462 = vmatmul.mubr.bf16.gmra.mrb[0].mxu0 %v1337
      %v1463 = vpop.f32.mrb[0].mxu0
      %v1464 = vadd.f32 0.0, %v1463
      %v1465 = vpop.f32.mrb[0].mxu0
      %v1466 = vpop.f32.mrb[0].mxu0
      %v1467 = vadd.f32 0.0, %v1466
      %v1468 = vpop.f32.mrb[0].mxu0
      %1469 = vmatprep.mubr.bf16.mxu0 0
      %1470 = vmatmul.mubr.bf16.gmra.mrb[0].mxu0 %v1340
      %v1471 = vpop.f32.mrb[0].mxu0
      %v1472 = vadd.f32 0.0, %v1471
      %v1473 = vpop.f32.mrb[0].mxu0
      %v1474 = vpop.f32.mrb[0].mxu0
      %v1475 = vadd.f32 0.0, %v1474
      %v1476 = vpop.f32.mrb[0].mxu0
      %1477 = vmatprep.mubr.bf16.mxu0 0
      %1478 = vmatmul.mubr.bf16.gmra.mrb[0].mxu0 %v1343
      %v1479 = vpop.f32.mrb[0].mxu0
      %v1480 = vadd.f32 0.0, %v1479
      %v1481 = vpop.f32.mrb[0].mxu0
      %v1482 = vpop.f32.mrb[0].mxu0
      %v1483 = vadd.f32 0.0, %v1482
      %v1484 = vpop.f32.mrb[0].mxu0
      %1485 = vdwg.mxu0
      %v1486 = vadd.f32 %v1183, %v1456
      %v1487 = vadd.f32 %v1184, %v1459
      %v1488 = vadd.f32 %v1185, %v1464
      %v1489 = vadd.f32 %v1186, %v1467
      %v1490 = vadd.f32 %v1187, %v1472
      %v1491 = vadd.f32 %v1188, %v1475
      %v1492 = vadd.f32 %v1189, %v1480
      %v1493 = vadd.f32 %v1190, %v1483
      %s1494 = scalar_lea.vmem %s372, 8
      %v1495 = vld [vmem:[%s1494] sm:$0xf]
      %v1496 = vld [vmem:[%s1494 + $0x8] sm:$0xf]
      %v1497 = vld [vmem:[%s1494 + $0x10] sm:$0xf]
      %v1498 = vld [vmem:[%s1494 + $0x18] sm:$0xf]
      %v1499 = vld [vmem:[%s1494 + $0x20] sm:$0xf]
      %v1500 = vld [vmem:[%s1494 + $0x28] sm:$0xf]
      %v1501 = vld [vmem:[%s1494 + $0x30] sm:$0xf]
      %v1502 = vld [vmem:[%s1494 + $0x38] sm:$0xf]
      %s1503 = scalar_lea.vmem %s4, 12
      %v1504 = vld [vmem:[%s1503] sm:$0x3]
      %v1513 = vunpack.c.l.b16 %v1495
      %v1514 = vunpack.c.l.b16 %v1496
      %v1515 = vunpack.c.l.b16 %v1497
      %v1516 = vunpack.c.l.b16 %v1498
      %v1517 = vunpack.c.l.b16 %v1499
      %v1518 = vunpack.c.l.b16 %v1500
      %v1519 = vunpack.c.l.b16 %v1501
      %v1520 = vunpack.c.l.b16 %v1502
      %v1521 = vpack.c.b16 %v1514, %v1513
      %v1522 = vpack.c.b16 %v1516, %v1515
      %v1523 = vpack.c.b16 %v1518, %v1517
      %v1524 = vpack.c.b16 %v1520, %v1519
      %v1526 = vsel %vm437, %v1521, 0
      %v1529 = vsel %vm437, %v1522, 0
      %v1532 = vsel %vm437, %v1523, 0
      %v1535 = vsel %vm437, %v1524, 0
      %v1538 = vsel %vm450, %v1504, 0
      %1540 = vmatprep.subr.bf16.mxu0 0
      %1541 = vmatpush1.bf16.msra.mxu0 %v1538
      %1542 = vmatprep.subr.bf16.mxu0 0
      %1543 = vmatpush1.bf16.msra.mxu0 0
      %1544 = vmatprep.subr.bf16.mxu0 0
      %1545 = vmatpush1.bf16.msra.mxu0 0
      %1546 = vmatprep.subr.bf16.mxu0 0
      %1547 = vmatpush1.bf16.msra.mxu0 0
      %1548 = vmatprep.subr.bf16.mxu0 0
      %1549 = vmatpush1.bf16.msra.mxu0 0
      %1550 = vmatprep.subr.bf16.mxu0 0
      %1551 = vmatpush1.bf16.msra.mxu0 0
      %1552 = vmatprep.subr.bf16.mxu0 0
      %1553 = vmatpush1.bf16.msra.mxu0 0
      %1554 = vmatprep.subr.bf16.mxu0 0
      %1555 = vmatpush1.bf16.msra.mxu0 0
      %1556 = vmatprep.subr.bf16.mxu0 0
      %1557 = vmatpush1.bf16.msra.mxu0 0
      %1558 = vmatprep.subr.bf16.mxu0 0
      %1559 = vmatpush1.bf16.msra.mxu0 0
      %1560 = vmatprep.subr.bf16.mxu0 0
      %1561 = vmatpush1.bf16.msra.mxu0 0
      %1562 = vmatprep.subr.bf16.mxu0 0
      %1563 = vmatpush1.bf16.msra.mxu0 0
      %1564 = vmatprep.subr.bf16.mxu0 0
      %1565 = vmatpush1.bf16.msra.mxu0 0
      %1566 = vmatprep.subr.bf16.mxu0 0
      %1567 = vmatpush1.bf16.msra.mxu0 0
      %1568 = vmatprep.subr.bf16.mxu0 0
      %1569 = vmatpush1.bf16.msra.mxu0 0
      %1570 = vmatprep.subr.bf16.mxu0 0
      %1571 = vmatpush1.bf16.msra.mxu0 0
      %1572 = vmatprep.mubr.bf16.mxu0 0
      %1573 = vmatmul.mubr.bf16.gmra.mrb[0].mxu0 %v1526
      %v1574 = vpop.f32.mrb[0].mxu0
      %v1575 = vadd.f32 0.0, %v1574
      %v1576 = vpop.f32.mrb[0].mxu0
      %v1577 = vpop.f32.mrb[0].mxu0
      %v1578 = vadd.f32 0.0, %v1577
      %v1579 = vpop.f32.mrb[0].mxu0
      %1580 = vmatprep.mubr.bf16.mxu0 0
      %1581 = vmatmul.mubr.bf16.gmra.mrb[0].mxu0 %v1529
      %v1582 = vpop.f32.mrb[0].mxu0
      %v1583 = vadd.f32 0.0, %v1582
      %v1584 = vpop.f32.mrb[0].mxu0
      %v1585 = vpop.f32.mrb[0].mxu0
      %v1586 = vadd.f32 0.0, %v1585
      %v1587 = vpop.f32.mrb[0].mxu0
      %1588 = vmatprep.mubr.bf16.mxu0 0
      %1589 = vmatmul.mubr.bf16.gmra.mrb[0].mxu0 %v1532
      %v1590 = vpop.f32.mrb[0].mxu0
      %v1591 = vadd.f32 0.0, %v1590
      %v1592 = vpop.f32.mrb[0].mxu0
      %v1593 = vpop.f32.mrb[0].mxu0
      %v1594 = vadd.f32 0.0, %v1593
      %v1595 = vpop.f32.mrb[0].mxu0
      %1596 = vmatprep.mubr.bf16.mxu0 0
      %1597 = vmatmul.mubr.bf16.gmra.mrb[0].mxu0 %v1535
      %v1598 = vpop.f32.mrb[0].mxu0
      %v1599 = vadd.f32 0.0, %v1598
      %v1600 = vpop.f32.mrb[0].mxu0
      %v1601 = vpop.f32.mrb[0].mxu0
      %v1602 = vadd.f32 0.0, %v1601
      %v1603 = vpop.f32.mrb[0].mxu0
      %1604 = vdwg.mxu0
      %v1605 = vadd.f32 %v1413, %v1575
      %v1606 = vadd.f32 %v1414, %v1578
      %v1607 = vadd.f32 %v1415, %v1583
      %v1608 = vadd.f32 %v1416, %v1586
      %v1609 = vadd.f32 %v1417, %v1591
      %v1610 = vadd.f32 %v1418, %v1594
      %v1611 = vadd.f32 %v1419, %v1599
      %v1612 = vadd.f32 %v1420, %v1602
      %s1613 = scalar_lea.vmem %s377, 8
      %v1614 = vld [vmem:[%s1613] sm:$0xf]
      %v1615 = vld [vmem:[%s1613 + $0x8] sm:$0xf]
      %v1616 = vld [vmem:[%s1613 + $0x10] sm:$0xf]
      %v1617 = vld [vmem:[%s1613 + $0x18] sm:$0xf]
      %v1618 = vld [vmem:[%s1613 + $0x20] sm:$0xf]
      %v1619 = vld [vmem:[%s1613 + $0x28] sm:$0xf]
      %v1620 = vld [vmem:[%s1613 + $0x30] sm:$0xf]
      %v1621 = vld [vmem:[%s1613 + $0x38] sm:$0xf]
      %s1622 = scalar_lea.vmem %s4, 14
      %v1623 = vld [vmem:[%s1622] sm:$0x3]
      %v1632 = vunpack.c.l.b16 %v1614
      %v1633 = vunpack.c.l.b16 %v1615
      %v1634 = vunpack.c.l.b16 %v1616
      %v1635 = vunpack.c.l.b16 %v1617
      %v1636 = vunpack.c.l.b16 %v1618
      %v1637 = vunpack.c.l.b16 %v1619
      %v1638 = vunpack.c.l.b16 %v1620
      %v1639 = vunpack.c.l.b16 %v1621
      %v1640 = vpack.c.b16 %v1633, %v1632
      %v1641 = vpack.c.b16 %v1635, %v1634
      %v1642 = vpack.c.b16 %v1637, %v1636
      %v1643 = vpack.c.b16 %v1639, %v1638
      %v1645 = vsel %vm437, %v1640, 0
      %v1648 = vsel %vm437, %v1641, 0
      %v1651 = vsel %vm437, %v1642, 0
      %v1654 = vsel %vm437, %v1643, 0
      %v1657 = vsel %vm450, %v1623, 0
      %1659 = vmatprep.subr.bf16.mxu0 0
      %1660 = vmatpush1.bf16.msra.mxu0 %v1657
      %1661 = vmatprep.subr.bf16.mxu0 0
      %1662 = vmatpush1.bf16.msra.mxu0 0
      %1663 = vmatprep.subr.bf16.mxu0 0
      %1664 = vmatpush1.bf16.msra.mxu0 0
      %1665 = vmatprep.subr.bf16.mxu0 0
      %1666 = vmatpush1.bf16.msra.mxu0 0
      %1667 = vmatprep.subr.bf16.mxu0 0
      %1668 = vmatpush1.bf16.msra.mxu0 0
      %1669 = vmatprep.subr.bf16.mxu0 0
      %1670 = vmatpush1.bf16.msra.mxu0 0
      %1671 = vmatprep.subr.bf16.mxu0 0
      %1672 = vmatpush1.bf16.msra.mxu0 0
      %1673 = vmatprep.subr.bf16.mxu0 0
      %1674 = vmatpush1.bf16.msra.mxu0 0
      %1675 = vmatprep.subr.bf16.mxu0 0
      %1676 = vmatpush1.bf16.msra.mxu0 0
      %1677 = vmatprep.subr.bf16.mxu0 0
      %1678 = vmatpush1.bf16.msra.mxu0 0
      %1679 = vmatprep.subr.bf16.mxu0 0
      %1680 = vmatpush1.bf16.msra.mxu0 0
      %1681 = vmatprep.subr.bf16.mxu0 0
      %1682 = vmatpush1.bf16.msra.mxu0 0
      %1683 = vmatprep.subr.bf16.mxu0 0
      %1684 = vmatpush1.bf16.msra.mxu0 0
      %1685 = vmatprep.subr.bf16.mxu0 0
      %1686 = vmatpush1.bf16.msra.mxu0 0
      %1687 = vmatprep.subr.bf16.mxu0 0
      %1688 = vmatpush1.bf16.msra.mxu0 0
      %1689 = vmatprep.subr.bf16.mxu0 0
      %1690 = vmatpush1.bf16.msra.mxu0 0
      %1691 = vmatprep.mubr.bf16.mxu0 0
      %1692 = vmatmul.mubr.bf16.gmra.mrb[0].mxu0 %v1645
      %v1693 = vpop.f32.mrb[0].mxu0
      %v1694 = vadd.f32 0.0, %v1693
      %v1695 = vpop.f32.mrb[0].mxu0
      %v1696 = vpop.f32.mrb[0].mxu0
      %v1697 = vadd.f32 0.0, %v1696
      %v1698 = vpop.f32.mrb[0].mxu0
      %1699 = vmatprep.mubr.bf16.mxu0 0
      %1700 = vmatmul.mubr.bf16.gmra.mrb[0].mxu0 %v1648
      %v1701 = vpop.f32.mrb[0].mxu0
      %v1702 = vadd.f32 0.0, %v1701
      %v1703 = vpop.f32.mrb[0].mxu0
      %v1704 = vpop.f32.mrb[0].mxu0
      %v1705 = vadd.f32 0.0, %v1704
      %v1706 = vpop.f32.mrb[0].mxu0
      %1707 = vmatprep.mubr.bf16.mxu0 0
      %1708 = vmatmul.mubr.bf16.gmra.mrb[0].mxu0 %v1651
      %v1709 = vpop.f32.mrb[0].mxu0
      %v1710 = vadd.f32 0.0, %v1709
      %v1711 = vpop.f32.mrb[0].mxu0
      %v1712 = vpop.f32.mrb[0].mxu0
      %v1713 = vadd.f32 0.0, %v1712
      %v1714 = vpop.f32.mrb[0].mxu0
      %1715 = vmatprep.mubr.bf16.mxu0 0
      %1716 = vmatmul.mubr.bf16.gmra.mrb[0].mxu0 %v1654
      %v1717 = vpop.f32.mrb[0].mxu0
      %v1718 = vadd.f32 0.0, %v1717
      %v1719 = vpop.f32.mrb[0].mxu0
      %v1720 = vpop.f32.mrb[0].mxu0
      %v1721 = vadd.f32 0.0, %v1720
      %v1722 = vpop.f32.mrb[0].mxu0
      %1723 = vdwg.mxu0
      %v1724 = vadd.f32 %v1605, %v1694
      %v1725 = vadd.f32 %v1606, %v1697
      %v1726 = vadd.f32 %v1607, %v1702
      %v1727 = vadd.f32 %v1608, %v1705
      %v1728 = vadd.f32 %v1609, %v1710
      %v1729 = vadd.f32 %v1610, %v1713
      %v1730 = vadd.f32 %v1611, %v1718
      %v1731 = vadd.f32 %v1612, %v1721
      %1732 = vmatprep.subr.bf16.mxu0 0
      %1733 = vmatpush1.bf16.msra.mxu0 %v1116
      %1734 = vmatprep.subr.bf16.mxu0 0
      %1735 = vmatpush1.bf16.msra.mxu0 0
      %1736 = vmatprep.subr.bf16.mxu0 0
      %1737 = vmatpush1.bf16.msra.mxu0 0
      %1738 = vmatprep.subr.bf16.mxu0 0
      %1739 = vmatpush1.bf16.msra.mxu0 0
      %1740 = vmatprep.subr.bf16.mxu0 0
      %1741 = vmatpush1.bf16.msra.mxu0 0
      %1742 = vmatprep.subr.bf16.mxu0 0
      %1743 = vmatpush1.bf16.msra.mxu0 0
      %1744 = vmatprep.subr.bf16.mxu0 0
      %1745 = vmatpush1.bf16.msra.mxu0 0
      %1746 = vmatprep.subr.bf16.mxu0 0
      %1747 = vmatpush1.bf16.msra.mxu0 0
      %1748 = vmatprep.subr.bf16.mxu0 0
      %1749 = vmatpush1.bf16.msra.mxu0 0
      %1750 = vmatprep.subr.bf16.mxu0 0
      %1751 = vmatpush1.bf16.msra.mxu0 0
      %1752 = vmatprep.subr.bf16.mxu0 0
      %1753 = vmatpush1.bf16.msra.mxu0 0
      %1754 = vmatprep.subr.bf16.mxu0 0
      %1755 = vmatpush1.bf16.msra.mxu0 0
      %1756 = vmatprep.subr.bf16.mxu0 0
      %1757 = vmatpush1.bf16.msra.mxu0 0
      %1758 = vmatprep.subr.bf16.mxu0 0
      %1759 = vmatpush1.bf16.msra.mxu0 0
      %1760 = vmatprep.subr.bf16.mxu0 0
      %1761 = vmatpush1.bf16.msra.mxu0 0
      %1762 = vmatprep.subr.bf16.mxu0 0
      %1763 = vmatpush1.bf16.msra.mxu0 0
      %1764 = vmatprep.mubr.bf16.mxu0 0
      %1765 = vmatmul.mubr.bf16.gmra.mrb[0].mxu0 %v1645
      %v1766 = vpop.f32.mrb[0].mxu0
      %v1767 = vadd.f32 0.0, %v1766
      %v1768 = vpop.f32.mrb[0].mxu0
      %v1769 = vpop.f32.mrb[0].mxu0
      %v1770 = vadd.f32 0.0, %v1769
      %v1771 = vpop.f32.mrb[0].mxu0
      %1772 = vmatprep.mubr.bf16.mxu0 0
      %1773 = vmatmul.mubr.bf16.gmra.mrb[0].mxu0 %v1648
      %v1774 = vpop.f32.mrb[0].mxu0
      %v1775 = vadd.f32 0.0, %v1774
      %v1776 = vpop.f32.mrb[0].mxu0
      %v1777 = vpop.f32.mrb[0].mxu0
      %v1778 = vadd.f32 0.0, %v1777
      %v1779 = vpop.f32.mrb[0].mxu0
      %1780 = vmatprep.mubr.bf16.mxu0 0
      %1781 = vmatmul.mubr.bf16.gmra.mrb[0].mxu0 %v1651
      %v1782 = vpop.f32.mrb[0].mxu0
      %v1783 = vadd.f32 0.0, %v1782
      %v1784 = vpop.f32.mrb[0].mxu0
      %v1785 = vpop.f32.mrb[0].mxu0
      %v1786 = vadd.f32 0.0, %v1785
      %v1787 = vpop.f32.mrb[0].mxu0
      %1788 = vmatprep.mubr.bf16.mxu0 0
      %1789 = vmatmul.mubr.bf16.gmra.mrb[0].mxu0 %v1654
      %v1790 = vpop.f32.mrb[0].mxu0
      %v1791 = vadd.f32 0.0, %v1790
      %v1792 = vpop.f32.mrb[0].mxu0
      %v1793 = vpop.f32.mrb[0].mxu0
      %v1794 = vadd.f32 0.0, %v1793
      %v1795 = vpop.f32.mrb[0].mxu0
      %1796 = vdwg.mxu0
      %v1797 = vadd.f32 %v1486, %v1767
      %v1798 = vadd.f32 %v1487, %v1770
      %v1799 = vadd.f32 %v1488, %v1775
      %v1800 = vadd.f32 %v1489, %v1778
      %v1801 = vadd.f32 %v1490, %v1783
      %v1802 = vadd.f32 %v1491, %v1786
      %v1803 = vadd.f32 %v1492, %v1791
      %v1804 = vadd.f32 %v1493, %v1794
      %v1805 = vld [vmem:[%s1494] sm:$0xf]
      %v1806 = vld [vmem:[%s1494 + $0x4] sm:$0x1]
      %v1807 = vld [vmem:[%s1494 + $0x8] sm:$0xf]
      %v1808 = vld [vmem:[%s1494 + $0xc] sm:$0x1]
      %v1809 = vld [vmem:[%s1494 + $0x10] sm:$0xf]
      %v1810 = vld [vmem:[%s1494 + $0x14] sm:$0x1]
      %v1811 = vld [vmem:[%s1494 + $0x18] sm:$0xf]
      %v1812 = vld [vmem:[%s1494 + $0x1c] sm:$0x1]
      %v1813 = vld [vmem:[%s1494 + $0x20] sm:$0xf]
      %v1814 = vld [vmem:[%s1494 + $0x24] sm:$0x1]
      %v1815 = vld [vmem:[%s1494 + $0x28] sm:$0xf]
      %v1816 = vld [vmem:[%s1494 + $0x2c] sm:$0x1]
      %v1817 = vld [vmem:[%s1494 + $0x30] sm:$0xf]
      %v1818 = vld [vmem:[%s1494 + $0x34] sm:$0x1]
      %v1819 = vld [vmem:[%s1494 + $0x38] sm:$0xf]
      %v1820 = vld [vmem:[%s1494 + $0x3c] sm:$0x1]
      %v1822 = vshrl.u32 %v1805, 16
      %v1824 = vrot.slane %v1822, 4
      %v1825 = vshll.u32 %v1805, 16
      %v1827 = vrot.slane %v1825, 5
      %v1828 = vor.u32 %v1824, %v1827
      %v1829 = vrot.slane %v1828, 4
      %v1831 = vshll.u32 %v1806, 16
      %v1833 = vrot.slane %v1831, 5
      %v1834 = vsel %vm663, %v1829, %v1833
      %v1836 = vshrl.u32 %v1807, 16
      %v1838 = vrot.slane %v1836, 4
      %v1839 = vshll.u32 %v1807, 16
      %v1841 = vrot.slane %v1839, 5
      %v1842 = vor.u32 %v1838, %v1841
      %v1843 = vrot.slane %v1842, 4
      %v1845 = vshll.u32 %v1808, 16
      %v1847 = vrot.slane %v1845, 5
      %v1848 = vsel %vm663, %v1843, %v1847
      %v1850 = vshrl.u32 %v1809, 16
      %v1852 = vrot.slane %v1850, 4
      %v1853 = vshll.u32 %v1809, 16
      %v1855 = vrot.slane %v1853, 5
      %v1856 = vor.u32 %v1852, %v1855
      %v1857 = vrot.slane %v1856, 4
      %v1859 = vshll.u32 %v1810, 16
      %v1861 = vrot.slane %v1859, 5
      %v1862 = vsel %vm663, %v1857, %v1861
      %v1864 = vshrl.u32 %v1811, 16
      %v1866 = vrot.slane %v1864, 4
      %v1867 = vshll.u32 %v1811, 16
      %v1869 = vrot.slane %v1867, 5
      %v1870 = vor.u32 %v1866, %v1869
      %v1871 = vrot.slane %v1870, 4
      %v1873 = vshll.u32 %v1812, 16
      %v1875 = vrot.slane %v1873, 5
      %v1876 = vsel %vm663, %v1871, %v1875
      %v1878 = vshrl.u32 %v1813, 16
      %v1880 = vrot.slane %v1878, 4
      %v1881 = vshll.u32 %v1813, 16
      %v1883 = vrot.slane %v1881, 5
      %v1884 = vor.u32 %v1880, %v1883
      %v1885 = vrot.slane %v1884, 4
      %v1887 = vshll.u32 %v1814, 16
      %v1889 = vrot.slane %v1887, 5
      %v1890 = vsel %vm663, %v1885, %v1889
      %v1892 = vshrl.u32 %v1815, 16
      %v1894 = vrot.slane %v1892, 4
      %v1895 = vshll.u32 %v1815, 16
      %v1897 = vrot.slane %v1895, 5
      %v1898 = vor.u32 %v1894, %v1897
      %v1899 = vrot.slane %v1898, 4
      %v1901 = vshll.u32 %v1816, 16
      %v1903 = vrot.slane %v1901, 5
      %v1904 = vsel %vm663, %v1899, %v1903
      %v1906 = vshrl.u32 %v1817, 16
      %v1908 = vrot.slane %v1906, 4
      %v1909 = vshll.u32 %v1817, 16
      %v1911 = vrot.slane %v1909, 5
      %v1912 = vor.u32 %v1908, %v1911
      %v1913 = vrot.slane %v1912, 4
      %v1915 = vshll.u32 %v1818, 16
      %v1917 = vrot.slane %v1915, 5
      %v1918 = vsel %vm663, %v1913, %v1917
      %v1920 = vshrl.u32 %v1819, 16
      %v1922 = vrot.slane %v1920, 4
      %v1923 = vshll.u32 %v1819, 16
      %v1925 = vrot.slane %v1923, 5
      %v1926 = vor.u32 %v1922, %v1925
      %v1927 = vrot.slane %v1926, 4
      %v1929 = vshll.u32 %v1820, 16
      %v1931 = vrot.slane %v1929, 5
      %v1932 = vsel %vm663, %v1927, %v1931
      %s1933 = scalar_lea.vmem %s4, 16
      %v1934 = vld [vmem:[%s1933] sm:$0x3]
      %v1935 = vunpack.c.l.b16 %v1834
      %v1936 = vunpack.c.l.b16 %v1848
      %v1937 = vunpack.c.l.b16 %v1862
      %v1938 = vunpack.c.l.b16 %v1876
      %v1939 = vunpack.c.l.b16 %v1890
      %v1940 = vunpack.c.l.b16 %v1904
      %v1941 = vunpack.c.l.b16 %v1918
      %v1942 = vunpack.c.l.b16 %v1932
      %v1943 = vpack.c.b16 %v1936, %v1935
      %v1944 = vpack.c.b16 %v1938, %v1937
      %v1945 = vpack.c.b16 %v1940, %v1939
      %v1946 = vpack.c.b16 %v1942, %v1941
      %v1948 = vsel %vm437, %v1943, 0
      %v1951 = vsel %vm437, %v1944, 0
      %v1954 = vsel %vm437, %v1945, 0
      %v1957 = vsel %vm437, %v1946, 0
      %v1960 = vsel %vm450, %v1934, 0
      %1962 = vmatprep.subr.bf16.mxu0 0
      %1963 = vmatpush1.bf16.msra.mxu0 %v1960
      %1964 = vmatprep.subr.bf16.mxu0 0
      %1965 = vmatpush1.bf16.msra.mxu0 0
      %1966 = vmatprep.subr.bf16.mxu0 0
      %1967 = vmatpush1.bf16.msra.mxu0 0
      %1968 = vmatprep.subr.bf16.mxu0 0
      %1969 = vmatpush1.bf16.msra.mxu0 0
      %1970 = vmatprep.subr.bf16.mxu0 0
      %1971 = vmatpush1.bf16.msra.mxu0 0
      %1972 = vmatprep.subr.bf16.mxu0 0
      %1973 = vmatpush1.bf16.msra.mxu0 0
      %1974 = vmatprep.subr.bf16.mxu0 0
      %1975 = vmatpush1.bf16.msra.mxu0 0
      %1976 = vmatprep.subr.bf16.mxu0 0
      %1977 = vmatpush1.bf16.msra.mxu0 0
      %1978 = vmatprep.subr.bf16.mxu0 0
      %1979 = vmatpush1.bf16.msra.mxu0 0
      %1980 = vmatprep.subr.bf16.mxu0 0
      %1981 = vmatpush1.bf16.msra.mxu0 0
      %1982 = vmatprep.subr.bf16.mxu0 0
      %1983 = vmatpush1.bf16.msra.mxu0 0
      %1984 = vmatprep.subr.bf16.mxu0 0
      %1985 = vmatpush1.bf16.msra.mxu0 0
      %1986 = vmatprep.subr.bf16.mxu0 0
      %1987 = vmatpush1.bf16.msra.mxu0 0
      %1988 = vmatprep.subr.bf16.mxu0 0
      %1989 = vmatpush1.bf16.msra.mxu0 0
      %1990 = vmatprep.subr.bf16.mxu0 0
      %1991 = vmatpush1.bf16.msra.mxu0 0
      %1992 = vmatprep.subr.bf16.mxu0 0
      %1993 = vmatpush1.bf16.msra.mxu0 0
      %1994 = vmatprep.mubr.bf16.mxu0 0
      %1995 = vmatmul.mubr.bf16.gmra.mrb[0].mxu0 %v1948
      %v1996 = vpop.f32.mrb[0].mxu0
      %v1997 = vadd.f32 0.0, %v1996
      %v1998 = vpop.f32.mrb[0].mxu0
      %v1999 = vpop.f32.mrb[0].mxu0
      %v2000 = vadd.f32 0.0, %v1999
      %v2001 = vpop.f32.mrb[0].mxu0
      %2002 = vmatprep.mubr.bf16.mxu0 0
      %2003 = vmatmul.mubr.bf16.gmra.mrb[0].mxu0 %v1951
      %v2004 = vpop.f32.mrb[0].mxu0
      %v2005 = vadd.f32 0.0, %v2004
      %v2006 = vpop.f32.mrb[0].mxu0
      %v2007 = vpop.f32.mrb[0].mxu0
      %v2008 = vadd.f32 0.0, %v2007
      %v2009 = vpop.f32.mrb[0].mxu0
      %2010 = vmatprep.mubr.bf16.mxu0 0
      %2011 = vmatmul.mubr.bf16.gmra.mrb[0].mxu0 %v1954
      %v2012 = vpop.f32.mrb[0].mxu0
      %v2013 = vadd.f32 0.0, %v2012
      %v2014 = vpop.f32.mrb[0].mxu0
      %v2015 = vpop.f32.mrb[0].mxu0
      %v2016 = vadd.f32 0.0, %v2015
      %v2017 = vpop.f32.mrb[0].mxu0
      %2018 = vmatprep.mubr.bf16.mxu0 0
      %2019 = vmatmul.mubr.bf16.gmra.mrb[0].mxu0 %v1957
      %v2020 = vpop.f32.mrb[0].mxu0
      %v2021 = vadd.f32 0.0, %v2020
      %v2022 = vpop.f32.mrb[0].mxu0
      %v2023 = vpop.f32.mrb[0].mxu0
      %v2024 = vadd.f32 0.0, %v2023
      %v2025 = vpop.f32.mrb[0].mxu0
      %2026 = vdwg.mxu0
      %v2027 = vadd.f32 %v1724, %v1997
      %v2028 = vadd.f32 %v1725, %v2000
      %v2029 = vadd.f32 %v1726, %v2005
      %v2030 = vadd.f32 %v1727, %v2008
      %v2031 = vadd.f32 %v1728, %v2013
      %v2032 = vadd.f32 %v1729, %v2016
      %v2033 = vadd.f32 %v1730, %v2021
      %v2034 = vadd.f32 %v1731, %v2024
      %2035 = vmatprep.subr.bf16.mxu0 0
      %2036 = vmatpush1.bf16.msra.mxu0 %v1116
      %2037 = vmatprep.subr.bf16.mxu0 0
      %2038 = vmatpush1.bf16.msra.mxu0 0
      %2039 = vmatprep.subr.bf16.mxu0 0
      %2040 = vmatpush1.bf16.msra.mxu0 0
      %2041 = vmatprep.subr.bf16.mxu0 0
      %2042 = vmatpush1.bf16.msra.mxu0 0
      %2043 = vmatprep.subr.bf16.mxu0 0
      %2044 = vmatpush1.bf16.msra.mxu0 0
      %2045 = vmatprep.subr.bf16.mxu0 0
      %2046 = vmatpush1.bf16.msra.mxu0 0
      %2047 = vmatprep.subr.bf16.mxu0 0
      %2048 = vmatpush1.bf16.msra.mxu0 0
      %2049 = vmatprep.subr.bf16.mxu0 0
      %2050 = vmatpush1.bf16.msra.mxu0 0
      %2051 = vmatprep.subr.bf16.mxu0 0
      %2052 = vmatpush1.bf16.msra.mxu0 0
      %2053 = vmatprep.subr.bf16.mxu0 0
      %2054 = vmatpush1.bf16.msra.mxu0 0
      %2055 = vmatprep.subr.bf16.mxu0 0
      %2056 = vmatpush1.bf16.msra.mxu0 0
      %2057 = vmatprep.subr.bf16.mxu0 0
      %2058 = vmatpush1.bf16.msra.mxu0 0
      %2059 = vmatprep.subr.bf16.mxu0 0
      %2060 = vmatpush1.bf16.msra.mxu0 0
      %2061 = vmatprep.subr.bf16.mxu0 0
      %2062 = vmatpush1.bf16.msra.mxu0 0
      %2063 = vmatprep.subr.bf16.mxu0 0
      %2064 = vmatpush1.bf16.msra.mxu0 0
      %2065 = vmatprep.subr.bf16.mxu0 0
      %2066 = vmatpush1.bf16.msra.mxu0 0
      %2067 = vmatprep.mubr.bf16.mxu0 0
      %2068 = vmatmul.mubr.bf16.gmra.mrb[0].mxu0 %v1948
      %v2069 = vpop.f32.mrb[0].mxu0
      %v2070 = vadd.f32 0.0, %v2069
      %v2071 = vpop.f32.mrb[0].mxu0
      %v2072 = vpop.f32.mrb[0].mxu0
      %v2073 = vadd.f32 0.0, %v2072
      %v2074 = vpop.f32.mrb[0].mxu0
      %2075 = vmatprep.mubr.bf16.mxu0 0
      %2076 = vmatmul.mubr.bf16.gmra.mrb[0].mxu0 %v1951
      %v2077 = vpop.f32.mrb[0].mxu0
      %v2078 = vadd.f32 0.0, %v2077
      %v2079 = vpop.f32.mrb[0].mxu0
      %v2080 = vpop.f32.mrb[0].mxu0
      %v2081 = vadd.f32 0.0, %v2080
      %v2082 = vpop.f32.mrb[0].mxu0
      %2083 = vmatprep.mubr.bf16.mxu0 0
      %2084 = vmatmul.mubr.bf16.gmra.mrb[0].mxu0 %v1954
      %v2085 = vpop.f32.mrb[0].mxu0
      %v2086 = vadd.f32 0.0, %v2085
      %v2087 = vpop.f32.mrb[0].mxu0
      %v2088 = vpop.f32.mrb[0].mxu0
      %v2089 = vadd.f32 0.0, %v2088
      %v2090 = vpop.f32.mrb[0].mxu0
      %2091 = vmatprep.mubr.bf16.mxu0 0
      %2092 = vmatmul.mubr.bf16.gmra.mrb[0].mxu0 %v1957
      %v2093 = vpop.f32.mrb[0].mxu0
      %v2094 = vadd.f32 0.0, %v2093
      %v2095 = vpop.f32.mrb[0].mxu0
      %v2096 = vpop.f32.mrb[0].mxu0
      %v2097 = vadd.f32 0.0, %v2096
      %v2098 = vpop.f32.mrb[0].mxu0
      %2099 = vdwg.mxu0
      %v2100 = vadd.f32 %v1797, %v2070
      %v2101 = vadd.f32 %v1798, %v2073
      %v2102 = vadd.f32 %v1799, %v2078
      %v2103 = vadd.f32 %v1800, %v2081
      %v2104 = vadd.f32 %v1801, %v2086
      %v2105 = vadd.f32 %v1802, %v2089
      %v2106 = vadd.f32 %v1803, %v2094
      %v2107 = vadd.f32 %v1804, %v2097
      %vm2108 = vcmp.ge.f32.partialorder %v2027, 0.0
      %vm2109 = vcmp.ge.f32.partialorder %v2028, 0.0
      %vm2110 = vcmp.ge.f32.partialorder %v2029, 0.0
      %vm2111 = vcmp.ge.f32.partialorder %v2030, 0.0
      %vm2112 = vcmp.ge.f32.partialorder %v2031, 0.0
      %vm2113 = vcmp.ge.f32.partialorder %v2032, 0.0
      %vm2114 = vcmp.ge.f32.partialorder %v2033, 0.0
      %vm2115 = vcmp.ge.f32.partialorder %v2034, 0.0
      %v2116 = vmul.f32 %v2027, 0.01
      %v2117 = vmul.f32 %v2028, 0.01
      %v2118 = vmul.f32 %v2029, 0.01
      %v2119 = vmul.f32 %v2030, 0.01
      %v2120 = vmul.f32 %v2031, 0.01
      %v2121 = vmul.f32 %v2032, 0.01
      %v2122 = vmul.f32 %v2033, 0.01
      %v2123 = vmul.f32 %v2034, 0.01
      %v2124 = vsel %vm2108, %v2027, %v2116
      %v2125 = vsel %vm2109, %v2028, %v2117
      %v2126 = vsel %vm2110, %v2029, %v2118
      %v2127 = vsel %vm2111, %v2030, %v2119
      %v2128 = vsel %vm2112, %v2031, %v2120
      %v2129 = vsel %vm2113, %v2032, %v2121
      %v2130 = vsel %vm2114, %v2033, %v2122
      %v2131 = vsel %vm2115, %v2034, %v2123
      %vm2132 = vcmask 64512
      %2133 = vst.msk [vmem:[#allocation2] sm:$0xff] %vm2132, 0.0
      %vm2134 = vcmask 58368
      %2135 = vst.msk [vmem:[#allocation2 + $0x8] sm:$0x3] %vm2134, 0.0
      %2136 = vst.msk [vmem:[#allocation2 + $0x10] sm:$0xff] %vm2132, 0.0
      %2137 = vst.msk [vmem:[#allocation2 + $0x18] sm:$0x3] %vm2134, 0.0
      %2138 = vst.msk [vmem:[#allocation2 + $0x20] sm:$0xff] %vm2132, 0.0
      %2139 = vst.msk [vmem:[#allocation2 + $0x28] sm:$0x3] %vm2134, 0.0
      %2140 = vst.msk [vmem:[#allocation2 + $0x30] sm:$0xff] %vm2132, 0.0
      %2141 = vst.msk [vmem:[#allocation2 + $0x38] sm:$0x3] %vm2134, 0.0
      %2142 = vst.msk [vmem:[#allocation2 + $0x40] sm:$0xff] %vm2132, 0.0
      %2143 = vst.msk [vmem:[#allocation2 + $0x48] sm:$0x3] %vm2134, 0.0
      %2144 = vst.msk [vmem:[#allocation2 + $0x50] sm:$0xff] %vm2132, 0.0
      %2145 = vst.msk [vmem:[#allocation2 + $0x58] sm:$0x3] %vm2134, 0.0
      %2146 = vst.msk [vmem:[#allocation2 + $0x60] sm:$0xff] %vm2132, 0.0
      %2147 = vst.msk [vmem:[#allocation2 + $0x68] sm:$0x3] %vm2134, 0.0
      %2148 = vst.msk [vmem:[#allocation2 + $0x70] sm:$0xff] %vm2132, 0.0
      %2149 = vst.msk [vmem:[#allocation2 + $0x78] sm:$0x3] %vm2134, 0.0
      %2150 = vst.msk [vmem:[#allocation2 + $0x80] sm:$0xff] %vm2132, 0.0
      %2151 = vst.msk [vmem:[#allocation2 + $0x88] sm:$0x3] %vm2134, 0.0
      %2152 = vst.msk [vmem:[#allocation2 + $0x90] sm:$0xff] %vm2132, 0.0
      %2153 = vst.msk [vmem:[#allocation2 + $0x98] sm:$0x3] %vm2134, 0.0
      %s2154 = scalar_lea.vmem [#allocation2], 16
      %2155 = vst.msk [vmem:[%s2154 + $0x1] sm:$0xff] %vm2132, %v2124
      %2156 = vst.msk [vmem:[%s2154 + $0x11] sm:$0xff] %vm2132, %v2125
      %2157 = vst.msk [vmem:[%s2154 + $0x21] sm:$0xff] %vm2132, %v2126
      %2158 = vst.msk [vmem:[%s2154 + $0x31] sm:$0xff] %vm2132, %v2127
      %2159 = vst.msk [vmem:[%s2154 + $0x41] sm:$0xff] %vm2132, %v2128
      %2160 = vst.msk [vmem:[%s2154 + $0x51] sm:$0xff] %vm2132, %v2129
      %2161 = vst.msk [vmem:[%s2154 + $0x61] sm:$0xff] %vm2132, %v2130
      %2162 = vst.msk [vmem:[%s2154 + $0x71] sm:$0xff] %vm2132, %v2131
      %v2163 = vld [vmem:[#allocation2] sm:$0xff]
      %v2164 = vld [vmem:[#allocation2 + $0x10] sm:$0xff]
      %v2165 = vld [vmem:[#allocation2 + $0x20] sm:$0xff]
      %v2166 = vld [vmem:[#allocation2 + $0x30] sm:$0xff]
      %v2167 = vld [vmem:[#allocation2 + $0x40] sm:$0xff]
      %v2168 = vld [vmem:[#allocation2 + $0x50] sm:$0xff]
      %v2169 = vld [vmem:[#allocation2 + $0x60] sm:$0xff]
      %v2170 = vld [vmem:[#allocation2 + $0x70] sm:$0xff]
      %v2171 = vld [vmem:[%s6] sm:$0xff]
      %v2173 = vsel %vm2132, %v2163, 0
      %v2176 = vsel %vm2132, %v2164, 0
      %v2179 = vsel %vm2132, %v2165, 0
      %v2182 = vsel %vm2132, %v2166, 0
      %v2185 = vsel %vm2132, %v2167, 0
      %v2188 = vsel %vm2132, %v2168, 0
      %v2191 = vsel %vm2132, %v2169, 0
      %v2194 = vsel %vm2132, %v2170, 0
      %2196 = vmatprep.subr.mxu0 0.0
      %2197 = vmatpush1.msra.mxu0 %v2171
      %2198 = vmatprep.subr.mxu0 0.0
      %2199 = vmatpush1.msra.mxu0 0.0
      %2200 = vmatprep.subr.mxu0 0.0
      %2201 = vmatpush1.msra.mxu0 0.0
      %2202 = vmatprep.subr.mxu0 0.0
      %2203 = vmatpush1.msra.mxu0 0.0
      %2204 = vmatprep.subr.mxu0 0.0
      %2205 = vmatpush1.msra.mxu0 0.0
      %2206 = vmatprep.subr.mxu0 0.0
      %2207 = vmatpush1.msra.mxu0 0.0
      %2208 = vmatprep.subr.mxu0 0.0
      %2209 = vmatpush1.msra.mxu0 0.0
      %2210 = vmatprep.subr.mxu0 0.0
      %2211 = vmatpush1.msra.mxu0 0.0
      %2212 = vmatprep.subr.mxu0 0.0
      %2213 = vmatpush1.msra.mxu0 0.0
      %2214 = vmatprep.subr.mxu0 0.0
      %2215 = vmatpush1.msra.mxu0 0.0
      %2216 = vmatprep.subr.mxu0 0.0
      %2217 = vmatpush1.msra.mxu0 0.0
      %2218 = vmatprep.subr.mxu0 0.0
      %2219 = vmatpush1.msra.mxu0 0.0
      %2220 = vmatprep.subr.mxu0 0.0
      %2221 = vmatpush1.msra.mxu0 0.0
      %2222 = vmatprep.subr.mxu0 0.0
      %2223 = vmatpush1.msra.mxu0 0.0
      %2224 = vmatprep.subr.mxu0 0.0
      %2225 = vmatpush1.msra.mxu0 0.0
      %2226 = vmatprep.subr.mxu0 0.0
      %2227 = vmatpush1.msra.mxu0 0.0
      %2228 = vmatprep.subr.mxu0 0.0
      %2229 = vmatpush1.msra.mxu0 0.0
      %2230 = vmatprep.subr.mxu0 0.0
      %2231 = vmatpush1.msra.mxu0 0.0
      %2232 = vmatprep.subr.mxu0 0.0
      %2233 = vmatpush1.msra.mxu0 0.0
      %2234 = vmatprep.subr.mxu0 0.0
      %2235 = vmatpush1.msra.mxu0 0.0
      %2236 = vmatprep.subr.mxu0 0.0
      %2237 = vmatpush1.msra.mxu0 0.0
      %2238 = vmatprep.subr.mxu0 0.0
      %2239 = vmatpush1.msra.mxu0 0.0
      %2240 = vmatprep.subr.mxu0 0.0
      %2241 = vmatpush1.msra.mxu0 0.0
      %2242 = vmatprep.subr.mxu0 0.0
      %2243 = vmatpush1.msra.mxu0 0.0
      %2244 = vmatprep.subr.mxu0 0.0
      %2245 = vmatpush1.msra.mxu0 0.0
      %2246 = vmatprep.subr.mxu0 0.0
      %2247 = vmatpush1.msra.mxu0 0.0
      %2248 = vmatprep.subr.mxu0 0.0
      %2249 = vmatpush1.msra.mxu0 0.0
      %2250 = vmatprep.subr.mxu0 0.0
      %2251 = vmatpush1.msra.mxu0 0.0
      %2252 = vmatprep.subr.mxu0 0.0
      %2253 = vmatpush1.msra.mxu0 0.0
      %2254 = vmatprep.subr.mxu0 0.0
      %2255 = vmatpush1.msra.mxu0 0.0
      %2256 = vmatprep.subr.mxu0 0.0
      %2257 = vmatpush1.msra.mxu0 0.0
      %2258 = vmatprep.subr.mxu0 0.0
      %2259 = vmatpush1.msra.mxu0 0.0
      %2260 = vmatprep.mubr.f32.mxu0 0.0
      %2261 = vmatmul.mubr.f32.gmra.mrb[0].mxu0 %v2173
      %v2262 = vpop.f32.mrb[0].mxu0
      %v2263 = vadd.f32 0.0, %v2262
      %v2264 = vpop.f32.mrb[0].mxu0
      %2265 = vmatprep.mubr.f32.mxu0 0.0
      %2266 = vmatmul.mubr.f32.gmra.mrb[0].mxu0 %v2176
      %v2267 = vpop.f32.mrb[0].mxu0
      %v2268 = vadd.f32 0.0, %v2267
      %v2269 = vpop.f32.mrb[0].mxu0
      %2270 = vmatprep.mubr.f32.mxu0 0.0
      %2271 = vmatmul.mubr.f32.gmra.mrb[0].mxu0 %v2179
      %v2272 = vpop.f32.mrb[0].mxu0
      %v2273 = vadd.f32 0.0, %v2272
      %v2274 = vpop.f32.mrb[0].mxu0
      %2275 = vmatprep.mubr.f32.mxu0 0.0
      %2276 = vmatmul.mubr.f32.gmra.mrb[0].mxu0 %v2182
      %v2277 = vpop.f32.mrb[0].mxu0
      %v2278 = vadd.f32 0.0, %v2277
      %v2279 = vpop.f32.mrb[0].mxu0
      %2280 = vmatprep.mubr.f32.mxu0 0.0
      %2281 = vmatmul.mubr.f32.gmra.mrb[0].mxu0 %v2185
      %v2282 = vpop.f32.mrb[0].mxu0
      %v2283 = vadd.f32 0.0, %v2282
      %v2284 = vpop.f32.mrb[0].mxu0
      %2285 = vmatprep.mubr.f32.mxu0 0.0
      %2286 = vmatmul.mubr.f32.gmra.mrb[0].mxu0 %v2188
      %v2287 = vpop.f32.mrb[0].mxu0
      %v2288 = vadd.f32 0.0, %v2287
      %v2289 = vpop.f32.mrb[0].mxu0
      %2290 = vmatprep.mubr.f32.mxu0 0.0
      %2291 = vmatmul.mubr.f32.gmra.mrb[0].mxu0 %v2191
      %v2292 = vpop.f32.mrb[0].mxu0
      %v2293 = vadd.f32 0.0, %v2292
      %v2294 = vpop.f32.mrb[0].mxu0
      %2295 = vmatprep.mubr.f32.mxu0 0.0
      %2296 = vmatmul.mubr.f32.gmra.mrb[0].mxu0 %v2194
      %v2297 = vpop.f32.mrb[0].mxu0
      %v2298 = vadd.f32 0.0, %v2297
      %v2299 = vpop.f32.mrb[0].mxu0
      %2300 = vdwg.mxu0
      %v2301 = vadd.f32 %v2100, %v2263
      %v2302 = vadd.f32 %v2101, %v2268
      %v2303 = vadd.f32 %v2102, %v2273
      %v2304 = vadd.f32 %v2103, %v2278
      %v2305 = vadd.f32 %v2104, %v2283
      %v2306 = vadd.f32 %v2105, %v2288
      %v2307 = vadd.f32 %v2106, %v2293
      %v2308 = vadd.f32 %v2107, %v2298
      %v2309 = vld [vmem:[#allocation2 + $0x1] sm:$0xff]
      %v2310 = vld [vmem:[#allocation2 + $0x11] sm:$0xff]
      %v2311 = vld [vmem:[#allocation2 + $0x21] sm:$0xff]
      %v2312 = vld [vmem:[#allocation2 + $0x31] sm:$0xff]
      %v2313 = vld [vmem:[#allocation2 + $0x41] sm:$0xff]
      %v2314 = vld [vmem:[#allocation2 + $0x51] sm:$0xff]
      %v2315 = vld [vmem:[#allocation2 + $0x61] sm:$0xff]
      %v2316 = vld [vmem:[#allocation2 + $0x71] sm:$0xff]
      %s2317 = scalar_lea.vmem %s6, 8
      %v2318 = vld [vmem:[%s2317] sm:$0xff]
      %v2320 = vsel %vm2132, %v2309, 0
      %v2323 = vsel %vm2132, %v2310, 0
      %v2326 = vsel %vm2132, %v2311, 0
      %v2329 = vsel %vm2132, %v2312, 0
      %v2332 = vsel %vm2132, %v2313, 0
      %v2335 = vsel %vm2132, %v2314, 0
      %v2338 = vsel %vm2132, %v2315, 0
      %v2341 = vsel %vm2132, %v2316, 0
      %2343 = vmatprep.subr.mxu0 0.0
      %2344 = vmatpush1.msra.mxu0 %v2318
      %2345 = vmatprep.subr.mxu0 0.0
      %2346 = vmatpush1.msra.mxu0 0.0
      %2347 = vmatprep.subr.mxu0 0.0
      %2348 = vmatpush1.msra.mxu0 0.0
      %2349 = vmatprep.subr.mxu0 0.0
      %2350 = vmatpush1.msra.mxu0 0.0
      %2351 = vmatprep.subr.mxu0 0.0
      %2352 = vmatpush1.msra.mxu0 0.0
      %2353 = vmatprep.subr.mxu0 0.0
      %2354 = vmatpush1.msra.mxu0 0.0
      %2355 = vmatprep.subr.mxu0 0.0
      %2356 = vmatpush1.msra.mxu0 0.0
      %2357 = vmatprep.subr.mxu0 0.0
      %2358 = vmatpush1.msra.mxu0 0.0
      %2359 = vmatprep.subr.mxu0 0.0
      %2360 = vmatpush1.msra.mxu0 0.0
      %2361 = vmatprep.subr.mxu0 0.0
      %2362 = vmatpush1.msra.mxu0 0.0
      %2363 = vmatprep.subr.mxu0 0.0
      %2364 = vmatpush1.msra.mxu0 0.0
      %2365 = vmatprep.subr.mxu0 0.0
      %2366 = vmatpush1.msra.mxu0 0.0
      %2367 = vmatprep.subr.mxu0 0.0
      %2368 = vmatpush1.msra.mxu0 0.0
      %2369 = vmatprep.subr.mxu0 0.0
      %2370 = vmatpush1.msra.mxu0 0.0
      %2371 = vmatprep.subr.mxu0 0.0
      %2372 = vmatpush1.msra.mxu0 0.0
      %2373 = vmatprep.subr.mxu0 0.0
      %2374 = vmatpush1.msra.mxu0 0.0
      %2375 = vmatprep.subr.mxu0 0.0
      %2376 = vmatpush1.msra.mxu0 0.0
      %2377 = vmatprep.subr.mxu0 0.0
      %2378 = vmatpush1.msra.mxu0 0.0
      %2379 = vmatprep.subr.mxu0 0.0
      %2380 = vmatpush1.msra.mxu0 0.0
      %2381 = vmatprep.subr.mxu0 0.0
      %2382 = vmatpush1.msra.mxu0 0.0
      %2383 = vmatprep.subr.mxu0 0.0
      %2384 = vmatpush1.msra.mxu0 0.0
      %2385 = vmatprep.subr.mxu0 0.0
      %2386 = vmatpush1.msra.mxu0 0.0
      %2387 = vmatprep.subr.mxu0 0.0
      %2388 = vmatpush1.msra.mxu0 0.0
      %2389 = vmatprep.subr.mxu0 0.0
      %2390 = vmatpush1.msra.mxu0 0.0
      %2391 = vmatprep.subr.mxu0 0.0
      %2392 = vmatpush1.msra.mxu0 0.0
      %2393 = vmatprep.subr.mxu0 0.0
      %2394 = vmatpush1.msra.mxu0 0.0
      %2395 = vmatprep.subr.mxu0 0.0
      %2396 = vmatpush1.msra.mxu0 0.0
      %2397 = vmatprep.subr.mxu0 0.0
      %2398 = vmatpush1.msra.mxu0 0.0
      %2399 = vmatprep.subr.mxu0 0.0
      %2400 = vmatpush1.msra.mxu0 0.0
      %2401 = vmatprep.subr.mxu0 0.0
      %2402 = vmatpush1.msra.mxu0 0.0
      %2403 = vmatprep.subr.mxu0 0.0
      %2404 = vmatpush1.msra.mxu0 0.0
      %2405 = vmatprep.subr.mxu0 0.0
      %2406 = vmatpush1.msra.mxu0 0.0
      %2407 = vmatprep.mubr.f32.mxu0 0.0
      %2408 = vmatmul.mubr.f32.gmra.mrb[0].mxu0 %v2320
      %v2409 = vpop.f32.mrb[0].mxu0
      %v2410 = vadd.f32 0.0, %v2409
      %v2411 = vpop.f32.mrb[0].mxu0
      %2412 = vmatprep.mubr.f32.mxu0 0.0
      %2413 = vmatmul.mubr.f32.gmra.mrb[0].mxu0 %v2323
      %v2414 = vpop.f32.mrb[0].mxu0
      %v2415 = vadd.f32 0.0, %v2414
      %v2416 = vpop.f32.mrb[0].mxu0
      %2417 = vmatprep.mubr.f32.mxu0 0.0
      %2418 = vmatmul.mubr.f32.gmra.mrb[0].mxu0 %v2326
      %v2419 = vpop.f32.mrb[0].mxu0
      %v2420 = vadd.f32 0.0, %v2419
      %v2421 = vpop.f32.mrb[0].mxu0
      %2422 = vmatprep.mubr.f32.mxu0 0.0
      %2423 = vmatmul.mubr.f32.gmra.mrb[0].mxu0 %v2329
      %v2424 = vpop.f32.mrb[0].mxu0
      %v2425 = vadd.f32 0.0, %v2424
      %v2426 = vpop.f32.mrb[0].mxu0
      %2427 = vmatprep.mubr.f32.mxu0 0.0
      %2428 = vmatmul.mubr.f32.gmra.mrb[0].mxu0 %v2332
      %v2429 = vpop.f32.mrb[0].mxu0
      %v2430 = vadd.f32 0.0, %v2429
      %v2431 = vpop.f32.mrb[0].mxu0
      %2432 = vmatprep.mubr.f32.mxu0 0.0
      %2433 = vmatmul.mubr.f32.gmra.mrb[0].mxu0 %v2335
      %v2434 = vpop.f32.mrb[0].mxu0
      %v2435 = vadd.f32 0.0, %v2434
      %v2436 = vpop.f32.mrb[0].mxu0
      %2437 = vmatprep.mubr.f32.mxu0 0.0
      %2438 = vmatmul.mubr.f32.gmra.mrb[0].mxu0 %v2338
      %v2439 = vpop.f32.mrb[0].mxu0
      %v2440 = vadd.f32 0.0, %v2439
      %v2441 = vpop.f32.mrb[0].mxu0
      %2442 = vmatprep.mubr.f32.mxu0 0.0
      %2443 = vmatmul.mubr.f32.gmra.mrb[0].mxu0 %v2341
      %v2444 = vpop.f32.mrb[0].mxu0
      %v2445 = vadd.f32 0.0, %v2444
      %v2446 = vpop.f32.mrb[0].mxu0
      %2447 = vdwg.mxu0
      %v2448 = vadd.f32 %v2301, %v2410
      %v2449 = vadd.f32 %v2302, %v2415
      %v2450 = vadd.f32 %v2303, %v2420
      %v2451 = vadd.f32 %v2304, %v2425
      %v2452 = vadd.f32 %v2305, %v2430
      %v2453 = vadd.f32 %v2306, %v2435
      %v2454 = vadd.f32 %v2307, %v2440
      %v2455 = vadd.f32 %v2308, %v2445
      %v2456 = vld [vmem:[#allocation2 + $0x2] sm:$0xff]
      %v2457 = vld [vmem:[#allocation2 + $0x12] sm:$0xff]
      %v2458 = vld [vmem:[#allocation2 + $0x22] sm:$0xff]
      %v2459 = vld [vmem:[#allocation2 + $0x32] sm:$0xff]
      %v2460 = vld [vmem:[#allocation2 + $0x42] sm:$0xff]
      %v2461 = vld [vmem:[#allocation2 + $0x52] sm:$0xff]
      %v2462 = vld [vmem:[#allocation2 + $0x62] sm:$0xff]
      %v2463 = vld [vmem:[#allocation2 + $0x72] sm:$0xff]
      %s2464 = scalar_lea.vmem %s6, 16
      %v2465 = vld [vmem:[%s2464] sm:$0xff]
      %v2467 = vsel %vm2132, %v2456, 0
      %v2470 = vsel %vm2132, %v2457, 0
      %v2473 = vsel %vm2132, %v2458, 0
      %v2476 = vsel %vm2132, %v2459, 0
      %v2479 = vsel %vm2132, %v2460, 0
      %v2482 = vsel %vm2132, %v2461, 0
      %v2485 = vsel %vm2132, %v2462, 0
      %v2488 = vsel %vm2132, %v2463, 0
      %2490 = vmatprep.subr.mxu0 0.0
      %2491 = vmatpush1.msra.mxu0 %v2465
      %2492 = vmatprep.subr.mxu0 0.0
      %2493 = vmatpush1.msra.mxu0 0.0
      %2494 = vmatprep.subr.mxu0 0.0
      %2495 = vmatpush1.msra.mxu0 0.0
      %2496 = vmatprep.subr.mxu0 0.0
      %2497 = vmatpush1.msra.mxu0 0.0
      %2498 = vmatprep.subr.mxu0 0.0
      %2499 = vmatpush1.msra.mxu0 0.0
      %2500 = vmatprep.subr.mxu0 0.0
      %2501 = vmatpush1.msra.mxu0 0.0
      %2502 = vmatprep.subr.mxu0 0.0
      %2503 = vmatpush1.msra.mxu0 0.0
      %2504 = vmatprep.subr.mxu0 0.0
      %2505 = vmatpush1.msra.mxu0 0.0
      %2506 = vmatprep.subr.mxu0 0.0
      %2507 = vmatpush1.msra.mxu0 0.0
      %2508 = vmatprep.subr.mxu0 0.0
      %2509 = vmatpush1.msra.mxu0 0.0
      %2510 = vmatprep.subr.mxu0 0.0
      %2511 = vmatpush1.msra.mxu0 0.0
      %2512 = vmatprep.subr.mxu0 0.0
      %2513 = vmatpush1.msra.mxu0 0.0
      %2514 = vmatprep.subr.mxu0 0.0
      %2515 = vmatpush1.msra.mxu0 0.0
      %2516 = vmatprep.subr.mxu0 0.0
      %2517 = vmatpush1.msra.mxu0 0.0
      %2518 = vmatprep.subr.mxu0 0.0
      %2519 = vmatpush1.msra.mxu0 0.0
      %2520 = vmatprep.subr.mxu0 0.0
      %2521 = vmatpush1.msra.mxu0 0.0
      %2522 = vmatprep.subr.mxu0 0.0
      %2523 = vmatpush1.msra.mxu0 0.0
      %2524 = vmatprep.subr.mxu0 0.0
      %2525 = vmatpush1.msra.mxu0 0.0
      %2526 = vmatprep.subr.mxu0 0.0
      %2527 = vmatpush1.msra.mxu0 0.0
      %2528 = vmatprep.subr.mxu0 0.0
      %2529 = vmatpush1.msra.mxu0 0.0
      %2530 = vmatprep.subr.mxu0 0.0
      %2531 = vmatpush1.msra.mxu0 0.0
      %2532 = vmatprep.subr.mxu0 0.0
      %2533 = vmatpush1.msra.mxu0 0.0
      %2534 = vmatprep.subr.mxu0 0.0
      %2535 = vmatpush1.msra.mxu0 0.0
      %2536 = vmatprep.subr.mxu0 0.0
      %2537 = vmatpush1.msra.mxu0 0.0
      %2538 = vmatprep.subr.mxu0 0.0
      %2539 = vmatpush1.msra.mxu0 0.0
      %2540 = vmatprep.subr.mxu0 0.0
      %2541 = vmatpush1.msra.mxu0 0.0
      %2542 = vmatprep.subr.mxu0 0.0
      %2543 = vmatpush1.msra.mxu0 0.0
      %2544 = vmatprep.subr.mxu0 0.0
      %2545 = vmatpush1.msra.mxu0 0.0
      %2546 = vmatprep.subr.mxu0 0.0
      %2547 = vmatpush1.msra.mxu0 0.0
      %2548 = vmatprep.subr.mxu0 0.0
      %2549 = vmatpush1.msra.mxu0 0.0
      %2550 = vmatprep.subr.mxu0 0.0
      %2551 = vmatpush1.msra.mxu0 0.0
      %2552 = vmatprep.subr.mxu0 0.0
      %2553 = vmatpush1.msra.mxu0 0.0
      %2554 = vmatprep.mubr.f32.mxu0 0.0
      %2555 = vmatmul.mubr.f32.gmra.mrb[0].mxu0 %v2467
      %v2556 = vpop.f32.mrb[0].mxu0
      %v2557 = vadd.f32 0.0, %v2556
      %v2558 = vpop.f32.mrb[0].mxu0
      %2559 = vmatprep.mubr.f32.mxu0 0.0
      %2560 = vmatmul.mubr.f32.gmra.mrb[0].mxu0 %v2470
      %v2561 = vpop.f32.mrb[0].mxu0
      %v2562 = vadd.f32 0.0, %v2561
      %v2563 = vpop.f32.mrb[0].mxu0
      %2564 = vmatprep.mubr.f32.mxu0 0.0
      %2565 = vmatmul.mubr.f32.gmra.mrb[0].mxu0 %v2473
      %v2566 = vpop.f32.mrb[0].mxu0
      %v2567 = vadd.f32 0.0, %v2566
      %v2568 = vpop.f32.mrb[0].mxu0
      %2569 = vmatprep.mubr.f32.mxu0 0.0
      %2570 = vmatmul.mubr.f32.gmra.mrb[0].mxu0 %v2476
      %v2571 = vpop.f32.mrb[0].mxu0
      %v2572 = vadd.f32 0.0, %v2571
      %v2573 = vpop.f32.mrb[0].mxu0
      %2574 = vmatprep.mubr.f32.mxu0 0.0
      %2575 = vmatmul.mubr.f32.gmra.mrb[0].mxu0 %v2479
      %v2576 = vpop.f32.mrb[0].mxu0
      %v2577 = vadd.f32 0.0, %v2576
      %v2578 = vpop.f32.mrb[0].mxu0
      %2579 = vmatprep.mubr.f32.mxu0 0.0
      %2580 = vmatmul.mubr.f32.gmra.mrb[0].mxu0 %v2482
      %v2581 = vpop.f32.mrb[0].mxu0
      %v2582 = vadd.f32 0.0, %v2581
      %v2583 = vpop.f32.mrb[0].mxu0
      %2584 = vmatprep.mubr.f32.mxu0 0.0
      %2585 = vmatmul.mubr.f32.gmra.mrb[0].mxu0 %v2485
      %v2586 = vpop.f32.mrb[0].mxu0
      %v2587 = vadd.f32 0.0, %v2586
      %v2588 = vpop.f32.mrb[0].mxu0
      %2589 = vmatprep.mubr.f32.mxu0 0.0
      %2590 = vmatmul.mubr.f32.gmra.mrb[0].mxu0 %v2488
      %v2591 = vpop.f32.mrb[0].mxu0
      %v2592 = vadd.f32 0.0, %v2591
      %v2593 = vpop.f32.mrb[0].mxu0
      %2594 = vdwg.mxu0
      %v2595 = vadd.f32 %v2448, %v2557
      %v2596 = vadd.f32 %v2449, %v2562
      %v2597 = vadd.f32 %v2450, %v2567
      %v2598 = vadd.f32 %v2451, %v2572
      %v2599 = vadd.f32 %v2452, %v2577
      %v2600 = vadd.f32 %v2453, %v2582
      %v2601 = vadd.f32 %v2454, %v2587
      %v2602 = vadd.f32 %v2455, %v2592
      %v2603 = vld [vmem:[%s2154] sm:$0xff]
      %v2604 = vld [vmem:[%s2154 + $0x10] sm:$0xff]
      %v2605 = vld [vmem:[%s2154 + $0x20] sm:$0xff]
      %v2606 = vld [vmem:[%s2154 + $0x30] sm:$0xff]
      %v2607 = vld [vmem:[%s2154 + $0x40] sm:$0xff]
      %v2608 = vld [vmem:[%s2154 + $0x50] sm:$0xff]
      %v2609 = vld [vmem:[%s2154 + $0x60] sm:$0xff]
      %v2610 = vld [vmem:[%s2154 + $0x70] sm:$0xff]
      %s2611 = scalar_lea.vmem %s6, 24
      %v2612 = vld [vmem:[%s2611] sm:$0xff]
      %v2614 = vsel %vm2132, %v2603, 0
      %v2617 = vsel %vm2132, %v2604, 0
      %v2620 = vsel %vm2132, %v2605, 0
      %v2623 = vsel %vm2132, %v2606, 0
      %v2626 = vsel %vm2132, %v2607, 0
      %v2629 = vsel %vm2132, %v2608, 0
      %v2632 = vsel %vm2132, %v2609, 0
      %v2635 = vsel %vm2132, %v2610, 0
      %2637 = vmatprep.subr.mxu0 0.0
      %2638 = vmatpush1.msra.mxu0 %v2612
      %2639 = vmatprep.subr.mxu0 0.0
      %2640 = vmatpush1.msra.mxu0 0.0
      %2641 = vmatprep.subr.mxu0 0.0
      %2642 = vmatpush1.msra.mxu0 0.0
      %2643 = vmatprep.subr.mxu0 0.0
      %2644 = vmatpush1.msra.mxu0 0.0
      %2645 = vmatprep.subr.mxu0 0.0
      %2646 = vmatpush1.msra.mxu0 0.0
      %2647 = vmatprep.subr.mxu0 0.0
      %2648 = vmatpush1.msra.mxu0 0.0
      %2649 = vmatprep.subr.mxu0 0.0
      %2650 = vmatpush1.msra.mxu0 0.0
      %2651 = vmatprep.subr.mxu0 0.0
      %2652 = vmatpush1.msra.mxu0 0.0
      %2653 = vmatprep.subr.mxu0 0.0
      %2654 = vmatpush1.msra.mxu0 0.0
      %2655 = vmatprep.subr.mxu0 0.0
      %2656 = vmatpush1.msra.mxu0 0.0
      %2657 = vmatprep.subr.mxu0 0.0
      %2658 = vmatpush1.msra.mxu0 0.0
      %2659 = vmatprep.subr.mxu0 0.0
      %2660 = vmatpush1.msra.mxu0 0.0
      %2661 = vmatprep.subr.mxu0 0.0
      %2662 = vmatpush1.msra.mxu0 0.0
      %2663 = vmatprep.subr.mxu0 0.0
      %2664 = vmatpush1.msra.mxu0 0.0
      %2665 = vmatprep.subr.mxu0 0.0
      %2666 = vmatpush1.msra.mxu0 0.0
      %2667 = vmatprep.subr.mxu0 0.0
      %2668 = vmatpush1.msra.mxu0 0.0
      %2669 = vmatprep.subr.mxu0 0.0
      %2670 = vmatpush1.msra.mxu0 0.0
      %2671 = vmatprep.subr.mxu0 0.0
      %2672 = vmatpush1.msra.mxu0 0.0
      %2673 = vmatprep.subr.mxu0 0.0
      %2674 = vmatpush1.msra.mxu0 0.0
      %2675 = vmatprep.subr.mxu0 0.0
      %2676 = vmatpush1.msra.mxu0 0.0
      %2677 = vmatprep.subr.mxu0 0.0
      %2678 = vmatpush1.msra.mxu0 0.0
      %2679 = vmatprep.subr.mxu0 0.0
      %2680 = vmatpush1.msra.mxu0 0.0
      %2681 = vmatprep.subr.mxu0 0.0
      %2682 = vmatpush1.msra.mxu0 0.0
      %2683 = vmatprep.subr.mxu0 0.0
      %2684 = vmatpush1.msra.mxu0 0.0
      %2685 = vmatprep.subr.mxu0 0.0
      %2686 = vmatpush1.msra.mxu0 0.0
      %2687 = vmatprep.subr.mxu0 0.0
      %2688 = vmatpush1.msra.mxu0 0.0
      %2689 = vmatprep.subr.mxu0 0.0
      %2690 = vmatpush1.msra.mxu0 0.0
      %2691 = vmatprep.subr.mxu0 0.0
      %2692 = vmatpush1.msra.mxu0 0.0
      %2693 = vmatprep.subr.mxu0 0.0
      %2694 = vmatpush1.msra.mxu0 0.0
      %2695 = vmatprep.subr.mxu0 0.0
      %2696 = vmatpush1.msra.mxu0 0.0
      %2697 = vmatprep.subr.mxu0 0.0
      %2698 = vmatpush1.msra.mxu0 0.0
      %2699 = vmatprep.subr.mxu0 0.0
      %2700 = vmatpush1.msra.mxu0 0.0
      %2701 = vmatprep.mubr.f32.mxu0 0.0
      %2702 = vmatmul.mubr.f32.gmra.mrb[0].mxu0 %v2614
      %v2703 = vpop.f32.mrb[0].mxu0
      %v2704 = vadd.f32 0.0, %v2703
      %v2705 = vpop.f32.mrb[0].mxu0
      %2706 = vmatprep.mubr.f32.mxu0 0.0
      %2707 = vmatmul.mubr.f32.gmra.mrb[0].mxu0 %v2617
      %v2708 = vpop.f32.mrb[0].mxu0
      %v2709 = vadd.f32 0.0, %v2708
      %v2710 = vpop.f32.mrb[0].mxu0
      %2711 = vmatprep.mubr.f32.mxu0 0.0
      %2712 = vmatmul.mubr.f32.gmra.mrb[0].mxu0 %v2620
      %v2713 = vpop.f32.mrb[0].mxu0
      %v2714 = vadd.f32 0.0, %v2713
      %v2715 = vpop.f32.mrb[0].mxu0
      %2716 = vmatprep.mubr.f32.mxu0 0.0
      %2717 = vmatmul.mubr.f32.gmra.mrb[0].mxu0 %v2623
      %v2718 = vpop.f32.mrb[0].mxu0
      %v2719 = vadd.f32 0.0, %v2718
      %v2720 = vpop.f32.mrb[0].mxu0
      %2721 = vmatprep.mubr.f32.mxu0 0.0
      %2722 = vmatmul.mubr.f32.gmra.mrb[0].mxu0 %v2626
      %v2723 = vpop.f32.mrb[0].mxu0
      %v2724 = vadd.f32 0.0, %v2723
      %v2725 = vpop.f32.mrb[0].mxu0
      %2726 = vmatprep.mubr.f32.mxu0 0.0
      %2727 = vmatmul.mubr.f32.gmra.mrb[0].mxu0 %v2629
      %v2728 = vpop.f32.mrb[0].mxu0
      %v2729 = vadd.f32 0.0, %v2728
      %v2730 = vpop.f32.mrb[0].mxu0
      %2731 = vmatprep.mubr.f32.mxu0 0.0
      %2732 = vmatmul.mubr.f32.gmra.mrb[0].mxu0 %v2632
      %v2733 = vpop.f32.mrb[0].mxu0
      %v2734 = vadd.f32 0.0, %v2733
      %v2735 = vpop.f32.mrb[0].mxu0
      %2736 = vmatprep.mubr.f32.mxu0 0.0
      %2737 = vmatmul.mubr.f32.gmra.mrb[0].mxu0 %v2635
      %v2738 = vpop.f32.mrb[0].mxu0
      %v2739 = vadd.f32 0.0, %v2738
      %v2740 = vpop.f32.mrb[0].mxu0
      %2741 = vdwg.mxu0
      %v2742 = vadd.f32 %v2595, %v2704
      %v2743 = vadd.f32 %v2596, %v2709
      %v2744 = vadd.f32 %v2597, %v2714
      %v2745 = vadd.f32 %v2598, %v2719
      %v2746 = vadd.f32 %v2599, %v2724
      %v2747 = vadd.f32 %v2600, %v2729
      %v2748 = vadd.f32 %v2601, %v2734
      %v2749 = vadd.f32 %v2602, %v2739
      %v2750 = vld [vmem:[%s2154 + $0x1] sm:$0xff]
      %v2751 = vld [vmem:[%s2154 + $0x11] sm:$0xff]
      %v2752 = vld [vmem:[%s2154 + $0x21] sm:$0xff]
      %v2753 = vld [vmem:[%s2154 + $0x31] sm:$0xff]
      %v2754 = vld [vmem:[%s2154 + $0x41] sm:$0xff]
      %v2755 = vld [vmem:[%s2154 + $0x51] sm:$0xff]
      %v2756 = vld [vmem:[%s2154 + $0x61] sm:$0xff]
      %v2757 = vld [vmem:[%s2154 + $0x71] sm:$0xff]
      %s2758 = scalar_lea.vmem %s6, 32
      %v2759 = vld [vmem:[%s2758] sm:$0xff]
      %v2761 = vsel %vm2132, %v2750, 0
      %v2764 = vsel %vm2132, %v2751, 0
      %v2767 = vsel %vm2132, %v2752, 0
      %v2770 = vsel %vm2132, %v2753, 0
      %v2773 = vsel %vm2132, %v2754, 0
      %v2776 = vsel %vm2132, %v2755, 0
      %v2779 = vsel %vm2132, %v2756, 0
      %v2782 = vsel %vm2132, %v2757, 0
      %2784 = vmatprep.subr.mxu0 0.0
      %2785 = vmatpush1.msra.mxu0 %v2759
      %2786 = vmatprep.subr.mxu0 0.0
      %2787 = vmatpush1.msra.mxu0 0.0
      %2788 = vmatprep.subr.mxu0 0.0
      %2789 = vmatpush1.msra.mxu0 0.0
      %2790 = vmatprep.subr.mxu0 0.0
      %2791 = vmatpush1.msra.mxu0 0.0
      %2792 = vmatprep.subr.mxu0 0.0
      %2793 = vmatpush1.msra.mxu0 0.0
      %2794 = vmatprep.subr.mxu0 0.0
      %2795 = vmatpush1.msra.mxu0 0.0
      %2796 = vmatprep.subr.mxu0 0.0
      %2797 = vmatpush1.msra.mxu0 0.0
      %2798 = vmatprep.subr.mxu0 0.0
      %2799 = vmatpush1.msra.mxu0 0.0
      %2800 = vmatprep.subr.mxu0 0.0
      %2801 = vmatpush1.msra.mxu0 0.0
      %2802 = vmatprep.subr.mxu0 0.0
      %2803 = vmatpush1.msra.mxu0 0.0
      %2804 = vmatprep.subr.mxu0 0.0
      %2805 = vmatpush1.msra.mxu0 0.0
      %2806 = vmatprep.subr.mxu0 0.0
      %2807 = vmatpush1.msra.mxu0 0.0
      %2808 = vmatprep.subr.mxu0 0.0
      %2809 = vmatpush1.msra.mxu0 0.0
      %2810 = vmatprep.subr.mxu0 0.0
      %2811 = vmatpush1.msra.mxu0 0.0
      %2812 = vmatprep.subr.mxu0 0.0
      %2813 = vmatpush1.msra.mxu0 0.0
      %2814 = vmatprep.subr.mxu0 0.0
      %2815 = vmatpush1.msra.mxu0 0.0
      %2816 = vmatprep.subr.mxu0 0.0
      %2817 = vmatpush1.msra.mxu0 0.0
      %2818 = vmatprep.subr.mxu0 0.0
      %2819 = vmatpush1.msra.mxu0 0.0
      %2820 = vmatprep.subr.mxu0 0.0
      %2821 = vmatpush1.msra.mxu0 0.0
      %2822 = vmatprep.subr.mxu0 0.0
      %2823 = vmatpush1.msra.mxu0 0.0
      %2824 = vmatprep.subr.mxu0 0.0
      %2825 = vmatpush1.msra.mxu0 0.0
      %2826 = vmatprep.subr.mxu0 0.0
      %2827 = vmatpush1.msra.mxu0 0.0
      %2828 = vmatprep.subr.mxu0 0.0
      %2829 = vmatpush1.msra.mxu0 0.0
      %2830 = vmatprep.subr.mxu0 0.0
      %2831 = vmatpush1.msra.mxu0 0.0
      %2832 = vmatprep.subr.mxu0 0.0
      %2833 = vmatpush1.msra.mxu0 0.0
      %2834 = vmatprep.subr.mxu0 0.0
      %2835 = vmatpush1.msra.mxu0 0.0
      %2836 = vmatprep.subr.mxu0 0.0
      %2837 = vmatpush1.msra.mxu0 0.0
      %2838 = vmatprep.subr.mxu0 0.0
      %2839 = vmatpush1.msra.mxu0 0.0
      %2840 = vmatprep.subr.mxu0 0.0
      %2841 = vmatpush1.msra.mxu0 0.0
      %2842 = vmatprep.subr.mxu0 0.0
      %2843 = vmatpush1.msra.mxu0 0.0
      %2844 = vmatprep.subr.mxu0 0.0
      %2845 = vmatpush1.msra.mxu0 0.0
      %2846 = vmatprep.subr.mxu0 0.0
      %2847 = vmatpush1.msra.mxu0 0.0
      %2848 = vmatprep.mubr.f32.mxu0 0.0
      %2849 = vmatmul.mubr.f32.gmra.mrb[0].mxu0 %v2761
      %v2850 = vpop.f32.mrb[0].mxu0
      %v2851 = vadd.f32 0.0, %v2850
      %v2852 = vpop.f32.mrb[0].mxu0
      %2853 = vmatprep.mubr.f32.mxu0 0.0
      %2854 = vmatmul.mubr.f32.gmra.mrb[0].mxu0 %v2764
      %v2855 = vpop.f32.mrb[0].mxu0
      %v2856 = vadd.f32 0.0, %v2855
      %v2857 = vpop.f32.mrb[0].mxu0
      %2858 = vmatprep.mubr.f32.mxu0 0.0
      %2859 = vmatmul.mubr.f32.gmra.mrb[0].mxu0 %v2767
      %v2860 = vpop.f32.mrb[0].mxu0
      %v2861 = vadd.f32 0.0, %v2860
      %v2862 = vpop.f32.mrb[0].mxu0
      %2863 = vmatprep.mubr.f32.mxu0 0.0
      %2864 = vmatmul.mubr.f32.gmra.mrb[0].mxu0 %v2770
      %v2865 = vpop.f32.mrb[0].mxu0
      %v2866 = vadd.f32 0.0, %v2865
      %v2867 = vpop.f32.mrb[0].mxu0
      %2868 = vmatprep.mubr.f32.mxu0 0.0
      %2869 = vmatmul.mubr.f32.gmra.mrb[0].mxu0 %v2773
      %v2870 = vpop.f32.mrb[0].mxu0
      %v2871 = vadd.f32 0.0, %v2870
      %v2872 = vpop.f32.mrb[0].mxu0
      %2873 = vmatprep.mubr.f32.mxu0 0.0
      %2874 = vmatmul.mubr.f32.gmra.mrb[0].mxu0 %v2776
      %v2875 = vpop.f32.mrb[0].mxu0
      %v2876 = vadd.f32 0.0, %v2875
      %v2877 = vpop.f32.mrb[0].mxu0
      %2878 = vmatprep.mubr.f32.mxu0 0.0
      %2879 = vmatmul.mubr.f32.gmra.mrb[0].mxu0 %v2779
      %v2880 = vpop.f32.mrb[0].mxu0
      %v2881 = vadd.f32 0.0, %v2880
      %v2882 = vpop.f32.mrb[0].mxu0
      %2883 = vmatprep.mubr.f32.mxu0 0.0
      %2884 = vmatmul.mubr.f32.gmra.mrb[0].mxu0 %v2782
      %v2885 = vpop.f32.mrb[0].mxu0
      %v2886 = vadd.f32 0.0, %v2885
      %v2887 = vpop.f32.mrb[0].mxu0
      %2888 = vdwg.mxu0
      %v2889 = vadd.f32 %v2742, %v2851
      %v2890 = vadd.f32 %v2743, %v2856
      %v2891 = vadd.f32 %v2744, %v2861
      %v2892 = vadd.f32 %v2745, %v2866
      %v2893 = vadd.f32 %v2746, %v2871
      %v2894 = vadd.f32 %v2747, %v2876
      %v2895 = vadd.f32 %v2748, %v2881
      %v2896 = vadd.f32 %v2749, %v2886
      %v2897 = vld [vmem:[%s2154 + $0x2] sm:$0xff]
      %v2898 = vld [vmem:[%s2154 + $0x12] sm:$0xff]
      %v2899 = vld [vmem:[%s2154 + $0x22] sm:$0xff]
      %v2900 = vld [vmem:[%s2154 + $0x32] sm:$0xff]
      %v2901 = vld [vmem:[%s2154 + $0x42] sm:$0xff]
      %v2902 = vld [vmem:[%s2154 + $0x52] sm:$0xff]
      %v2903 = vld [vmem:[%s2154 + $0x62] sm:$0xff]
      %v2904 = vld [vmem:[%s2154 + $0x72] sm:$0xff]
      %s2905 = scalar_lea.vmem %s6, 40
      %v2906 = vld [vmem:[%s2905] sm:$0xff]
      %v2908 = vsel %vm2132, %v2897, 0
      %v2911 = vsel %vm2132, %v2898, 0
      %v2914 = vsel %vm2132, %v2899, 0
      %v2917 = vsel %vm2132, %v2900, 0
      %v2920 = vsel %vm2132, %v2901, 0
      %v2923 = vsel %vm2132, %v2902, 0
      %v2926 = vsel %vm2132, %v2903, 0
      %v2929 = vsel %vm2132, %v2904, 0
      %2931 = vmatprep.subr.mxu0 0.0
      %2932 = vmatpush1.msra.mxu0 %v2906
      %2933 = vmatprep.subr.mxu0 0.0
      %2934 = vmatpush1.msra.mxu0 0.0
      %2935 = vmatprep.subr.mxu0 0.0
      %2936 = vmatpush1.msra.mxu0 0.0
      %2937 = vmatprep.subr.mxu0 0.0
      %2938 = vmatpush1.msra.mxu0 0.0
      %2939 = vmatprep.subr.mxu0 0.0
      %2940 = vmatpush1.msra.mxu0 0.0
      %2941 = vmatprep.subr.mxu0 0.0
      %2942 = vmatpush1.msra.mxu0 0.0
      %2943 = vmatprep.subr.mxu0 0.0
      %2944 = vmatpush1.msra.mxu0 0.0
      %2945 = vmatprep.subr.mxu0 0.0
      %2946 = vmatpush1.msra.mxu0 0.0
      %2947 = vmatprep.subr.mxu0 0.0
      %2948 = vmatpush1.msra.mxu0 0.0
      %2949 = vmatprep.subr.mxu0 0.0
      %2950 = vmatpush1.msra.mxu0 0.0
      %2951 = vmatprep.subr.mxu0 0.0
      %2952 = vmatpush1.msra.mxu0 0.0
      %2953 = vmatprep.subr.mxu0 0.0
      %2954 = vmatpush1.msra.mxu0 0.0
      %2955 = vmatprep.subr.mxu0 0.0
      %2956 = vmatpush1.msra.mxu0 0.0
      %2957 = vmatprep.subr.mxu0 0.0
      %2958 = vmatpush1.msra.mxu0 0.0
      %2959 = vmatprep.subr.mxu0 0.0
      %2960 = vmatpush1.msra.mxu0 0.0
      %2961 = vmatprep.subr.mxu0 0.0
      %2962 = vmatpush1.msra.mxu0 0.0
      %2963 = vmatprep.subr.mxu0 0.0
      %2964 = vmatpush1.msra.mxu0 0.0
      %2965 = vmatprep.subr.mxu0 0.0
      %2966 = vmatpush1.msra.mxu0 0.0
      %2967 = vmatprep.subr.mxu0 0.0
      %2968 = vmatpush1.msra.mxu0 0.0
      %2969 = vmatprep.subr.mxu0 0.0
      %2970 = vmatpush1.msra.mxu0 0.0
      %2971 = vmatprep.subr.mxu0 0.0
      %2972 = vmatpush1.msra.mxu0 0.0
      %2973 = vmatprep.subr.mxu0 0.0
      %2974 = vmatpush1.msra.mxu0 0.0
      %2975 = vmatprep.subr.mxu0 0.0
      %2976 = vmatpush1.msra.mxu0 0.0
      %2977 = vmatprep.subr.mxu0 0.0
      %2978 = vmatpush1.msra.mxu0 0.0
      %2979 = vmatprep.subr.mxu0 0.0
      %2980 = vmatpush1.msra.mxu0 0.0
      %2981 = vmatprep.subr.mxu0 0.0
      %2982 = vmatpush1.msra.mxu0 0.0
      %2983 = vmatprep.subr.mxu0 0.0
      %2984 = vmatpush1.msra.mxu0 0.0
      %2985 = vmatprep.subr.mxu0 0.0
      %2986 = vmatpush1.msra.mxu0 0.0
      %2987 = vmatprep.subr.mxu0 0.0
      %2988 = vmatpush1.msra.mxu0 0.0
      %2989 = vmatprep.subr.mxu0 0.0
      %2990 = vmatpush1.msra.mxu0 0.0
      %2991 = vmatprep.subr.mxu0 0.0
      %2992 = vmatpush1.msra.mxu0 0.0
      %2993 = vmatprep.subr.mxu0 0.0
      %2994 = vmatpush1.msra.mxu0 0.0
      %2995 = vmatprep.mubr.f32.mxu0 0.0
      %2996 = vmatmul.mubr.f32.gmra.mrb[0].mxu0 %v2908
      %v2997 = vpop.f32.mrb[0].mxu0
      %v2998 = vadd.f32 0.0, %v2997
      %v2999 = vpop.f32.mrb[0].mxu0
      %3000 = vmatprep.mubr.f32.mxu0 0.0
      %3001 = vmatmul.mubr.f32.gmra.mrb[0].mxu0 %v2911
      %v3002 = vpop.f32.mrb[0].mxu0
      %v3003 = vadd.f32 0.0, %v3002
      %v3004 = vpop.f32.mrb[0].mxu0
      %3005 = vmatprep.mubr.f32.mxu0 0.0
      %3006 = vmatmul.mubr.f32.gmra.mrb[0].mxu0 %v2914
      %v3007 = vpop.f32.mrb[0].mxu0
      %v3008 = vadd.f32 0.0, %v3007
      %v3009 = vpop.f32.mrb[0].mxu0
      %3010 = vmatprep.mubr.f32.mxu0 0.0
      %3011 = vmatmul.mubr.f32.gmra.mrb[0].mxu0 %v2917
      %v3012 = vpop.f32.mrb[0].mxu0
      %v3013 = vadd.f32 0.0, %v3012
      %v3014 = vpop.f32.mrb[0].mxu0
      %3015 = vmatprep.mubr.f32.mxu0 0.0
      %3016 = vmatmul.mubr.f32.gmra.mrb[0].mxu0 %v2920
      %v3017 = vpop.f32.mrb[0].mxu0
      %v3018 = vadd.f32 0.0, %v3017
      %v3019 = vpop.f32.mrb[0].mxu0
      %3020 = vmatprep.mubr.f32.mxu0 0.0
      %3021 = vmatmul.mubr.f32.gmra.mrb[0].mxu0 %v2923
      %v3022 = vpop.f32.mrb[0].mxu0
      %v3023 = vadd.f32 0.0, %v3022
      %v3024 = vpop.f32.mrb[0].mxu0
      %3025 = vmatprep.mubr.f32.mxu0 0.0
      %3026 = vmatmul.mubr.f32.gmra.mrb[0].mxu0 %v2926
      %v3027 = vpop.f32.mrb[0].mxu0
      %v3028 = vadd.f32 0.0, %v3027
      %v3029 = vpop.f32.mrb[0].mxu0
      %3030 = vmatprep.mubr.f32.mxu0 0.0
      %3031 = vmatmul.mubr.f32.gmra.mrb[0].mxu0 %v2929
      %v3032 = vpop.f32.mrb[0].mxu0
      %v3033 = vadd.f32 0.0, %v3032
      %v3034 = vpop.f32.mrb[0].mxu0
      %3035 = vdwg.mxu0
      %v3036 = vadd.f32 %v2889, %v2998
      %v3037 = vadd.f32 %v2890, %v3003
      %v3038 = vadd.f32 %v2891, %v3008
      %v3039 = vadd.f32 %v2892, %v3013
      %v3040 = vadd.f32 %v2893, %v3018
      %v3041 = vadd.f32 %v2894, %v3023
      %v3042 = vadd.f32 %v2895, %v3028
      %v3043 = vadd.f32 %v2896, %v3033
      %s3044 = scalar_lea.vmem [#allocation2], 32
      %v3045 = vld [vmem:[%s3044] sm:$0xff]
      %v3046 = vld [vmem:[%s3044 + $0x10] sm:$0xff]
      %v3047 = vld [vmem:[%s3044 + $0x20] sm:$0xff]
      %v3048 = vld [vmem:[%s3044 + $0x30] sm:$0xff]
      %v3049 = vld [vmem:[%s3044 + $0x40] sm:$0xff]
      %v3050 = vld [vmem:[%s3044 + $0x50] sm:$0xff]
      %v3051 = vld [vmem:[%s3044 + $0x60] sm:$0xff]
      %v3052 = vld [vmem:[%s3044 + $0x70] sm:$0xff]
      %s3053 = scalar_lea.vmem %s6, 48
      %v3054 = vld [vmem:[%s3053] sm:$0xff]
      %v3056 = vsel %vm2132, %v3045, 0
      %v3059 = vsel %vm2132, %v3046, 0
      %v3062 = vsel %vm2132, %v3047, 0
      %v3065 = vsel %vm2132, %v3048, 0
      %v3068 = vsel %vm2132, %v3049, 0
      %v3071 = vsel %vm2132, %v3050, 0
      %v3074 = vsel %vm2132, %v3051, 0
      %v3077 = vsel %vm2132, %v3052, 0
      %3079 = vmatprep.subr.mxu0 0.0
      %3080 = vmatpush1.msra.mxu0 %v3054
      %3081 = vmatprep.subr.mxu0 0.0
      %3082 = vmatpush1.msra.mxu0 0.0
      %3083 = vmatprep.subr.mxu0 0.0
      %3084 = vmatpush1.msra.mxu0 0.0
      %3085 = vmatprep.subr.mxu0 0.0
      %3086 = vmatpush1.msra.mxu0 0.0
      %3087 = vmatprep.subr.mxu0 0.0
      %3088 = vmatpush1.msra.mxu0 0.0
      %3089 = vmatprep.subr.mxu0 0.0
      %3090 = vmatpush1.msra.mxu0 0.0
      %3091 = vmatprep.subr.mxu0 0.0
      %3092 = vmatpush1.msra.mxu0 0.0
      %3093 = vmatprep.subr.mxu0 0.0
      %3094 = vmatpush1.msra.mxu0 0.0
      %3095 = vmatprep.subr.mxu0 0.0
      %3096 = vmatpush1.msra.mxu0 0.0
      %3097 = vmatprep.subr.mxu0 0.0
      %3098 = vmatpush1.msra.mxu0 0.0
      %3099 = vmatprep.subr.mxu0 0.0
      %3100 = vmatpush1.msra.mxu0 0.0
      %3101 = vmatprep.subr.mxu0 0.0
      %3102 = vmatpush1.msra.mxu0 0.0
      %3103 = vmatprep.subr.mxu0 0.0
      %3104 = vmatpush1.msra.mxu0 0.0
      %3105 = vmatprep.subr.mxu0 0.0
      %3106 = vmatpush1.msra.mxu0 0.0
      %3107 = vmatprep.subr.mxu0 0.0
      %3108 = vmatpush1.msra.mxu0 0.0
      %3109 = vmatprep.subr.mxu0 0.0
      %3110 = vmatpush1.msra.mxu0 0.0
      %3111 = vmatprep.subr.mxu0 0.0
      %3112 = vmatpush1.msra.mxu0 0.0
      %3113 = vmatprep.subr.mxu0 0.0
      %3114 = vmatpush1.msra.mxu0 0.0
      %3115 = vmatprep.subr.mxu0 0.0
      %3116 = vmatpush1.msra.mxu0 0.0
      %3117 = vmatprep.subr.mxu0 0.0
      %3118 = vmatpush1.msra.mxu0 0.0
      %3119 = vmatprep.subr.mxu0 0.0
      %3120 = vmatpush1.msra.mxu0 0.0
      %3121 = vmatprep.subr.mxu0 0.0
      %3122 = vmatpush1.msra.mxu0 0.0
      %3123 = vmatprep.subr.mxu0 0.0
      %3124 = vmatpush1.msra.mxu0 0.0
      %3125 = vmatprep.subr.mxu0 0.0
      %3126 = vmatpush1.msra.mxu0 0.0
      %3127 = vmatprep.subr.mxu0 0.0
      %3128 = vmatpush1.msra.mxu0 0.0
      %3129 = vmatprep.subr.mxu0 0.0
      %3130 = vmatpush1.msra.mxu0 0.0
      %3131 = vmatprep.subr.mxu0 0.0
      %3132 = vmatpush1.msra.mxu0 0.0
      %3133 = vmatprep.subr.mxu0 0.0
      %3134 = vmatpush1.msra.mxu0 0.0
      %3135 = vmatprep.subr.mxu0 0.0
      %3136 = vmatpush1.msra.mxu0 0.0
      %3137 = vmatprep.subr.mxu0 0.0
      %3138 = vmatpush1.msra.mxu0 0.0
      %3139 = vmatprep.subr.mxu0 0.0
      %3140 = vmatpush1.msra.mxu0 0.0
      %3141 = vmatprep.subr.mxu0 0.0
      %3142 = vmatpush1.msra.mxu0 0.0
      %3143 = vmatprep.mubr.f32.mxu0 0.0
      %3144 = vmatmul.mubr.f32.gmra.mrb[0].mxu0 %v3056
      %v3145 = vpop.f32.mrb[0].mxu0
      %v3146 = vadd.f32 0.0, %v3145
      %v3147 = vpop.f32.mrb[0].mxu0
      %3148 = vmatprep.mubr.f32.mxu0 0.0
      %3149 = vmatmul.mubr.f32.gmra.mrb[0].mxu0 %v3059
      %v3150 = vpop.f32.mrb[0].mxu0
      %v3151 = vadd.f32 0.0, %v3150
      %v3152 = vpop.f32.mrb[0].mxu0
      %3153 = vmatprep.mubr.f32.mxu0 0.0
      %3154 = vmatmul.mubr.f32.gmra.mrb[0].mxu0 %v3062
      %v3155 = vpop.f32.mrb[0].mxu0
      %v3156 = vadd.f32 0.0, %v3155
      %v3157 = vpop.f32.mrb[0].mxu0
      %3158 = vmatprep.mubr.f32.mxu0 0.0
      %3159 = vmatmul.mubr.f32.gmra.mrb[0].mxu0 %v3065
      %v3160 = vpop.f32.mrb[0].mxu0
      %v3161 = vadd.f32 0.0, %v3160
      %v3162 = vpop.f32.mrb[0].mxu0
      %3163 = vmatprep.mubr.f32.mxu0 0.0
      %3164 = vmatmul.mubr.f32.gmra.mrb[0].mxu0 %v3068
      %v3165 = vpop.f32.mrb[0].mxu0
      %v3166 = vadd.f32 0.0, %v3165
      %v3167 = vpop.f32.mrb[0].mxu0
      %3168 = vmatprep.mubr.f32.mxu0 0.0
      %3169 = vmatmul.mubr.f32.gmra.mrb[0].mxu0 %v3071
      %v3170 = vpop.f32.mrb[0].mxu0
      %v3171 = vadd.f32 0.0, %v3170
      %v3172 = vpop.f32.mrb[0].mxu0
      %3173 = vmatprep.mubr.f32.mxu0 0.0
      %3174 = vmatmul.mubr.f32.gmra.mrb[0].mxu0 %v3074
      %v3175 = vpop.f32.mrb[0].mxu0
      %v3176 = vadd.f32 0.0, %v3175
      %v3177 = vpop.f32.mrb[0].mxu0
      %3178 = vmatprep.mubr.f32.mxu0 0.0
      %3179 = vmatmul.mubr.f32.gmra.mrb[0].mxu0 %v3077
      %v3180 = vpop.f32.mrb[0].mxu0
      %v3181 = vadd.f32 0.0, %v3180
      %v3182 = vpop.f32.mrb[0].mxu0
      %3183 = vdwg.mxu0
      %v3184 = vadd.f32 %v3036, %v3146
      %v3185 = vadd.f32 %v3037, %v3151
      %v3186 = vadd.f32 %v3038, %v3156
      %v3187 = vadd.f32 %v3039, %v3161
      %v3188 = vadd.f32 %v3040, %v3166
      %v3189 = vadd.f32 %v3041, %v3171
      %v3190 = vadd.f32 %v3042, %v3176
      %v3191 = vadd.f32 %v3043, %v3181
      %v3192 = vld [vmem:[%s3044 + $0x1] sm:$0xff]
      %v3193 = vld [vmem:[%s3044 + $0x11] sm:$0xff]
      %v3194 = vld [vmem:[%s3044 + $0x21] sm:$0xff]
      %v3195 = vld [vmem:[%s3044 + $0x31] sm:$0xff]
      %v3196 = vld [vmem:[%s3044 + $0x41] sm:$0xff]
      %v3197 = vld [vmem:[%s3044 + $0x51] sm:$0xff]
      %v3198 = vld [vmem:[%s3044 + $0x61] sm:$0xff]
      %v3199 = vld [vmem:[%s3044 + $0x71] sm:$0xff]
      %s3200 = scalar_lea.vmem %s6, 56
      %v3201 = vld [vmem:[%s3200] sm:$0xff]
      %v3203 = vsel %vm2132, %v3192, 0
      %v3206 = vsel %vm2132, %v3193, 0
      %v3209 = vsel %vm2132, %v3194, 0
      %v3212 = vsel %vm2132, %v3195, 0
      %v3215 = vsel %vm2132, %v3196, 0
      %v3218 = vsel %vm2132, %v3197, 0
      %v3221 = vsel %vm2132, %v3198, 0
      %v3224 = vsel %vm2132, %v3199, 0
      %3226 = vmatprep.subr.mxu0 0.0
      %3227 = vmatpush1.msra.mxu0 %v3201
      %3228 = vmatprep.subr.mxu0 0.0
      %3229 = vmatpush1.msra.mxu0 0.0
      %3230 = vmatprep.subr.mxu0 0.0
      %3231 = vmatpush1.msra.mxu0 0.0
      %3232 = vmatprep.subr.mxu0 0.0
      %3233 = vmatpush1.msra.mxu0 0.0
      %3234 = vmatprep.subr.mxu0 0.0
      %3235 = vmatpush1.msra.mxu0 0.0
      %3236 = vmatprep.subr.mxu0 0.0
      %3237 = vmatpush1.msra.mxu0 0.0
      %3238 = vmatprep.subr.mxu0 0.0
      %3239 = vmatpush1.msra.mxu0 0.0
      %3240 = vmatprep.subr.mxu0 0.0
      %3241 = vmatpush1.msra.mxu0 0.0
      %3242 = vmatprep.subr.mxu0 0.0
      %3243 = vmatpush1.msra.mxu0 0.0
      %3244 = vmatprep.subr.mxu0 0.0
      %3245 = vmatpush1.msra.mxu0 0.0
      %3246 = vmatprep.subr.mxu0 0.0
      %3247 = vmatpush1.msra.mxu0 0.0
      %3248 = vmatprep.subr.mxu0 0.0
      %3249 = vmatpush1.msra.mxu0 0.0
      %3250 = vmatprep.subr.mxu0 0.0
      %3251 = vmatpush1.msra.mxu0 0.0
      %3252 = vmatprep.subr.mxu0 0.0
      %3253 = vmatpush1.msra.mxu0 0.0
      %3254 = vmatprep.subr.mxu0 0.0
      %3255 = vmatpush1.msra.mxu0 0.0
      %3256 = vmatprep.subr.mxu0 0.0
      %3257 = vmatpush1.msra.mxu0 0.0
      %3258 = vmatprep.subr.mxu0 0.0
      %3259 = vmatpush1.msra.mxu0 0.0
      %3260 = vmatprep.subr.mxu0 0.0
      %3261 = vmatpush1.msra.mxu0 0.0
      %3262 = vmatprep.subr.mxu0 0.0
      %3263 = vmatpush1.msra.mxu0 0.0
      %3264 = vmatprep.subr.mxu0 0.0
      %3265 = vmatpush1.msra.mxu0 0.0
      %3266 = vmatprep.subr.mxu0 0.0
      %3267 = vmatpush1.msra.mxu0 0.0
      %3268 = vmatprep.subr.mxu0 0.0
      %3269 = vmatpush1.msra.mxu0 0.0
      %3270 = vmatprep.subr.mxu0 0.0
      %3271 = vmatpush1.msra.mxu0 0.0
      %3272 = vmatprep.subr.mxu0 0.0
      %3273 = vmatpush1.msra.mxu0 0.0
      %3274 = vmatprep.subr.mxu0 0.0
      %3275 = vmatpush1.msra.mxu0 0.0
      %3276 = vmatprep.subr.mxu0 0.0
      %3277 = vmatpush1.msra.mxu0 0.0
      %3278 = vmatprep.subr.mxu0 0.0
      %3279 = vmatpush1.msra.mxu0 0.0
      %3280 = vmatprep.subr.mxu0 0.0
      %3281 = vmatpush1.msra.mxu0 0.0
      %3282 = vmatprep.subr.mxu0 0.0
      %3283 = vmatpush1.msra.mxu0 0.0
      %3284 = vmatprep.subr.mxu0 0.0
      %3285 = vmatpush1.msra.mxu0 0.0
      %3286 = vmatprep.subr.mxu0 0.0
      %3287 = vmatpush1.msra.mxu0 0.0
      %3288 = vmatprep.subr.mxu0 0.0
      %3289 = vmatpush1.msra.mxu0 0.0
      %3290 = vmatprep.mubr.f32.mxu0 0.0
      %3291 = vmatmul.mubr.f32.gmra.mrb[0].mxu0 %v3203
      %v3292 = vpop.f32.mrb[0].mxu0
      %v3293 = vadd.f32 0.0, %v3292
      %v3294 = vpop.f32.mrb[0].mxu0
      %3295 = vmatprep.mubr.f32.mxu0 0.0
      %3296 = vmatmul.mubr.f32.gmra.mrb[0].mxu0 %v3206
      %v3297 = vpop.f32.mrb[0].mxu0
      %v3298 = vadd.f32 0.0, %v3297
      %v3299 = vpop.f32.mrb[0].mxu0
      %3300 = vmatprep.mubr.f32.mxu0 0.0
      %3301 = vmatmul.mubr.f32.gmra.mrb[0].mxu0 %v3209
      %v3302 = vpop.f32.mrb[0].mxu0
      %v3303 = vadd.f32 0.0, %v3302
      %v3304 = vpop.f32.mrb[0].mxu0
      %3305 = vmatprep.mubr.f32.mxu0 0.0
      %3306 = vmatmul.mubr.f32.gmra.mrb[0].mxu0 %v3212
      %v3307 = vpop.f32.mrb[0].mxu0
      %v3308 = vadd.f32 0.0, %v3307
      %v3309 = vpop.f32.mrb[0].mxu0
      %3310 = vmatprep.mubr.f32.mxu0 0.0
      %3311 = vmatmul.mubr.f32.gmra.mrb[0].mxu0 %v3215
      %v3312 = vpop.f32.mrb[0].mxu0
      %v3313 = vadd.f32 0.0, %v3312
      %v3314 = vpop.f32.mrb[0].mxu0
      %3315 = vmatprep.mubr.f32.mxu0 0.0
      %3316 = vmatmul.mubr.f32.gmra.mrb[0].mxu0 %v3218
      %v3317 = vpop.f32.mrb[0].mxu0
      %v3318 = vadd.f32 0.0, %v3317
      %v3319 = vpop.f32.mrb[0].mxu0
      %3320 = vmatprep.mubr.f32.mxu0 0.0
      %3321 = vmatmul.mubr.f32.gmra.mrb[0].mxu0 %v3221
      %v3322 = vpop.f32.mrb[0].mxu0
      %v3323 = vadd.f32 0.0, %v3322
      %v3324 = vpop.f32.mrb[0].mxu0
      %3325 = vmatprep.mubr.f32.mxu0 0.0
      %3326 = vmatmul.mubr.f32.gmra.mrb[0].mxu0 %v3224
      %v3327 = vpop.f32.mrb[0].mxu0
      %v3328 = vadd.f32 0.0, %v3327
      %v3329 = vpop.f32.mrb[0].mxu0
      %3330 = vdwg.mxu0
      %v3331 = vadd.f32 %v3184, %v3293
      %v3332 = vadd.f32 %v3185, %v3298
      %v3333 = vadd.f32 %v3186, %v3303
      %v3334 = vadd.f32 %v3187, %v3308
      %v3335 = vadd.f32 %v3188, %v3313
      %v3336 = vadd.f32 %v3189, %v3318
      %v3337 = vadd.f32 %v3190, %v3323
      %v3338 = vadd.f32 %v3191, %v3328
      %v3339 = vld [vmem:[%s3044 + $0x2] sm:$0xff]
      %v3340 = vld [vmem:[%s3044 + $0x12] sm:$0xff]
      %v3341 = vld [vmem:[%s3044 + $0x22] sm:$0xff]
      %v3342 = vld [vmem:[%s3044 + $0x32] sm:$0xff]
      %v3343 = vld [vmem:[%s3044 + $0x42] sm:$0xff]
      %v3344 = vld [vmem:[%s3044 + $0x52] sm:$0xff]
      %v3345 = vld [vmem:[%s3044 + $0x62] sm:$0xff]
      %v3346 = vld [vmem:[%s3044 + $0x72] sm:$0xff]
      %s3347 = scalar_lea.vmem %s6, 64
      %v3348 = vld [vmem:[%s3347] sm:$0xff]
      %v3350 = vsel %vm2132, %v3339, 0
      %v3353 = vsel %vm2132, %v3340, 0
      %v3356 = vsel %vm2132, %v3341, 0
      %v3359 = vsel %vm2132, %v3342, 0
      %v3362 = vsel %vm2132, %v3343, 0
      %v3365 = vsel %vm2132, %v3344, 0
      %v3368 = vsel %vm2132, %v3345, 0
      %v3371 = vsel %vm2132, %v3346, 0
      %3373 = vmatprep.subr.mxu0 0.0
      %3374 = vmatpush1.msra.mxu0 %v3348
      %3375 = vmatprep.subr.mxu0 0.0
      %3376 = vmatpush1.msra.mxu0 0.0
      %3377 = vmatprep.subr.mxu0 0.0
      %3378 = vmatpush1.msra.mxu0 0.0
      %3379 = vmatprep.subr.mxu0 0.0
      %3380 = vmatpush1.msra.mxu0 0.0
      %3381 = vmatprep.subr.mxu0 0.0
      %3382 = vmatpush1.msra.mxu0 0.0
      %3383 = vmatprep.subr.mxu0 0.0
      %3384 = vmatpush1.msra.mxu0 0.0
      %3385 = vmatprep.subr.mxu0 0.0
      %3386 = vmatpush1.msra.mxu0 0.0
      %3387 = vmatprep.subr.mxu0 0.0
      %3388 = vmatpush1.msra.mxu0 0.0
      %3389 = vmatprep.subr.mxu0 0.0
      %3390 = vmatpush1.msra.mxu0 0.0
      %3391 = vmatprep.subr.mxu0 0.0
      %3392 = vmatpush1.msra.mxu0 0.0
      %3393 = vmatprep.subr.mxu0 0.0
      %3394 = vmatpush1.msra.mxu0 0.0
      %3395 = vmatprep.subr.mxu0 0.0
      %3396 = vmatpush1.msra.mxu0 0.0
      %3397 = vmatprep.subr.mxu0 0.0
      %3398 = vmatpush1.msra.mxu0 0.0
      %3399 = vmatprep.subr.mxu0 0.0
      %3400 = vmatpush1.msra.mxu0 0.0
      %3401 = vmatprep.subr.mxu0 0.0
      %3402 = vmatpush1.msra.mxu0 0.0
      %3403 = vmatprep.subr.mxu0 0.0
      %3404 = vmatpush1.msra.mxu0 0.0
      %3405 = vmatprep.subr.mxu0 0.0
      %3406 = vmatpush1.msra.mxu0 0.0
      %3407 = vmatprep.subr.mxu0 0.0
      %3408 = vmatpush1.msra.mxu0 0.0
      %3409 = vmatprep.subr.mxu0 0.0
      %3410 = vmatpush1.msra.mxu0 0.0
      %3411 = vmatprep.subr.mxu0 0.0
      %3412 = vmatpush1.msra.mxu0 0.0
      %3413 = vmatprep.subr.mxu0 0.0
      %3414 = vmatpush1.msra.mxu0 0.0
      %3415 = vmatprep.subr.mxu0 0.0
      %3416 = vmatpush1.msra.mxu0 0.0
      %3417 = vmatprep.subr.mxu0 0.0
      %3418 = vmatpush1.msra.mxu0 0.0
      %3419 = vmatprep.subr.mxu0 0.0
      %3420 = vmatpush1.msra.mxu0 0.0
      %3421 = vmatprep.subr.mxu0 0.0
      %3422 = vmatpush1.msra.mxu0 0.0
      %3423 = vmatprep.subr.mxu0 0.0
      %3424 = vmatpush1.msra.mxu0 0.0
      %3425 = vmatprep.subr.mxu0 0.0
      %3426 = vmatpush1.msra.mxu0 0.0
      %3427 = vmatprep.subr.mxu0 0.0
      %3428 = vmatpush1.msra.mxu0 0.0
      %3429 = vmatprep.subr.mxu0 0.0
      %3430 = vmatpush1.msra.mxu0 0.0
      %3431 = vmatprep.subr.mxu0 0.0
      %3432 = vmatpush1.msra.mxu0 0.0
      %3433 = vmatprep.subr.mxu0 0.0
      %3434 = vmatpush1.msra.mxu0 0.0
      %3435 = vmatprep.subr.mxu0 0.0
      %3436 = vmatpush1.msra.mxu0 0.0
      %3437 = vmatprep.mubr.f32.mxu0 0.0
      %3438 = vmatmul.mubr.f32.gmra.mrb[0].mxu0 %v3350
      %v3439 = vpop.f32.mrb[0].mxu0
      %v3440 = vadd.f32 0.0, %v3439
      %v3441 = vpop.f32.mrb[0].mxu0
      %3442 = vmatprep.mubr.f32.mxu0 0.0
      %3443 = vmatmul.mubr.f32.gmra.mrb[0].mxu0 %v3353
      %v3444 = vpop.f32.mrb[0].mxu0
      %v3445 = vadd.f32 0.0, %v3444
      %v3446 = vpop.f32.mrb[0].mxu0
      %3447 = vmatprep.mubr.f32.mxu0 0.0
      %3448 = vmatmul.mubr.f32.gmra.mrb[0].mxu0 %v3356
      %v3449 = vpop.f32.mrb[0].mxu0
      %v3450 = vadd.f32 0.0, %v3449
      %v3451 = vpop.f32.mrb[0].mxu0
      %3452 = vmatprep.mubr.f32.mxu0 0.0
      %3453 = vmatmul.mubr.f32.gmra.mrb[0].mxu0 %v3359
      %v3454 = vpop.f32.mrb[0].mxu0
      %v3455 = vadd.f32 0.0, %v3454
      %v3456 = vpop.f32.mrb[0].mxu0
      %3457 = vmatprep.mubr.f32.mxu0 0.0
      %3458 = vmatmul.mubr.f32.gmra.mrb[0].mxu0 %v3362
      %v3459 = vpop.f32.mrb[0].mxu0
      %v3460 = vadd.f32 0.0, %v3459
      %v3461 = vpop.f32.mrb[0].mxu0
      %3462 = vmatprep.mubr.f32.mxu0 0.0
      %3463 = vmatmul.mubr.f32.gmra.mrb[0].mxu0 %v3365
      %v3464 = vpop.f32.mrb[0].mxu0
      %v3465 = vadd.f32 0.0, %v3464
      %v3466 = vpop.f32.mrb[0].mxu0
      %3467 = vmatprep.mubr.f32.mxu0 0.0
      %3468 = vmatmul.mubr.f32.gmra.mrb[0].mxu0 %v3368
      %v3469 = vpop.f32.mrb[0].mxu0
      %v3470 = vadd.f32 0.0, %v3469
      %v3471 = vpop.f32.mrb[0].mxu0
      %3472 = vmatprep.mubr.f32.mxu0 0.0
      %3473 = vmatmul.mubr.f32.gmra.mrb[0].mxu0 %v3371
      %v3474 = vpop.f32.mrb[0].mxu0
      %v3475 = vadd.f32 0.0, %v3474
      %v3476 = vpop.f32.mrb[0].mxu0
      %3477 = vdwg.mxu0
      %v3478 = vadd.f32 %v3331, %v3440
      %v3479 = vadd.f32 %v3332, %v3445
      %v3480 = vadd.f32 %v3333, %v3450
      %v3481 = vadd.f32 %v3334, %v3455
      %v3482 = vadd.f32 %v3335, %v3460
      %v3483 = vadd.f32 %v3336, %v3465
      %v3484 = vadd.f32 %v3337, %v3470
      %v3485 = vadd.f32 %v3338, %v3475
      %vm3486 = vcmp.ge.f32.partialorder %v3478, 0.0
      %vm3487 = vcmp.ge.f32.partialorder %v3479, 0.0
      %vm3488 = vcmp.ge.f32.partialorder %v3480, 0.0
      %vm3489 = vcmp.ge.f32.partialorder %v3481, 0.0
      %vm3490 = vcmp.ge.f32.partialorder %v3482, 0.0
      %vm3491 = vcmp.ge.f32.partialorder %v3483, 0.0
      %vm3492 = vcmp.ge.f32.partialorder %v3484, 0.0
      %vm3493 = vcmp.ge.f32.partialorder %v3485, 0.0
      %v3494 = vmul.f32 %v3478, 0.01
      %v3495 = vmul.f32 %v3479, 0.01
      %v3496 = vmul.f32 %v3480, 0.01
      %v3497 = vmul.f32 %v3481, 0.01
      %v3498 = vmul.f32 %v3482, 0.01
      %v3499 = vmul.f32 %v3483, 0.01
      %v3500 = vmul.f32 %v3484, 0.01
      %v3501 = vmul.f32 %v3485, 0.01
      %v3502 = vsel %vm3486, %v3478, %v3494
      %v3503 = vsel %vm3487, %v3479, %v3495
      %v3504 = vsel %vm3488, %v3480, %v3496
      %v3505 = vsel %vm3489, %v3481, %v3497
      %v3506 = vsel %vm3490, %v3482, %v3498
      %v3507 = vsel %vm3491, %v3483, %v3499
      %v3508 = vsel %vm3492, %v3484, %v3500
      %v3509 = vsel %vm3493, %v3485, %v3501
      %3510 = vst [vmem:[%s392] sm:$0xff] %v3502
      %3511 = vst [vmem:[%s392 + $0x8] sm:$0xff] %v3503
      %3512 = vst [vmem:[%s392 + $0x10] sm:$0xff] %v3504
      %3513 = vst [vmem:[%s392 + $0x18] sm:$0xff] %v3505
      %3514 = vst [vmem:[%s392 + $0x20] sm:$0xff] %v3506
      %3515 = vst [vmem:[%s392 + $0x28] sm:$0xff] %v3507
      %3516 = vst [vmem:[%s392 + $0x30] sm:$0xff] %v3508
      %3517 = vst [vmem:[%s392 + $0x38] sm:$0xff] %v3509
      %p3518 = scmp.lt.s32.totalorder %s20, 1
      %s3519 = scalar_select %p3518, %s20, 1
      %s3520 = smul.addr %s3519, 8
      %s3521 = smul.addr %s3520, 8
      %s3522 = scalar_lea.vmem %s9, %s3521
      // Predicated region
      $region57: #{basic_block_forward.1} parent=55 // pred_check
        %p3523 = pneg %p247
      $region58: #{basic_block_forward.1} parent=55 // pred_check_branch
        %3525 = sbr.rel (%p3523) target = $region60
      $region59: #{basic_block_forward.1} parent=55 // pred_region
        _
      $region60: #{basic_block_forward.1} parent=55 // pred_fallthru
        _
    $region56: #{basic_block_forward.1} parent=5 // pred_fallthru
      _
    %p3526 = scmp.le.s32.totalorder 2, %s15
    // Predicated region
    $region61: #{basic_block_forward.1} parent=5 // pred_check
      %p3527 = pneg %p3526
    $region62: #{basic_block_forward.1} parent=5 // pred_check_branch
      %3529 = sbr.rel (%p3527) target = $region64
    $region63: #{basic_block_forward.1} parent=5 // pred_region
      %s3530 = ssub.s32 %s15, 2
      // Predicated region
      $region65: #{basic_block_forward.1} parent=63 // pred_check
        %p3531 = pneg %p253
      $region66: #{basic_block_forward.1} parent=63 // pred_check_branch
        %3533 = sbr.rel (%p3531) target = $region68
      $region67: #{basic_block_forward.1} parent=63 // pred_region
        %p3534 = scmp.lt.s32.totalorder %s21, 1
        %s3535 = scalar_select %p3534, %s21, 1
        %s3536 = smul.addr %s3535, 8
        %s3537 = smul.addr %s3536, 8
        %s3538 = scalar_lea.vmem %s9, %s3537
      $region68: #{basic_block_forward.1} parent=63 // pred_fallthru
        _
    $region64: #{basic_block_forward.1} parent=5 // pred_fallthru
      _
  $region6: #{basic_block_forward.1} parent=0 // loop_footer
    %s19 = sadd.s32 1, %s15
  $region7: #{basic_block_forward.1} parent=0 // loop_footer_branch
    %14 = sbr.rel target = $region3
  $region8: #{basic_block_forward.1} parent=0 // loop_exit
    _

</llo_original>
